<compile_context>
chip_gen: v7x
topology: tpu7x:2x2x1
jax: 0.10.0
libtpu: 0.0.40
codegen_flags: <defaults>
</compile_context>

<pallas_src>
import functools

import numpy as np
import jax
import jax.numpy as jnp
from jax import lax
from jax.experimental import pallas as pl
from jax.experimental.pallas import tpu as pltpu

BN_EPS = 1e-5


def _fold_bn(gamma, beta, mean, var):
    scale = gamma / jnp.sqrt(var + BN_EPS)
    bias = beta - mean * scale
    return scale.astype(jnp.float32), bias.astype(jnp.float32)


def _rup(v, m):
    return ((v + m - 1) // m) * m


# ----------------------------- kernel helpers ------------------------------

def _depthwise3x3(x, wd, d, out_h, out_w):
    """Depthwise 3x3 (dilation d, stride 1) over an already-padded buffer.

    x: (Hin, Win, C) f32, wd: (3, 3, C) f32 (BN1 scale pre-folded).
    Column-partial sums over the full input width -> only two sublane-shifted
    slices per call; accumulator seeded from the first tap.
    """
    cols = []
    for tj in range(3):
        t = x[0:out_h, :, :] * wd[0, tj]
        t = t + x[d:d + out_h, :, :] * wd[1, tj]
        t = t + x[2 * d:2 * d + out_h, :, :] * wd[2, tj]
        cols.append(t)
    out = cols[0][:, 0:out_w, :]
    out = out + cols[1][:, d:d + out_w, :]
    out = out + cols[2][:, 2 * d:2 * d + out_w, :]
    return out


def _pointwise(y, wp, b):
    """1x1 conv as an MXU matmul (bf16 operands, f32 accumulation) + bias.

    The folded BN scale already lives inside wp; only the bias add remains.
    """
    hy, wy, cin = y.shape
    cout = wp.shape[1]
    z = jnp.dot(y.reshape(hy * wy, cin).astype(jnp.bfloat16), wp,
                preferred_element_type=jnp.float32)
    return z.reshape(hy, wy, cout) + b


def _mask_relu(z, grow0, left, H, W):
    """Fused `zero-outside-valid-image` mask + ReLU (single select pass).

    z covers global rows [grow0, grow0 + Hz) and global cols [-left, ...).
    Zeroing here reproduces the next conv's zero padding exactly (ReLU(0)=0).
    """
    Hz, Wz, _ = z.shape
    rows = lax.broadcasted_iota(jnp.int32, (Hz, Wz, 1), 0) + grow0
    cols = lax.broadcasted_iota(jnp.int32, (Hz, Wz, 1), 1)
    ok = (rows >= 0) & (rows < H) & (cols >= left) & (cols < left + W)
    return jnp.where(ok & (z > 0.0), z, 0.0)


# ------------------------------ fused kernel -------------------------------

def _block_kernel(H, W, Hb, dils, widths, lefts,
                  xp_ref,
                  ws_ref, bs_ref,
                  dw1_ref, b11_ref, pw1_ref, b21_ref,
                  dw2_ref, b12_ref, pw2_ref, b22_ref,
                  dw3_ref, b13_ref, pw3_ref, b23_ref,
                  out_ref,
                  x_vmem, sem):
    d1, d2, d3 = dils
    W1, W2, W3 = widths
    l1, l2 = lefts
    D = d1 + d2 + d3

    n = pl.program_id(0)
    i = pl.program_id(1)
    num_i = pl.num_programs(1)
    row0 = i * Hb
    slot = i % 2

    def slab_copy(row_block, s):
        start = row_block * Hb
        if Hb % 8 == 0:
            start = pl.multiple_of(start, 8)
        return pltpu.make_async_copy(
            xp_ref.at[n, pl.ds(start, Hb + 2 * D)], x_vmem.at[s], sem.at[s])

    # Double-buffered slab pipeline: prime slot 0 at the first row block of
    # each image, prefetch row block i+1 into the other slot, wait on ours.
    @pl.when(i == 0)
    def _():
        slab_copy(i, slot).start()

    @pl.when(i + 1 < num_i)
    def _():
        slab_copy(i + 1, 1 - slot).start()

    slab_copy(i, slot).wait()

    # ---- sepconv1: ReLU -> DW3x3(d1)+b1 (scale folded) -> PW1x1+b2 ----
    # TODO(synk): a bf16 slab / bf16 depthwise path would halve DMA bytes and
    # VPU work on v6e/v7x; kept f32 to preserve the reference numerics.
    xr = jnp.maximum(x_vmem[slot], 0.0)               # (Hb+2D, Wx, Cin_p)
    H1 = Hb + 2 * (d2 + d3)
    y = _depthwise3x3(xr, dw1_ref[...], d1, H1, W1) + b11_ref[...]
    z1 = _pointwise(y, pw1_ref[...], b21_ref[...])
    z1 = _mask_relu(z1, row0 - (d2 + d3), l1, H, W)

    # ---- sepconv2 ----
    H2 = Hb + 2 * d3
    y = _depthwise3x3(z1, dw2_ref[...], d2, H2, W2) + b12_ref[...]
    z2 = _pointwise(y, pw2_ref[...], b22_ref[...])
    # NOTE: the valid region of z2 is the PyTorch Block's hook_layer.
    # TODO(synk): hook_layer (sepconv2 output) is not returned.
    z2 = _mask_relu(z2, row0 - d3, l2, H, W)

    # ---- sepconv3 ----
    y = _depthwise3x3(z2, dw3_ref[...], d3, Hb, W3) + b13_ref[...]
    z3 = _pointwise(y, pw3_ref[...], b23_ref[...])

    # ---- skip branch last (shortest live range; re-read the resident slab) --
    xc = x_vmem[slot, D:D + Hb, D:D + W3, :]
    skip = _pointwise(xc, ws_ref[...], bs_ref[...])

    out_ref[...] = (z3 + skip)[:, :W, :][None]


# ------------------------------ Block wrapper ------------------------------

def _vmem_capacity_bytes():
    try:
        cap = int(getattr(pltpu.get_tpu_info(), "vmem_capacity_bytes", 0))
        if cap > 0:
            return cap
    except Exception:
        pass
    return 64 << 20          # conservative fallback (v7x-sized VMEM)


def _auto_block_h(H, Wx, W, D, cin_p, c_max, cout_p, param_bytes, budget_bytes):
    divisors = [h for h in range(1, H + 1) if H % h == 0]

    def est(hb):
        slab = (hb + 2 * D) * Wx * cin_p * 4         # one slab slot (f32)
        outb = hb * W * cout_p * 4                   # one output block (f32)
        live = 6 * (hb + 2 * D) * Wx * c_max * 4     # live f32 intermediates
        return 2 * slab + 2 * outb + 2 * param_bytes + live

    fitting = [h for h in divisors if est(h) <= budget_bytes]
    return max(fitting) if fitting else divisors[0]


def _const_index_map(ndim):
    def im(n, i):
        return (0,) * ndim
    return im


def block_forward(x_nchw, params, block_h=None):
    """Fused Pallas forward of the DeepLab v3+ Block.

    Implements the default configuration (strides=1, grow_first=True,
    activate_first=True, inference-mode BatchNorm).
    """
    # TODO(synk): strides > 1 (strided skip conv / strided sepconv3) not implemented.
    d1, d2, d3 = params["atrous"]
    D = d1 + d2 + d3

    x = jnp.transpose(x_nchw, (0, 2, 3, 1)).astype(jnp.float32)   # NCHW -> NHWC
    N, H, W, Cin = x.shape
    Cmid = params["pw1"].shape[1]
    Cout = params["pw3"].shape[1]
    cin_p, cmid_p, cout_p = _rup(Cin, 128), _rup(Cmid, 128), _rup(Cout, 128)

    # Per-stage buffer widths (and slab width) rounded to sublane multiples.
    W3 = _rup(W, 8)
    W2 = _rup(W3 + 2 * d3, 8)
    W1 = _rup(W2 + 2 * d2, 8)
    Wx = _rup(W1 + 2 * d1, 8)
    l1, l2 = d2 + d3, d3            # left (column) offsets of stage-1/2 buffers

    # ---- fold BN scales into the conv weights (f32, before the bf16 cast) ----
    def vec(v, cp):      # BN bias -> (1, 1, cp) f32, zero padded
        return jnp.pad(v.astype(jnp.float32), (0, cp - v.shape[0])).reshape(1, 1, cp)

    def dw(w, s, cp):    # depthwise weight * BN1 scale -> (3, 3, cp) f32
        wf = w.astype(jnp.float32) * s.astype(jnp.float32)[None, None, :]
        return jnp.pad(wf, ((0, 0), (0, 0), (0, cp - wf.shape[2])))

    def pw(w, s, ip, op):  # pointwise/skip weight * BN2 scale -> (ip, op) bf16
        wf = w.astype(jnp.float32) * s.astype(jnp.float32)[None, :]
        return jnp.pad(wf, ((0, ip - wf.shape[0]),
                            (0, op - wf.shape[1]))).astype(jnp.bfloat16)

    param_args = [
        pw(params["skip_w"], params["skip_scale"], cin_p, cout_p),
        vec(params["skip_bias"], cout_p),
        dw(params["dw1"], params["s1_1"], cin_p), vec(params["b1_1"], cin_p),
        pw(params["pw1"], params["s2_1"], cin_p, cmid_p), vec(params["b2_1"], cmid_p),
        dw(params["dw2"], params["s1_2"], cmid_p), vec(params["b1_2"], cmid_p),
        pw(params["pw2"], params["s2_2"], cmid_p, cout_p), vec(params["b2_2"], cout_p),
        dw(params["dw3"], params["s1_3"], cout_p), vec(params["b1_3"], cout_p),
        pw(params["pw3"], params["s2_3"], cout_p, cout_p), vec(params["b2_3"], cout_p),
    ]
    param_bytes = sum(int(np.prod(a.shape)) * a.dtype.itemsize for a in param_args)

    # VMEM-capacity-aware planning (v7x: 64 MiB; v5e/v6e: 128 MiB).
    vmem_cap = _vmem_capacity_bytes()
    vmem_limit = max(32 << 20, min(vmem_cap - (6 << 20), 120 << 20))
    if block_h is None:
        block_h = _auto_block_h(H, Wx, W, D, cin_p,
                                max(cin_p, cmid_p, cout_p), cout_p,
                                param_bytes, int(vmem_limit * 0.8))
    Hb = block_h
    if H % Hb != 0:
        raise ValueError("block_h must divide H")

    # Pad the input ONCE: channel pad to a lane multiple + spatial halo zeros
    # (top/bottom D rows, left D cols, right Wx-D-W cols).
    # TODO(synk): the halo / channel padding could be produced in-kernel to
    # avoid this extra HBM round trip of the input.
    xp = jnp.pad(x, ((0, 0), (D, D), (D, Wx - D - W), (0, cin_p - Cin)))

    kernel_args = [xp] + param_args
    in_specs = [pl.BlockSpec(memory_space=pl.ANY)]
    for a in param_args:
        in_specs.append(pl.BlockSpec(a.shape, _const_index_map(a.ndim)))

    grid = (N, H // Hb)
    kernel = functools.partial(_block_kernel, H, W, Hb,
                               (d1, d2, d3), (W1, W2, W3), (l1, l2))

    out_p = pl.pallas_call(
        kernel,
        out_shape=jax.ShapeDtypeStruct((N, H, W, cout_p), jnp.float32),
        grid_spec=pltpu.PrefetchScalarGridSpec(
            num_scalar_prefetch=0,
            grid=grid,
            in_specs=in_specs,
            out_specs=pl.BlockSpec((1, Hb, W, cout_p), lambda n, i: (n, i, 0, 0)),
            scratch_shapes=[
                pltpu.VMEM((2, Hb + 2 * D, Wx, cin_p), jnp.float32),
                pltpu.SemaphoreType.DMA((2,)),
            ]),
        compiler_params=pltpu.CompilerParams(
            # Batch axis "parallel" (megacore); row axis must stay sequential
            # ("arbitrary") so the manual slab double-buffering is valid.
            # TODO(synk): with N == 1 on a 2-TC chip one core stays idle.
            dimension_semantics=("parallel", "arbitrary"),
            vmem_limit_bytes=int(vmem_limit)),
    )(*kernel_args)

    out = out_p[..., :Cout]
    return jnp.transpose(out, (0, 3, 1, 2))           # back to NCHW


# -------------------------------- parameters -------------------------------

def init_block_params(key, in_filters, out_filters, atrous=(1, 1, 1)):
    filters = out_filters  # grow_first=True

    def bn(k, c):
        k1, k2, k3, k4 = jax.random.split(k, 4)
        gamma = jax.random.uniform(k1, (c,), jnp.float32, 0.5, 1.5)
        beta = 0.1 * jax.random.normal(k2, (c,), jnp.float32)
        mean = 0.1 * jax.random.normal(k3, (c,), jnp.float32)
        var = jax.random.uniform(k4, (c,), jnp.float32, 0.5, 1.5)
        return _fold_bn(gamma, beta, mean, var)

    keys = jax.random.split(key, 8)
    params = {"atrous": tuple(atrous)}

    # skip branch (exists because out_filters != in_filters)
    params["skip_w"] = 0.1 * jax.random.normal(
        keys[0], (in_filters, out_filters), jnp.float32)
    params["skip_scale"], params["skip_bias"] = bn(keys[1], out_filters)

    chans = [(in_filters, filters), (filters, out_filters),
             (out_filters, out_filters)]
    for idx, (cin, cout) in enumerate(chans, start=1):
        kd, kb1, kp, kb2 = jax.random.split(keys[1 + idx], 4)
        params[f"dw{idx}"] = 0.2 * jax.random.normal(kd, (3, 3, cin), jnp.float32)
        params[f"s1_{idx}"], params[f"b1_{idx}"] = bn(kb1, cin)
        params[f"pw{idx}"] = 0.2 * jax.random.normal(kp, (cin, cout), jnp.float32)
        params[f"s2_{idx}"], params[f"b2_{idx}"] = bn(kb2, cout)
    return params


# ------------------------- pure-JAX reference check -------------------------

def _ref_depthwise(x, wd, d):
    N, H, W, C = x.shape
    xpad = jnp.pad(x, ((0, 0), (d, d), (d, d), (0, 0)))
    out = xpad[:, 0:H, 0:W, :] * wd[0, 0]
    for i in range(3):
        for j in range(3):
            if i == 0 and j == 0:
                continue
            out = out + xpad[:, i * d:i * d + H, j * d:j * d + W, :] * wd[i, j]
    return out


def _ref_pointwise(x, w):
    # same bf16-operand / f32-accumulation contract as the kernel's MXU matmul
    return jnp.einsum("nhwc,co->nhwo", x.astype(jnp.bfloat16),
                      w.astype(jnp.bfloat16),
                      preferred_element_type=jnp.float32)


def _ref_sepconv(x, wd, s1, b1, wp, s2, b2, d):
    x = jnp.maximum(x, 0.0)
    y = _ref_depthwise(x, wd, d) * s1 + b1
    # BN2 scale folded into the pointwise weight before the bf16 cast,
    # exactly like the kernel.
    return _ref_pointwise(y, wp * s2[None, :]) + b2


def block_forward_ref(x_nchw, params):
    x = jnp.transpose(x_nchw, (0, 2, 3, 1)).astype(jnp.float32)
    a = params["atrous"]
    skip = _ref_pointwise(x, params["skip_w"] * params["skip_scale"][None, :]) \
        + params["skip_bias"]
    x1 = _ref_sepconv(x, params["dw1"], params["s1_1"], params["b1_1"],
                      params["pw1"], params["s2_1"], params["b2_1"], a[0])
    x2 = _ref_sepconv(x1, params["dw2"], params["s1_2"], params["b1_2"],
                      params["pw2"], params["s2_2"], params["b2_2"], a[1])
    x3 = _ref_sepconv(x2, params["dw3"], params["s1_3"], params["b1_3"],
                      params["pw3"], params["s2_3"], params["b2_3"], a[2])
    return jnp.transpose(x3 + skip, (0, 3, 1, 2))


if __name__ == "__main__":
    key = jax.random.PRNGKey(0)
    kx, kp1, kp2 = jax.random.split(key, 3)
    in_filters, out_filters = 8, 16
    x = jax.random.normal(kx, (2, in_filters, 16, 16), jnp.float32)   # NCHW

    # Test 1: atrous=1, explicit H tiling (2 row blocks -> halo/mask and the
    # double-buffered slab DMA path).
    params1 = init_block_params(kp1, in_filters, out_filters, atrous=(1, 1, 1))
    out1 = jax.block_until_ready(block_forward(x, params1, block_h=8))
    ref1 = jax.block_until_ready(block_forward_ref(x, params1))
    assert out1.shape == (2, out_filters, 16, 16)
    np.testing.assert_allclose(np.asarray(out1), np.asarray(ref1),
                               rtol=5e-3, atol=5e-3)

    # Test 2: dilation 2 with explicit H tiling (dilated halo + masks +
    # double buffering across row blocks).
    params2 = init_block_params(kp2, in_filters, out_filters, atrous=(2, 2, 2))
    out2 = jax.block_until_ready(block_forward(x, params2, block_h=8))
    ref2 = jax.block_until_ready(block_forward_ref(x, params2))
    np.testing.assert_allclose(np.asarray(out2), np.asarray(ref2),
                               rtol=5e-3, atol=5e-3)

    # Test 3: auto block_h (VMEM-capacity-aware planner, single row block).
    out3 = jax.block_until_ready(block_forward(x, params2))
    np.testing.assert_allclose(np.asarray(out3), np.asarray(ref2),
                               rtol=5e-3, atol=5e-3)

    print("KERNEL_OK")
</pallas_src>

<mosaic_0001>
module attributes {stable_mosaic.version = 11 : i64} {
  func.func @_block_kernel(%arg0: i32, %arg1: i32, %arg2: memref<2x22x40x128xf32, #tpu.memory_space<any>>, %arg3: memref<128x128xbf16, #tpu.memory_space<vmem>>, %arg4: memref<1x1x128xf32, #tpu.memory_space<vmem>>, %arg5: memref<3x3x128xf32, #tpu.memory_space<vmem>>, %arg6: memref<1x1x128xf32, #tpu.memory_space<vmem>>, %arg7: memref<128x128xbf16, #tpu.memory_space<vmem>>, %arg8: memref<1x1x128xf32, #tpu.memory_space<vmem>>, %arg9: memref<3x3x128xf32, #tpu.memory_space<vmem>>, %arg10: memref<1x1x128xf32, #tpu.memory_space<vmem>>, %arg11: memref<128x128xbf16, #tpu.memory_space<vmem>>, %arg12: memref<1x1x128xf32, #tpu.memory_space<vmem>>, %arg13: memref<3x3x128xf32, #tpu.memory_space<vmem>>, %arg14: memref<1x1x128xf32, #tpu.memory_space<vmem>>, %arg15: memref<128x128xbf16, #tpu.memory_space<vmem>>, %arg16: memref<1x1x128xf32, #tpu.memory_space<vmem>>, %arg17: memref<1x8x16x128xf32, #tpu.memory_space<vmem>>, %arg18: memref<2x14x40x128xf32, #tpu.memory_space<vmem>>, %arg19: memref<2x!tpu.dma_semaphore, #tpu.memory_space<semaphore_mem>>) attributes {dimension_semantics = [#tpu.dimension_semantics<parallel>, #tpu.dimension_semantics<arbitrary>], iteration_bounds = array<i64: 2, 2>, scalar_prefetch = 0 : i64, scratch_operands = 2 : i64, tpu.core_type = #tpu.core_type<tc>, window_params = [{}, {pipeline_mode = #tpu.pipeline_mode<synchronous>, transform_indices = @transform_1, window_bounds = array<i64: 128, 128>}, {pipeline_mode = #tpu.pipeline_mode<synchronous>, transform_indices = @transform_2, window_bounds = array<i64: 1, 1, 128>}, {pipeline_mode = #tpu.pipeline_mode<synchronous>, transform_indices = @transform_3, window_bounds = array<i64: 3, 3, 128>}, {pipeline_mode = #tpu.pipeline_mode<synchronous>, transform_indices = @transform_4, window_bounds = array<i64: 1, 1, 128>}, {pipeline_mode = #tpu.pipeline_mode<synchronous>, transform_indices = @transform_5, window_bounds = array<i64: 128, 128>}, {pipeline_mode = #tpu.pipeline_mode<synchronous>, transform_indices = @transform_6, window_bounds = array<i64: 1, 1, 128>}, {pipeline_mode = #tpu.pipeline_mode<synchronous>, transform_indices = @transform_7, window_bounds = array<i64: 3, 3, 128>}, {pipeline_mode = #tpu.pipeline_mode<synchronous>, transform_indices = @transform_8, window_bounds = array<i64: 1, 1, 128>}, {pipeline_mode = #tpu.pipeline_mode<synchronous>, transform_indices = @transform_9, window_bounds = array<i64: 128, 128>}, {pipeline_mode = #tpu.pipeline_mode<synchronous>, transform_indices = @transform_10, window_bounds = array<i64: 1, 1, 128>}, {pipeline_mode = #tpu.pipeline_mode<synchronous>, transform_indices = @transform_11, window_bounds = array<i64: 3, 3, 128>}, {pipeline_mode = #tpu.pipeline_mode<synchronous>, transform_indices = @transform_12, window_bounds = array<i64: 1, 1, 128>}, {pipeline_mode = #tpu.pipeline_mode<synchronous>, transform_indices = @transform_13, window_bounds = array<i64: 128, 128>}, {pipeline_mode = #tpu.pipeline_mode<synchronous>, transform_indices = @transform_14, window_bounds = array<i64: 1, 1, 128>}, {transform_indices = @transform_15, window_bounds = array<i64: 1, 8, 16, 128>}]} {
    %c8_i32 = arith.constant 8 : i32
    %0 = arith.muli %arg1, %c8_i32 : i32
    %c2_i32 = arith.constant 2 : i32
    %c0_i32 = arith.constant 0 : i32
    %1 = arith.cmpi eq, %c2_i32, %c0_i32 : i32
    %c1_i32 = arith.constant 1 : i32
    %2 = arith.select %1, %c1_i32, %c2_i32 : i32
    %3 = arith.remsi %arg1, %2 : i32
    %c0_i32_0 = arith.constant 0 : i32
    %4 = arith.cmpi ne, %3, %c0_i32_0 : i32
    %c0_i32_1 = arith.constant 0 : i32
    %5 = arith.cmpi slt, %3, %c0_i32_1 : i32
    %c0_i32_2 = arith.constant 0 : i32
    %6 = arith.cmpi slt, %2, %c0_i32_2 : i32
    %7 = arith.xori %5, %6 : i1
    %8 = arith.andi %7, %4 : i1
    %9 = arith.addi %3, %2 : i32
    %10 = arith.select %8, %9, %3 : i32
    %c0_i32_3 = arith.constant 0 : i32
    %11 = arith.cmpi eq, %arg1, %c0_i32_3 : i32
    %12 = arith.extui %11 : i1 to i32
    %c0_i32_4 = arith.constant 0 : i32
    %13 = arith.cmpi ne, %12, %c0_i32_4 : i32
    scf.if %13 {
      %c8_i32_75 = arith.constant 8 : i32
      %320 = arith.muli %arg1, %c8_i32_75 : i32
      %321 = tpu.assume_multiple %320, 8 : i32
      %c0_i32_76 = arith.constant 0 : i32
      %c0_i32_77 = arith.constant 0 : i32
      %322 = tpu.memref_slice %arg2[%arg0, %321, %c0_i32_76, %c0_i32_77] : memref<2x22x40x128xf32, #tpu.memory_space<any>> -> memref<1x14x40x128xf32, #tpu.memory_space<any>>
      %323 = tpu.memref_squeeze %322 : memref<1x14x40x128xf32, #tpu.memory_space<any>> -> memref<14x40x128xf32, #tpu.memory_space<any>>
      %c0_i32_78 = arith.constant 0 : i32
      %c0_i32_79 = arith.constant 0 : i32
      %c0_i32_80 = arith.constant 0 : i32
      %324 = tpu.memref_slice %arg18[%10, %c0_i32_78, %c0_i32_79, %c0_i32_80] : memref<2x14x40x128xf32, #tpu.memory_space<vmem>> -> memref<1x14x40x128xf32, #tpu.memory_space<vmem>>
      %325 = tpu.memref_squeeze %324 : memref<1x14x40x128xf32, #tpu.memory_space<vmem>> -> memref<14x40x128xf32, #tpu.memory_space<vmem>>
      %326 = tpu.memref_slice %arg19[%10] : memref<2x!tpu.dma_semaphore, #tpu.memory_space<semaphore_mem>> -> memref<1x!tpu.dma_semaphore, #tpu.memory_space<semaphore_mem>>
      %327 = tpu.memref_squeeze %326 : memref<1x!tpu.dma_semaphore, #tpu.memory_space<semaphore_mem>> -> memref<!tpu.dma_semaphore, #tpu.memory_space<semaphore_mem>>
      tpu.enqueue_dma source(%323 : memref<14x40x128xf32, #tpu.memory_space<any>>) target(%325 : memref<14x40x128xf32, #tpu.memory_space<vmem>>) target_semaphore(%327 : memref<!tpu.dma_semaphore, #tpu.memory_space<semaphore_mem>>)
    } else {
    }
    %c1_i32_5 = arith.constant 1 : i32
    %14 = arith.addi %arg1, %c1_i32_5 : i32
    %c2_i32_6 = arith.constant 2 : i32
    %15 = arith.cmpi slt, %14, %c2_i32_6 : i32
    %16 = arith.extui %15 : i1 to i32
    %c0_i32_7 = arith.constant 0 : i32
    %17 = arith.cmpi ne, %16, %c0_i32_7 : i32
    scf.if %17 {
      %c1_i32_75 = arith.constant 1 : i32
      %320 = arith.addi %arg1, %c1_i32_75 : i32
      %c1_i32_76 = arith.constant 1 : i32
      %321 = arith.subi %c1_i32_76, %10 : i32
      %c8_i32_77 = arith.constant 8 : i32
      %322 = arith.muli %320, %c8_i32_77 : i32
      %323 = tpu.assume_multiple %322, 8 : i32
      %c0_i32_78 = arith.constant 0 : i32
      %c0_i32_79 = arith.constant 0 : i32
      %324 = tpu.memref_slice %arg2[%arg0, %323, %c0_i32_78, %c0_i32_79] : memref<2x22x40x128xf32, #tpu.memory_space<any>> -> memref<1x14x40x128xf32, #tpu.memory_space<any>>
      %325 = tpu.memref_squeeze %324 : memref<1x14x40x128xf32, #tpu.memory_space<any>> -> memref<14x40x128xf32, #tpu.memory_space<any>>
      %c0_i32_80 = arith.constant 0 : i32
      %c0_i32_81 = arith.constant 0 : i32
      %c0_i32_82 = arith.constant 0 : i32
      %326 = tpu.memref_slice %arg18[%321, %c0_i32_80, %c0_i32_81, %c0_i32_82] : memref<2x14x40x128xf32, #tpu.memory_space<vmem>> -> memref<1x14x40x128xf32, #tpu.memory_space<vmem>>
      %327 = tpu.memref_squeeze %326 : memref<1x14x40x128xf32, #tpu.memory_space<vmem>> -> memref<14x40x128xf32, #tpu.memory_space<vmem>>
      %328 = tpu.memref_slice %arg19[%321] : memref<2x!tpu.dma_semaphore, #tpu.memory_space<semaphore_mem>> -> memref<1x!tpu.dma_semaphore, #tpu.memory_space<semaphore_mem>>
      %329 = tpu.memref_squeeze %328 : memref<1x!tpu.dma_semaphore, #tpu.memory_space<semaphore_mem>> -> memref<!tpu.dma_semaphore, #tpu.memory_space<semaphore_mem>>
      tpu.enqueue_dma source(%325 : memref<14x40x128xf32, #tpu.memory_space<any>>) target(%327 : memref<14x40x128xf32, #tpu.memory_space<vmem>>) target_semaphore(%329 : memref<!tpu.dma_semaphore, #tpu.memory_space<semaphore_mem>>)
    } else {
    }
    %c8_i32_8 = arith.constant 8 : i32
    %18 = arith.muli %arg1, %c8_i32_8 : i32
    %19 = tpu.assume_multiple %18, 8 : i32
    %c0_i32_9 = arith.constant 0 : i32
    %c0_i32_10 = arith.constant 0 : i32
    %20 = tpu.memref_slice %arg2[%arg0, %19, %c0_i32_9, %c0_i32_10] : memref<2x22x40x128xf32, #tpu.memory_space<any>> -> memref<1x14x40x128xf32, #tpu.memory_space<any>>
    %21 = tpu.memref_squeeze %20 : memref<1x14x40x128xf32, #tpu.memory_space<any>> -> memref<14x40x128xf32, #tpu.memory_space<any>>
    %c0_i32_11 = arith.constant 0 : i32
    %c0_i32_12 = arith.constant 0 : i32
    %c0_i32_13 = arith.constant 0 : i32
    %22 = tpu.memref_slice %arg18[%10, %c0_i32_11, %c0_i32_12, %c0_i32_13] : memref<2x14x40x128xf32, #tpu.memory_space<vmem>> -> memref<1x14x40x128xf32, #tpu.memory_space<vmem>>
    %23 = tpu.memref_squeeze %22 : memref<1x14x40x128xf32, #tpu.memory_space<vmem>> -> memref<14x40x128xf32, #tpu.memory_space<vmem>>
    %24 = tpu.memref_slice %arg19[%10] : memref<2x!tpu.dma_semaphore, #tpu.memory_space<semaphore_mem>> -> memref<1x!tpu.dma_semaphore, #tpu.memory_space<semaphore_mem>>
    %25 = tpu.memref_squeeze %24 : memref<1x!tpu.dma_semaphore, #tpu.memory_space<semaphore_mem>> -> memref<!tpu.dma_semaphore, #tpu.memory_space<semaphore_mem>>
    tpu.wait_dma2 semaphore(%25 : memref<!tpu.dma_semaphore, #tpu.memory_space<semaphore_mem>>) src(%21 : memref<14x40x128xf32, #tpu.memory_space<any>>) dst(%23 : memref<14x40x128xf32, #tpu.memory_space<vmem>>)
    %26 = arith.index_cast %10 : i32 to index
    %c0 = arith.constant 0 : index
    %c0_14 = arith.constant 0 : index
    %c0_15 = arith.constant 0 : index
    %27 = vector.load %arg18[%26, %c0, %c0_14, %c0_15] : memref<2x14x40x128xf32, #tpu.memory_space<vmem>>, vector<1x14x40x128xf32>
    %28 = vector.shape_cast %27 : vector<1x14x40x128xf32> to vector<14x40x128xf32>
    %cst = arith.constant 0.000000e+00 : f32
    %29 = vector.broadcast %cst : f32 to vector<14x40x128xf32>
    %30 = arith.maximumf %28, %29 : vector<14x40x128xf32>
    %c0_16 = arith.constant 0 : index
    %c0_17 = arith.constant 0 : index
    %c0_18 = arith.constant 0 : index
    %31 = vector.load %arg5[%c0_16, %c0_17, %c0_18] : memref<3x3x128xf32, #tpu.memory_space<vmem>>, vector<3x3x128xf32>
    %32 = vector.extract_strided_slice %30 {offsets = [0, 0, 0], sizes = [12, 40, 128], strides = [1, 1, 1]} : vector<14x40x128xf32> to vector<12x40x128xf32>
    %33 = vector.extract_strided_slice %31 {offsets = [0, 0, 0], sizes = [1, 1, 128], strides = [1, 1, 1]} : vector<3x3x128xf32> to vector<1x1x128xf32>
    %34 = vector.shape_cast %33 : vector<1x1x128xf32> to vector<128xf32>
    %35 = vector.shape_cast %34 : vector<128xf32> to vector<1x1x128xf32>
    %36 = vector.broadcast %35 : vector<1x1x128xf32> to vector<12x40x128xf32>
    %37 = arith.mulf %32, %36 : vector<12x40x128xf32>
    %38 = vector.extract_strided_slice %30 {offsets = [1, 0, 0], sizes = [12, 40, 128], strides = [1, 1, 1]} : vector<14x40x128xf32> to vector<12x40x128xf32>
    %39 = vector.extract_strided_slice %31 {offsets = [1, 0, 0], sizes = [1, 1, 128], strides = [1, 1, 1]} : vector<3x3x128xf32> to vector<1x1x128xf32>
    %40 = vector.shape_cast %39 : vector<1x1x128xf32> to vector<128xf32>
    %41 = vector.shape_cast %40 : vector<128xf32> to vector<1x1x128xf32>
    %42 = vector.broadcast %41 : vector<1x1x128xf32> to vector<12x40x128xf32>
    %43 = arith.mulf %38, %42 : vector<12x40x128xf32>
    %44 = arith.addf %37, %43 : vector<12x40x128xf32>
    %45 = vector.extract_strided_slice %30 {offsets = [2, 0, 0], sizes = [12, 40, 128], strides = [1, 1, 1]} : vector<14x40x128xf32> to vector<12x40x128xf32>
    %46 = vector.extract_strided_slice %31 {offsets = [2, 0, 0], sizes = [1, 1, 128], strides = [1, 1, 1]} : vector<3x3x128xf32> to vector<1x1x128xf32>
    %47 = vector.shape_cast %46 : vector<1x1x128xf32> to vector<128xf32>
    %48 = vector.shape_cast %47 : vector<128xf32> to vector<1x1x128xf32>
    %49 = vector.broadcast %48 : vector<1x1x128xf32> to vector<12x40x128xf32>
    %50 = arith.mulf %45, %49 : vector<12x40x128xf32>
    %51 = arith.addf %44, %50 : vector<12x40x128xf32>
    %52 = vector.extract_strided_slice %30 {offsets = [0, 0, 0], sizes = [12, 40, 128], strides = [1, 1, 1]} : vector<14x40x128xf32> to vector<12x40x128xf32>
    %53 = vector.extract_strided_slice %31 {offsets = [0, 1, 0], sizes = [1, 1, 128], strides = [1, 1, 1]} : vector<3x3x128xf32> to vector<1x1x128xf32>
    %54 = vector.shape_cast %53 : vector<1x1x128xf32> to vector<128xf32>
    %55 = vector.shape_cast %54 : vector<128xf32> to vector<1x1x128xf32>
    %56 = vector.broadcast %55 : vector<1x1x128xf32> to vector<12x40x128xf32>
    %57 = arith.mulf %52, %56 : vector<12x40x128xf32>
    %58 = vector.extract_strided_slice %30 {offsets = [1, 0, 0], sizes = [12, 40, 128], strides = [1, 1, 1]} : vector<14x40x128xf32> to vector<12x40x128xf32>
    %59 = vector.extract_strided_slice %31 {offsets = [1, 1, 0], sizes = [1, 1, 128], strides = [1, 1, 1]} : vector<3x3x128xf32> to vector<1x1x128xf32>
    %60 = vector.shape_cast %59 : vector<1x1x128xf32> to vector<128xf32>
    %61 = vector.shape_cast %60 : vector<128xf32> to vector<1x1x128xf32>
    %62 = vector.broadcast %61 : vector<1x1x128xf32> to vector<12x40x128xf32>
    %63 = arith.mulf %58, %62 : vector<12x40x128xf32>
    %64 = arith.addf %57, %63 : vector<12x40x128xf32>
    %65 = vector.extract_strided_slice %30 {offsets = [2, 0, 0], sizes = [12, 40, 128], strides = [1, 1, 1]} : vector<14x40x128xf32> to vector<12x40x128xf32>
    %66 = vector.extract_strided_slice %31 {offsets = [2, 1, 0], sizes = [1, 1, 128], strides = [1, 1, 1]} : vector<3x3x128xf32> to vector<1x1x128xf32>
    %67 = vector.shape_cast %66 : vector<1x1x128xf32> to vector<128xf32>
    %68 = vector.shape_cast %67 : vector<128xf32> to vector<1x1x128xf32>
    %69 = vector.broadcast %68 : vector<1x1x128xf32> to vector<12x40x128xf32>
    %70 = arith.mulf %65, %69 : vector<12x40x128xf32>
    %71 = arith.addf %64, %70 : vector<12x40x128xf32>
    %72 = vector.extract_strided_slice %30 {offsets = [0, 0, 0], sizes = [12, 40, 128], strides = [1, 1, 1]} : vector<14x40x128xf32> to vector<12x40x128xf32>
    %73 = vector.extract_strided_slice %31 {offsets = [0, 2, 0], sizes = [1, 1, 128], strides = [1, 1, 1]} : vector<3x3x128xf32> to vector<1x1x128xf32>
    %74 = vector.shape_cast %73 : vector<1x1x128xf32> to vector<128xf32>
    %75 = vector.shape_cast %74 : vector<128xf32> to vector<1x1x128xf32>
    %76 = vector.broadcast %75 : vector<1x1x128xf32> to vector<12x40x128xf32>
    %77 = arith.mulf %72, %76 : vector<12x40x128xf32>
    %78 = vector.extract_strided_slice %30 {offsets = [1, 0, 0], sizes = [12, 40, 128], strides = [1, 1, 1]} : vector<14x40x128xf32> to vector<12x40x128xf32>
    %79 = vector.extract_strided_slice %31 {offsets = [1, 2, 0], sizes = [1, 1, 128], strides = [1, 1, 1]} : vector<3x3x128xf32> to vector<1x1x128xf32>
    %80 = vector.shape_cast %79 : vector<1x1x128xf32> to vector<128xf32>
    %81 = vector.shape_cast %80 : vector<128xf32> to vector<1x1x128xf32>
    %82 = vector.broadcast %81 : vector<1x1x128xf32> to vector<12x40x128xf32>
    %83 = arith.mulf %78, %82 : vector<12x40x128xf32>
    %84 = arith.addf %77, %83 : vector<12x40x128xf32>
    %85 = vector.extract_strided_slice %30 {offsets = [2, 0, 0], sizes = [12, 40, 128], strides = [1, 1, 1]} : vector<14x40x128xf32> to vector<12x40x128xf32>
    %86 = vector.extract_strided_slice %31 {offsets = [2, 2, 0], sizes = [1, 1, 128], strides = [1, 1, 1]} : vector<3x3x128xf32> to vector<1x1x128xf32>
    %87 = vector.shape_cast %86 : vector<1x1x128xf32> to vector<128xf32>
    %88 = vector.shape_cast %87 : vector<128xf32> to vector<1x1x128xf32>
    %89 = vector.broadcast %88 : vector<1x1x128xf32> to vector<12x40x128xf32>
    %90 = arith.mulf %85, %89 : vector<12x40x128xf32>
    %91 = arith.addf %84, %90 : vector<12x40x128xf32>
    %92 = vector.extract_strided_slice %51 {offsets = [0, 0, 0], sizes = [12, 32, 128], strides = [1, 1, 1]} : vector<12x40x128xf32> to vector<12x32x128xf32>
    %93 = vector.extract_strided_slice %71 {offsets = [0, 1, 0], sizes = [12, 32, 128], strides = [1, 1, 1]} : vector<12x40x128xf32> to vector<12x32x128xf32>
    %94 = arith.addf %92, %93 : vector<12x32x128xf32>
    %95 = vector.extract_strided_slice %91 {offsets = [0, 2, 0], sizes = [12, 32, 128], strides = [1, 1, 1]} : vector<12x40x128xf32> to vector<12x32x128xf32>
    %96 = arith.addf %94, %95 : vector<12x32x128xf32>
    %c0_19 = arith.constant 0 : index
    %c0_20 = arith.constant 0 : index
    %c0_21 = arith.constant 0 : index
    %97 = vector.load %arg6[%c0_19, %c0_20, %c0_21] : memref<1x1x128xf32, #tpu.memory_space<vmem>>, vector<1x1x128xf32>
    %98 = vector.broadcast %97 : vector<1x1x128xf32> to vector<12x32x128xf32>
    %99 = arith.addf %96, %98 : vector<12x32x128xf32>
    %c0_22 = arith.constant 0 : index
    %c0_23 = arith.constant 0 : index
    %100 = vector.load %arg7[%c0_22, %c0_23] : memref<128x128xbf16, #tpu.memory_space<vmem>>, vector<128x128xbf16>
    %c0_24 = arith.constant 0 : index
    %c0_25 = arith.constant 0 : index
    %c0_26 = arith.constant 0 : index
    %101 = vector.load %arg8[%c0_24, %c0_25, %c0_26] : memref<1x1x128xf32, #tpu.memory_space<vmem>>, vector<1x1x128xf32>
    %102 = vector.shape_cast %99 : vector<12x32x128xf32> to vector<384x128xf32>
    %103 = arith.truncf %102 : vector<384x128xf32> to vector<384x128xbf16>
    %cst_27 = arith.constant dense<0.000000e+00> : vector<384x128xf32>
    %104 = tpu.matmul %103, %100, %cst_27 {dimension_numbers = #tpu.dot_dimension_numbers<[1], [0], [0], [1], [0, 0, 1, 1], [], []>} : vector<384x128xbf16>, vector<128x128xbf16>, vector<384x128xf32> -> vector<384x128xf32>
    %105 = vector.shape_cast %104 : vector<384x128xf32> to vector<12x32x128xf32>
    %106 = vector.broadcast %101 : vector<1x1x128xf32> to vector<12x32x128xf32>
    %107 = arith.addf %105, %106 : vector<12x32x128xf32>
    %c2_i32_28 = arith.constant 2 : i32
    %108 = arith.subi %0, %c2_i32_28 : i32
    %109 = tpu.iota {dimensions = array<i32: 0>} : vector<12x32x1xi32>
    %110 = vector.broadcast %108 : i32 to vector<12x32x1xi32>
    %111 = arith.addi %109, %110 : vector<12x32x1xi32>
    %112 = tpu.iota {dimensions = array<i32: 1>} : vector<12x32x1xi32>
    %c0_i32_29 = arith.constant 0 : i32
    %113 = vector.broadcast %c0_i32_29 : i32 to vector<12x32x1xi32>
    %114 = arith.cmpi sge, %111, %113 : vector<12x32x1xi32>
    %c16_i32 = arith.constant 16 : i32
    %115 = vector.broadcast %c16_i32 : i32 to vector<12x32x1xi32>
    %116 = arith.cmpi slt, %111, %115 : vector<12x32x1xi32>
    %117 = arith.andi %114, %116 : vector<12x32x1xi1>
    %c2_i32_30 = arith.constant 2 : i32
    %118 = vector.broadcast %c2_i32_30 : i32 to vector<12x32x1xi32>
    %119 = arith.cmpi sge, %112, %118 : vector<12x32x1xi32>
    %120 = arith.andi %117, %119 : vector<12x32x1xi1>
    %c18_i32 = arith.constant 18 : i32
    %121 = vector.broadcast %c18_i32 : i32 to vector<12x32x1xi32>
    %122 = arith.cmpi slt, %112, %121 : vector<12x32x1xi32>
    %123 = arith.andi %120, %122 : vector<12x32x1xi1>
    %cst_31 = arith.constant 0.000000e+00 : f32
    %124 = vector.broadcast %cst_31 : f32 to vector<12x32x128xf32>
    %125 = arith.cmpf ogt, %107, %124 : vector<12x32x128xf32>
    %126 = vector.broadcast %123 : vector<12x32x1xi1> to vector<12x32x128xi1>
    %127 = arith.andi %126, %125 : vector<12x32x128xi1>
    %cst_32 = arith.constant 0.000000e+00 : f32
    %128 = vector.broadcast %cst_32 : f32 to vector<12x32x128xf32>
    %129 = arith.select %127, %107, %128 : vector<12x32x128xi1>, vector<12x32x128xf32>
    %c0_33 = arith.constant 0 : index
    %c0_34 = arith.constant 0 : index
    %c0_35 = arith.constant 0 : index
    %130 = vector.load %arg9[%c0_33, %c0_34, %c0_35] : memref<3x3x128xf32, #tpu.memory_space<vmem>>, vector<3x3x128xf32>
    %131 = vector.extract_strided_slice %129 {offsets = [0, 0, 0], sizes = [10, 32, 128], strides = [1, 1, 1]} : vector<12x32x128xf32> to vector<10x32x128xf32>
    %132 = vector.extract_strided_slice %130 {offsets = [0, 0, 0], sizes = [1, 1, 128], strides = [1, 1, 1]} : vector<3x3x128xf32> to vector<1x1x128xf32>
    %133 = vector.shape_cast %132 : vector<1x1x128xf32> to vector<128xf32>
    %134 = vector.shape_cast %133 : vector<128xf32> to vector<1x1x128xf32>
    %135 = vector.broadcast %134 : vector<1x1x128xf32> to vector<10x32x128xf32>
    %136 = arith.mulf %131, %135 : vector<10x32x128xf32>
    %137 = vector.extract_strided_slice %129 {offsets = [1, 0, 0], sizes = [10, 32, 128], strides = [1, 1, 1]} : vector<12x32x128xf32> to vector<10x32x128xf32>
    %138 = vector.extract_strided_slice %130 {offsets = [1, 0, 0], sizes = [1, 1, 128], strides = [1, 1, 1]} : vector<3x3x128xf32> to vector<1x1x128xf32>
    %139 = vector.shape_cast %138 : vector<1x1x128xf32> to vector<128xf32>
    %140 = vector.shape_cast %139 : vector<128xf32> to vector<1x1x128xf32>
    %141 = vector.broadcast %140 : vector<1x1x128xf32> to vector<10x32x128xf32>
    %142 = arith.mulf %137, %141 : vector<10x32x128xf32>
    %143 = arith.addf %136, %142 : vector<10x32x128xf32>
    %144 = vector.extract_strided_slice %129 {offsets = [2, 0, 0], sizes = [10, 32, 128], strides = [1, 1, 1]} : vector<12x32x128xf32> to vector<10x32x128xf32>
    %145 = vector.extract_strided_slice %130 {offsets = [2, 0, 0], sizes = [1, 1, 128], strides = [1, 1, 1]} : vector<3x3x128xf32> to vector<1x1x128xf32>
    %146 = vector.shape_cast %145 : vector<1x1x128xf32> to vector<128xf32>
    %147 = vector.shape_cast %146 : vector<128xf32> to vector<1x1x128xf32>
    %148 = vector.broadcast %147 : vector<1x1x128xf32> to vector<10x32x128xf32>
    %149 = arith.mulf %144, %148 : vector<10x32x128xf32>
    %150 = arith.addf %143, %149 : vector<10x32x128xf32>
    %151 = vector.extract_strided_slice %129 {offsets = [0, 0, 0], sizes = [10, 32, 128], strides = [1, 1, 1]} : vector<12x32x128xf32> to vector<10x32x128xf32>
    %152 = vector.extract_strided_slice %130 {offsets = [0, 1, 0], sizes = [1, 1, 128], strides = [1, 1, 1]} : vector<3x3x128xf32> to vector<1x1x128xf32>
    %153 = vector.shape_cast %152 : vector<1x1x128xf32> to vector<128xf32>
    %154 = vector.shape_cast %153 : vector<128xf32> to vector<1x1x128xf32>
    %155 = vector.broadcast %154 : vector<1x1x128xf32> to vector<10x32x128xf32>
    %156 = arith.mulf %151, %155 : vector<10x32x128xf32>
    %157 = vector.extract_strided_slice %129 {offsets = [1, 0, 0], sizes = [10, 32, 128], strides = [1, 1, 1]} : vector<12x32x128xf32> to vector<10x32x128xf32>
    %158 = vector.extract_strided_slice %130 {offsets = [1, 1, 0], sizes = [1, 1, 128], strides = [1, 1, 1]} : vector<3x3x128xf32> to vector<1x1x128xf32>
    %159 = vector.shape_cast %158 : vector<1x1x128xf32> to vector<128xf32>
    %160 = vector.shape_cast %159 : vector<128xf32> to vector<1x1x128xf32>
    %161 = vector.broadcast %160 : vector<1x1x128xf32> to vector<10x32x128xf32>
    %162 = arith.mulf %157, %161 : vector<10x32x128xf32>
    %163 = arith.addf %156, %162 : vector<10x32x128xf32>
    %164 = vector.extract_strided_slice %129 {offsets = [2, 0, 0], sizes = [10, 32, 128], strides = [1, 1, 1]} : vector<12x32x128xf32> to vector<10x32x128xf32>
    %165 = vector.extract_strided_slice %130 {offsets = [2, 1, 0], sizes = [1, 1, 128], strides = [1, 1, 1]} : vector<3x3x128xf32> to vector<1x1x128xf32>
    %166 = vector.shape_cast %165 : vector<1x1x128xf32> to vector<128xf32>
    %167 = vector.shape_cast %166 : vector<128xf32> to vector<1x1x128xf32>
    %168 = vector.broadcast %167 : vector<1x1x128xf32> to vector<10x32x128xf32>
    %169 = arith.mulf %164, %168 : vector<10x32x128xf32>
    %170 = arith.addf %163, %169 : vector<10x32x128xf32>
    %171 = vector.extract_strided_slice %129 {offsets = [0, 0, 0], sizes = [10, 32, 128], strides = [1, 1, 1]} : vector<12x32x128xf32> to vector<10x32x128xf32>
    %172 = vector.extract_strided_slice %130 {offsets = [0, 2, 0], sizes = [1, 1, 128], strides = [1, 1, 1]} : vector<3x3x128xf32> to vector<1x1x128xf32>
    %173 = vector.shape_cast %172 : vector<1x1x128xf32> to vector<128xf32>
    %174 = vector.shape_cast %173 : vector<128xf32> to vector<1x1x128xf32>
    %175 = vector.broadcast %174 : vector<1x1x128xf32> to vector<10x32x128xf32>
    %176 = arith.mulf %171, %175 : vector<10x32x128xf32>
    %177 = vector.extract_strided_slice %129 {offsets = [1, 0, 0], sizes = [10, 32, 128], strides = [1, 1, 1]} : vector<12x32x128xf32> to vector<10x32x128xf32>
    %178 = vector.extract_strided_slice %130 {offsets = [1, 2, 0], sizes = [1, 1, 128], strides = [1, 1, 1]} : vector<3x3x128xf32> to vector<1x1x128xf32>
    %179 = vector.shape_cast %178 : vector<1x1x128xf32> to vector<128xf32>
    %180 = vector.shape_cast %179 : vector<128xf32> to vector<1x1x128xf32>
    %181 = vector.broadcast %180 : vector<1x1x128xf32> to vector<10x32x128xf32>
    %182 = arith.mulf %177, %181 : vector<10x32x128xf32>
    %183 = arith.addf %176, %182 : vector<10x32x128xf32>
    %184 = vector.extract_strided_slice %129 {offsets = [2, 0, 0], sizes = [10, 32, 128], strides = [1, 1, 1]} : vector<12x32x128xf32> to vector<10x32x128xf32>
    %185 = vector.extract_strided_slice %130 {offsets = [2, 2, 0], sizes = [1, 1, 128], strides = [1, 1, 1]} : vector<3x3x128xf32> to vector<1x1x128xf32>
    %186 = vector.shape_cast %185 : vector<1x1x128xf32> to vector<128xf32>
    %187 = vector.shape_cast %186 : vector<128xf32> to vector<1x1x128xf32>
    %188 = vector.broadcast %187 : vector<1x1x128xf32> to vector<10x32x128xf32>
    %189 = arith.mulf %184, %188 : vector<10x32x128xf32>
    %190 = arith.addf %183, %189 : vector<10x32x128xf32>
    %191 = vector.extract_strided_slice %150 {offsets = [0, 0, 0], sizes = [10, 24, 128], strides = [1, 1, 1]} : vector<10x32x128xf32> to vector<10x24x128xf32>
    %192 = vector.extract_strided_slice %170 {offsets = [0, 1, 0], sizes = [10, 24, 128], strides = [1, 1, 1]} : vector<10x32x128xf32> to vector<10x24x128xf32>
    %193 = arith.addf %191, %192 : vector<10x24x128xf32>
    %194 = vector.extract_strided_slice %190 {offsets = [0, 2, 0], sizes = [10, 24, 128], strides = [1, 1, 1]} : vector<10x32x128xf32> to vector<10x24x128xf32>
    %195 = arith.addf %193, %194 : vector<10x24x128xf32>
    %c0_36 = arith.constant 0 : index
    %c0_37 = arith.constant 0 : index
    %c0_38 = arith.constant 0 : index
    %196 = vector.load %arg10[%c0_36, %c0_37, %c0_38] : memref<1x1x128xf32, #tpu.memory_space<vmem>>, vector<1x1x128xf32>
    %197 = vector.broadcast %196 : vector<1x1x128xf32> to vector<10x24x128xf32>
    %198 = arith.addf %195, %197 : vector<10x24x128xf32>
    %c0_39 = arith.constant 0 : index
    %c0_40 = arith.constant 0 : index
    %199 = vector.load %arg11[%c0_39, %c0_40] : memref<128x128xbf16, #tpu.memory_space<vmem>>, vector<128x128xbf16>
    %c0_41 = arith.constant 0 : index
    %c0_42 = arith.constant 0 : index
    %c0_43 = arith.constant 0 : index
    %200 = vector.load %arg12[%c0_41, %c0_42, %c0_43] : memref<1x1x128xf32, #tpu.memory_space<vmem>>, vector<1x1x128xf32>
    %201 = vector.shape_cast %198 : vector<10x24x128xf32> to vector<240x128xf32>
    %202 = arith.truncf %201 : vector<240x128xf32> to vector<240x128xbf16>
    %cst_44 = arith.constant dense<0.000000e+00> : vector<240x128xf32>
    %203 = tpu.matmul %202, %199, %cst_44 {dimension_numbers = #tpu.dot_dimension_numbers<[1], [0], [0], [1], [0, 0, 1, 1], [], []>} : vector<240x128xbf16>, vector<128x128xbf16>, vector<240x128xf32> -> vector<240x128xf32>
    %204 = vector.shape_cast %203 : vector<240x128xf32> to vector<10x24x128xf32>
    %205 = vector.broadcast %200 : vector<1x1x128xf32> to vector<10x24x128xf32>
    %206 = arith.addf %204, %205 : vector<10x24x128xf32>
    %c1_i32_45 = arith.constant 1 : i32
    %207 = arith.subi %0, %c1_i32_45 : i32
    %208 = tpu.iota {dimensions = array<i32: 0>} : vector<10x24x1xi32>
    %209 = vector.broadcast %207 : i32 to vector<10x24x1xi32>
    %210 = arith.addi %208, %209 : vector<10x24x1xi32>
    %211 = tpu.iota {dimensions = array<i32: 1>} : vector<10x24x1xi32>
    %c0_i32_46 = arith.constant 0 : i32
    %212 = vector.broadcast %c0_i32_46 : i32 to vector<10x24x1xi32>
    %213 = arith.cmpi sge, %210, %212 : vector<10x24x1xi32>
    %c16_i32_47 = arith.constant 16 : i32
    %214 = vector.broadcast %c16_i32_47 : i32 to vector<10x24x1xi32>
    %215 = arith.cmpi slt, %210, %214 : vector<10x24x1xi32>
    %216 = arith.andi %213, %215 : vector<10x24x1xi1>
    %c1_i32_48 = arith.constant 1 : i32
    %217 = vector.broadcast %c1_i32_48 : i32 to vector<10x24x1xi32>
    %218 = arith.cmpi sge, %211, %217 : vector<10x24x1xi32>
    %219 = arith.andi %216, %218 : vector<10x24x1xi1>
    %c17_i32 = arith.constant 17 : i32
    %220 = vector.broadcast %c17_i32 : i32 to vector<10x24x1xi32>
    %221 = arith.cmpi slt, %211, %220 : vector<10x24x1xi32>
    %222 = arith.andi %219, %221 : vector<10x24x1xi1>
    %cst_49 = arith.constant 0.000000e+00 : f32
    %223 = vector.broadcast %cst_49 : f32 to vector<10x24x128xf32>
    %224 = arith.cmpf ogt, %206, %223 : vector<10x24x128xf32>
    %225 = vector.broadcast %222 : vector<10x24x1xi1> to vector<10x24x128xi1>
    %226 = arith.andi %225, %224 : vector<10x24x128xi1>
    %cst_50 = arith.constant 0.000000e+00 : f32
    %227 = vector.broadcast %cst_50 : f32 to vector<10x24x128xf32>
    %228 = arith.select %226, %206, %227 : vector<10x24x128xi1>, vector<10x24x128xf32>
    %c0_51 = arith.constant 0 : index
    %c0_52 = arith.constant 0 : index
    %c0_53 = arith.constant 0 : index
    %229 = vector.load %arg13[%c0_51, %c0_52, %c0_53] : memref<3x3x128xf32, #tpu.memory_space<vmem>>, vector<3x3x128xf32>
    %230 = vector.extract_strided_slice %228 {offsets = [0, 0, 0], sizes = [8, 24, 128], strides = [1, 1, 1]} : vector<10x24x128xf32> to vector<8x24x128xf32>
    %231 = vector.extract_strided_slice %229 {offsets = [0, 0, 0], sizes = [1, 1, 128], strides = [1, 1, 1]} : vector<3x3x128xf32> to vector<1x1x128xf32>
    %232 = vector.shape_cast %231 : vector<1x1x128xf32> to vector<128xf32>
    %233 = vector.shape_cast %232 : vector<128xf32> to vector<1x1x128xf32>
    %234 = vector.broadcast %233 : vector<1x1x128xf32> to vector<8x24x128xf32>
    %235 = arith.mulf %230, %234 : vector<8x24x128xf32>
    %236 = vector.extract_strided_slice %228 {offsets = [1, 0, 0], sizes = [8, 24, 128], strides = [1, 1, 1]} : vector<10x24x128xf32> to vector<8x24x128xf32>
    %237 = vector.extract_strided_slice %229 {offsets = [1, 0, 0], sizes = [1, 1, 128], strides = [1, 1, 1]} : vector<3x3x128xf32> to vector<1x1x128xf32>
    %238 = vector.shape_cast %237 : vector<1x1x128xf32> to vector<128xf32>
    %239 = vector.shape_cast %238 : vector<128xf32> to vector<1x1x128xf32>
    %240 = vector.broadcast %239 : vector<1x1x128xf32> to vector<8x24x128xf32>
    %241 = arith.mulf %236, %240 : vector<8x24x128xf32>
    %242 = arith.addf %235, %241 : vector<8x24x128xf32>
    %243 = vector.extract_strided_slice %228 {offsets = [2, 0, 0], sizes = [8, 24, 128], strides = [1, 1, 1]} : vector<10x24x128xf32> to vector<8x24x128xf32>
    %244 = vector.extract_strided_slice %229 {offsets = [2, 0, 0], sizes = [1, 1, 128], strides = [1, 1, 1]} : vector<3x3x128xf32> to vector<1x1x128xf32>
    %245 = vector.shape_cast %244 : vector<1x1x128xf32> to vector<128xf32>
    %246 = vector.shape_cast %245 : vector<128xf32> to vector<1x1x128xf32>
    %247 = vector.broadcast %246 : vector<1x1x128xf32> to vector<8x24x128xf32>
    %248 = arith.mulf %243, %247 : vector<8x24x128xf32>
    %249 = arith.addf %242, %248 : vector<8x24x128xf32>
    %250 = vector.extract_strided_slice %228 {offsets = [0, 0, 0], sizes = [8, 24, 128], strides = [1, 1, 1]} : vector<10x24x128xf32> to vector<8x24x128xf32>
    %251 = vector.extract_strided_slice %229 {offsets = [0, 1, 0], sizes = [1, 1, 128], strides = [1, 1, 1]} : vector<3x3x128xf32> to vector<1x1x128xf32>
    %252 = vector.shape_cast %251 : vector<1x1x128xf32> to vector<128xf32>
    %253 = vector.shape_cast %252 : vector<128xf32> to vector<1x1x128xf32>
    %254 = vector.broadcast %253 : vector<1x1x128xf32> to vector<8x24x128xf32>
    %255 = arith.mulf %250, %254 : vector<8x24x128xf32>
    %256 = vector.extract_strided_slice %228 {offsets = [1, 0, 0], sizes = [8, 24, 128], strides = [1, 1, 1]} : vector<10x24x128xf32> to vector<8x24x128xf32>
    %257 = vector.extract_strided_slice %229 {offsets = [1, 1, 0], sizes = [1, 1, 128], strides = [1, 1, 1]} : vector<3x3x128xf32> to vector<1x1x128xf32>
    %258 = vector.shape_cast %257 : vector<1x1x128xf32> to vector<128xf32>
    %259 = vector.shape_cast %258 : vector<128xf32> to vector<1x1x128xf32>
    %260 = vector.broadcast %259 : vector<1x1x128xf32> to vector<8x24x128xf32>
    %261 = arith.mulf %256, %260 : vector<8x24x128xf32>
    %262 = arith.addf %255, %261 : vector<8x24x128xf32>
    %263 = vector.extract_strided_slice %228 {offsets = [2, 0, 0], sizes = [8, 24, 128], strides = [1, 1, 1]} : vector<10x24x128xf32> to vector<8x24x128xf32>
    %264 = vector.extract_strided_slice %229 {offsets = [2, 1, 0], sizes = [1, 1, 128], strides = [1, 1, 1]} : vector<3x3x128xf32> to vector<1x1x128xf32>
    %265 = vector.shape_cast %264 : vector<1x1x128xf32> to vector<128xf32>
    %266 = vector.shape_cast %265 : vector<128xf32> to vector<1x1x128xf32>
    %267 = vector.broadcast %266 : vector<1x1x128xf32> to vector<8x24x128xf32>
    %268 = arith.mulf %263, %267 : vector<8x24x128xf32>
    %269 = arith.addf %262, %268 : vector<8x24x128xf32>
    %270 = vector.extract_strided_slice %228 {offsets = [0, 0, 0], sizes = [8, 24, 128], strides = [1, 1, 1]} : vector<10x24x128xf32> to vector<8x24x128xf32>
    %271 = vector.extract_strided_slice %229 {offsets = [0, 2, 0], sizes = [1, 1, 128], strides = [1, 1, 1]} : vector<3x3x128xf32> to vector<1x1x128xf32>
    %272 = vector.shape_cast %271 : vector<1x1x128xf32> to vector<128xf32>
    %273 = vector.shape_cast %272 : vector<128xf32> to vector<1x1x128xf32>
    %274 = vector.broadcast %273 : vector<1x1x128xf32> to vector<8x24x128xf32>
    %275 = arith.mulf %270, %274 : vector<8x24x128xf32>
    %276 = vector.extract_strided_slice %228 {offsets = [1, 0, 0], sizes = [8, 24, 128], strides = [1, 1, 1]} : vector<10x24x128xf32> to vector<8x24x128xf32>
    %277 = vector.extract_strided_slice %229 {offsets = [1, 2, 0], sizes = [1, 1, 128], strides = [1, 1, 1]} : vector<3x3x128xf32> to vector<1x1x128xf32>
    %278 = vector.shape_cast %277 : vector<1x1x128xf32> to vector<128xf32>
    %279 = vector.shape_cast %278 : vector<128xf32> to vector<1x1x128xf32>
    %280 = vector.broadcast %279 : vector<1x1x128xf32> to vector<8x24x128xf32>
    %281 = arith.mulf %276, %280 : vector<8x24x128xf32>
    %282 = arith.addf %275, %281 : vector<8x24x128xf32>
    %283 = vector.extract_strided_slice %228 {offsets = [2, 0, 0], sizes = [8, 24, 128], strides = [1, 1, 1]} : vector<10x24x128xf32> to vector<8x24x128xf32>
    %284 = vector.extract_strided_slice %229 {offsets = [2, 2, 0], sizes = [1, 1, 128], strides = [1, 1, 1]} : vector<3x3x128xf32> to vector<1x1x128xf32>
    %285 = vector.shape_cast %284 : vector<1x1x128xf32> to vector<128xf32>
    %286 = vector.shape_cast %285 : vector<128xf32> to vector<1x1x128xf32>
    %287 = vector.broadcast %286 : vector<1x1x128xf32> to vector<8x24x128xf32>
    %288 = arith.mulf %283, %287 : vector<8x24x128xf32>
    %289 = arith.addf %282, %288 : vector<8x24x128xf32>
    %290 = vector.extract_strided_slice %249 {offsets = [0, 0, 0], sizes = [8, 16, 128], strides = [1, 1, 1]} : vector<8x24x128xf32> to vector<8x16x128xf32>
    %291 = vector.extract_strided_slice %269 {offsets = [0, 1, 0], sizes = [8, 16, 128], strides = [1, 1, 1]} : vector<8x24x128xf32> to vector<8x16x128xf32>
    %292 = arith.addf %290, %291 : vector<8x16x128xf32>
    %293 = vector.extract_strided_slice %289 {offsets = [0, 2, 0], sizes = [8, 16, 128], strides = [1, 1, 1]} : vector<8x24x128xf32> to vector<8x16x128xf32>
    %294 = arith.addf %292, %293 : vector<8x16x128xf32>
    %c0_54 = arith.constant 0 : index
    %c0_55 = arith.constant 0 : index
    %c0_56 = arith.constant 0 : index
    %295 = vector.load %arg14[%c0_54, %c0_55, %c0_56] : memref<1x1x128xf32, #tpu.memory_space<vmem>>, vector<1x1x128xf32>
    %296 = vector.broadcast %295 : vector<1x1x128xf32> to vector<8x16x128xf32>
    %297 = arith.addf %294, %296 : vector<8x16x128xf32>
    %c0_57 = arith.constant 0 : index
    %c0_58 = arith.constant 0 : index
    %298 = vector.load %arg15[%c0_57, %c0_58] : memref<128x128xbf16, #tpu.memory_space<vmem>>, vector<128x128xbf16>
    %c0_59 = arith.constant 0 : index
    %c0_60 = arith.constant 0 : index
    %c0_61 = arith.constant 0 : index
    %299 = vector.load %arg16[%c0_59, %c0_60, %c0_61] : memref<1x1x128xf32, #tpu.memory_space<vmem>>, vector<1x1x128xf32>
    %300 = vector.shape_cast %297 : vector<8x16x128xf32> to vector<128x128xf32>
    %301 = arith.truncf %300 : vector<128x128xf32> to vector<128x128xbf16>
    %cst_62 = arith.constant dense<0.000000e+00> : vector<128x128xf32>
    %302 = tpu.matmul %301, %298, %cst_62 {dimension_numbers = #tpu.dot_dimension_numbers<[1], [0], [0], [1], [0, 0, 1, 1], [], []>} : vector<128x128xbf16>, vector<128x128xbf16>, vector<128x128xf32> -> vector<128x128xf32>
    %303 = vector.shape_cast %302 : vector<128x128xf32> to vector<8x16x128xf32>
    %304 = vector.broadcast %299 : vector<1x1x128xf32> to vector<8x16x128xf32>
    %305 = arith.addf %303, %304 : vector<8x16x128xf32>
    %306 = arith.index_cast %10 : i32 to index
    %c3 = arith.constant 3 : index
    %c3_63 = arith.constant 3 : index
    %c0_64 = arith.constant 0 : index
    %307 = vector.load %arg18[%306, %c3, %c3_63, %c0_64] : memref<2x14x40x128xf32, #tpu.memory_space<vmem>>, vector<1x8x16x128xf32>
    %308 = vector.shape_cast %307 : vector<1x8x16x128xf32> to vector<8x16x128xf32>
    %c0_65 = arith.constant 0 : index
    %c0_66 = arith.constant 0 : index
    %309 = vector.load %arg3[%c0_65, %c0_66] : memref<128x128xbf16, #tpu.memory_space<vmem>>, vector<128x128xbf16>
    %c0_67 = arith.constant 0 : index
    %c0_68 = arith.constant 0 : index
    %c0_69 = arith.constant 0 : index
    %310 = vector.load %arg4[%c0_67, %c0_68, %c0_69] : memref<1x1x128xf32, #tpu.memory_space<vmem>>, vector<1x1x128xf32>
    %311 = vector.shape_cast %308 : vector<8x16x128xf32> to vector<128x128xf32>
    %312 = arith.truncf %311 : vector<128x128xf32> to vector<128x128xbf16>
    %cst_70 = arith.constant dense<0.000000e+00> : vector<128x128xf32>
    %313 = tpu.matmul %312, %309, %cst_70 {dimension_numbers = #tpu.dot_dimension_numbers<[1], [0], [0], [1], [0, 0, 1, 1], [], []>} : vector<128x128xbf16>, vector<128x128xbf16>, vector<128x128xf32> -> vector<128x128xf32>
    %314 = vector.shape_cast %313 : vector<128x128xf32> to vector<8x16x128xf32>
    %315 = vector.broadcast %310 : vector<1x1x128xf32> to vector<8x16x128xf32>
    %316 = arith.addf %314, %315 : vector<8x16x128xf32>
    %317 = arith.addf %305, %316 : vector<8x16x128xf32>
    %318 = vector.shape_cast %317 : vector<8x16x128xf32> to vector<1x8x16x128xf32>
    %c0_71 = arith.constant 0 : index
    %c0_72 = arith.constant 0 : index
    %c0_73 = arith.constant 0 : index
    %c0_74 = arith.constant 0 : index
    %319 = vector.load %arg17[%c0_71, %c0_72, %c0_73, %c0_74] : memref<1x8x16x128xf32, #tpu.memory_space<vmem>>, vector<1x8x16x128xf32>
    tpu.vector_store %arg17[%c0_71, %c0_72, %c0_73, %c0_74], %318 {strides = array<i32>} : memref<1x8x16x128xf32, #tpu.memory_space<vmem>>, vector<1x8x16x128xf32>,
    return
  }
  func.func @transform_1(%arg0: i32, %arg1: i32) -> (i32, i32) {
    %c0_i32 = arith.constant 0 : i32
    %c0_i32_0 = arith.constant 0 : i32
    %c0_i32_1 = arith.constant 0 : i32
    return %c0_i32, %c0_i32_0 : i32, i32
  }
  func.func @transform_2(%arg0: i32, %arg1: i32) -> (i32, i32, i32) {
    %c0_i32 = arith.constant 0 : i32
    %c0_i32_0 = arith.constant 0 : i32
    %c0_i32_1 = arith.constant 0 : i32
    %c0_i32_2 = arith.constant 0 : i32
    return %c0_i32, %c0_i32_0, %c0_i32_1 : i32, i32, i32
  }
  func.func @transform_3(%arg0: i32, %arg1: i32) -> (i32, i32, i32) {
    %c0_i32 = arith.constant 0 : i32
    %c0_i32_0 = arith.constant 0 : i32
    %c0_i32_1 = arith.constant 0 : i32
    %c0_i32_2 = arith.constant 0 : i32
    return %c0_i32, %c0_i32_0, %c0_i32_1 : i32, i32, i32
  }
  func.func @transform_4(%arg0: i32, %arg1: i32) -> (i32, i32, i32) {
    %c0_i32 = arith.constant 0 : i32
    %c0_i32_0 = arith.constant 0 : i32
    %c0_i32_1 = arith.constant 0 : i32
    %c0_i32_2 = arith.constant 0 : i32
    return %c0_i32, %c0_i32_0, %c0_i32_1 : i32, i32, i32
  }
  func.func @transform_5(%arg0: i32, %arg1: i32) -> (i32, i32) {
    %c0_i32 = arith.constant 0 : i32
    %c0_i32_0 = arith.constant 0 : i32
    %c0_i32_1 = arith.constant 0 : i32
    return %c0_i32, %c0_i32_0 : i32, i32
  }
  func.func @transform_6(%arg0: i32, %arg1: i32) -> (i32, i32, i32) {
    %c0_i32 = arith.constant 0 : i32
    %c0_i32_0 = arith.constant 0 : i32
    %c0_i32_1 = arith.constant 0 : i32
    %c0_i32_2 = arith.constant 0 : i32
    return %c0_i32, %c0_i32_0, %c0_i32_1 : i32, i32, i32
  }
  func.func @transform_7(%arg0: i32, %arg1: i32) -> (i32, i32, i32) {
    %c0_i32 = arith.constant 0 : i32
    %c0_i32_0 = arith.constant 0 : i32
    %c0_i32_1 = arith.constant 0 : i32
    %c0_i32_2 = arith.constant 0 : i32
    return %c0_i32, %c0_i32_0, %c0_i32_1 : i32, i32, i32
  }
  func.func @transform_8(%arg0: i32, %arg1: i32) -> (i32, i32, i32) {
    %c0_i32 = arith.constant 0 : i32
    %c0_i32_0 = arith.constant 0 : i32
    %c0_i32_1 = arith.constant 0 : i32
    %c0_i32_2 = arith.constant 0 : i32
    return %c0_i32, %c0_i32_0, %c0_i32_1 : i32, i32, i32
  }
  func.func @transform_9(%arg0: i32, %arg1: i32) -> (i32, i32) {
    %c0_i32 = arith.constant 0 : i32
    %c0_i32_0 = arith.constant 0 : i32
    %c0_i32_1 = arith.constant 0 : i32
    return %c0_i32, %c0_i32_0 : i32, i32
  }
  func.func @transform_10(%arg0: i32, %arg1: i32) -> (i32, i32, i32) {
    %c0_i32 = arith.constant 0 : i32
    %c0_i32_0 = arith.constant 0 : i32
    %c0_i32_1 = arith.constant 0 : i32
    %c0_i32_2 = arith.constant 0 : i32
    return %c0_i32, %c0_i32_0, %c0_i32_1 : i32, i32, i32
  }
  func.func @transform_11(%arg0: i32, %arg1: i32) -> (i32, i32, i32) {
    %c0_i32 = arith.constant 0 : i32
    %c0_i32_0 = arith.constant 0 : i32
    %c0_i32_1 = arith.constant 0 : i32
    %c0_i32_2 = arith.constant 0 : i32
    return %c0_i32, %c0_i32_0, %c0_i32_1 : i32, i32, i32
  }
  func.func @transform_12(%arg0: i32, %arg1: i32) -> (i32, i32, i32) {
    %c0_i32 = arith.constant 0 : i32
    %c0_i32_0 = arith.constant 0 : i32
    %c0_i32_1 = arith.constant 0 : i32
    %c0_i32_2 = arith.constant 0 : i32
    return %c0_i32, %c0_i32_0, %c0_i32_1 : i32, i32, i32
  }
  func.func @transform_13(%arg0: i32, %arg1: i32) -> (i32, i32) {
    %c0_i32 = arith.constant 0 : i32
    %c0_i32_0 = arith.constant 0 : i32
    %c0_i32_1 = arith.constant 0 : i32
    return %c0_i32, %c0_i32_0 : i32, i32
  }
  func.func @transform_14(%arg0: i32, %arg1: i32) -> (i32, i32, i32) {
    %c0_i32 = arith.constant 0 : i32
    %c0_i32_0 = arith.constant 0 : i32
    %c0_i32_1 = arith.constant 0 : i32
    %c0_i32_2 = arith.constant 0 : i32
    return %c0_i32, %c0_i32_0, %c0_i32_1 : i32, i32, i32
  }
  func.func @transform_15(%arg0: i32, %arg1: i32) -> (i32, i32, i32, i32) {
    %c0_i32 = arith.constant 0 : i32
    %c0_i32_0 = arith.constant 0 : i32
    %c0_i32_1 = arith.constant 0 : i32
    return %arg0, %arg1, %c0_i32, %c0_i32_0 : i32, i32, i32, i32
  }
}

</mosaic_0001>

<llo_original>
// kernel: tpu_custom_call.1
$region0: #{tpu_custom_call.1}
  #allocation0 [shape = 'u32[]', space=smem, size = 0x4, offset = 0x4, fixed_abs, tag = 'smem constant byte address 0x4 - core index']
  #allocation1 [shape = 'u32[144,128]{1,0:T(1,128)}', space=vmem, size = 0x12000, scoped, tag = 'internal scratch']
  #allocation2 [shape = 'f32[2,14,40,128]{3,2,1,0:T(8,128)}', space=vmem, size = 0x8c000, scoped, tag = 'scratch operand']
  #allocation3 [shape = 's32[2]{0}', space=sflag, size = 0x8, scoped, tag = 'scratch operand']
  #allocation16 [shape = 's32[]', space=sflag, size = 0x4, offset = 0, fixed_abs, tag = 'sflag constant byte address 0x0 - dummy sync flag']
  #allocation17 [shape = 's32[]', space=sflag, size = 0x4, offset = 0, fixed_abs, tag = 'sflag constant byte address 0x0 - dummy sync flag']
  #allocation18 [shape = 'u32[]', space=smem, size = 0x4, offset = 0x44, fixed_abs, tag = 'smem constant byte address 0x44 - assertion arg 0']
  #allocation19 [shape = 'u32[]', space=smem, size = 0x4, offset = 0x48, fixed_abs, tag = 'smem constant byte address 0x48 - assertion arg 1']
  #allocation20 [shape = 's32[]', space=sflag, size = 0x4, offset = 0, fixed_abs, tag = 'sflag constant byte address 0x0 - dummy sync flag']
  #allocation21 [shape = 's32[]', space=sflag, size = 0x4, offset = 0, fixed_abs, tag = 'sflag constant byte address 0x0 - dummy sync flag']
  %s0 = inlined_call_operand.hbm [shape: f32[2,22,40,128], index: 0, kind: input, shape index: {}]
  %s1 = inlined_call_operand.hbm [shape: bf16[128,128], index: 1, kind: input, shape index: {}]
  %s2 = inlined_call_operand.vmem [shape: f32[1,1,128], index: 2, kind: input, shape index: {}]
  %s3 = inlined_call_operand.hbm [shape: f32[3,3,128], index: 3, kind: input, shape index: {}]
  %s4 = inlined_call_operand.vmem [shape: f32[1,1,128], index: 4, kind: input, shape index: {}]
  %s5 = inlined_call_operand.hbm [shape: bf16[128,128], index: 5, kind: input, shape index: {}]
  %s6 = inlined_call_operand.hbm [shape: f32[1,1,128], index: 6, kind: input, shape index: {}]
  %s7 = inlined_call_operand.vmem [shape: f32[3,3,128], index: 7, kind: input, shape index: {}]
  %s8 = inlined_call_operand.vmem [shape: f32[1,1,128], index: 8, kind: input, shape index: {}]
  %s9 = inlined_call_operand.hbm [shape: bf16[128,128], index: 9, kind: input, shape index: {}]
  %s10 = inlined_call_operand.vmem [shape: f32[1,1,128], index: 10, kind: input, shape index: {}]
  %s11 = inlined_call_operand.vmem [shape: f32[3,3,128], index: 11, kind: input, shape index: {}]
  %s12 = inlined_call_operand.vmem [shape: f32[1,1,128], index: 12, kind: input, shape index: {}]
  %s13 = inlined_call_operand.hbm [shape: bf16[128,128], index: 13, kind: input, shape index: {}]
  %s14 = inlined_call_operand.vmem [shape: f32[1,1,128], index: 14, kind: input, shape index: {}]
  %s15 = inlined_call_operand.hbm [shape: f32[2,16,16,128], index: 15, kind: output, shape index: {}]
  %s16 = sld [smem:[#allocation0]]
  $region129: #{tpu_custom_call.1} parent=0
    _
  %s18 = ssub.s32 1, %s16
  %s19 = scalar_select 0, %s18, %s16
  $region1: #{tpu_custom_call.1} parent=0
    #allocation4 [shape = 'u8[32768]{0}', space=vmem, size = 0x8000, scoped, tag = 'input window, operand 1, single buffered']
    #allocation5 [shape = 's32[2]{0}', space=sflag, size = 0x8, scoped, tag = 'scoped memory for tpu_custom_call.1']
    #allocation6 [shape = 's32[2]{0}', space=sflag, size = 0x8, scoped, tag = 'scoped memory for tpu_custom_call.1']
    #allocation7 [shape = 'u8[6144]{0}', space=vmem, size = 0x1800, scoped, tag = 'input window, operand 3, single buffered']
    #allocation8 [shape = 's32[1]{0}', space=sflag, size = 0x4, scoped, tag = 'scoped memory for tpu_custom_call.1']
    #allocation9 [shape = 'u8[32768]{0}', space=vmem, size = 0x8000, scoped, tag = 'input window, operand 5, single buffered']
    #allocation10 [shape = 'u8[512]{0}', space=vmem, size = 0x400, scoped, tag = 'input window, operand 6, single buffered']
    #allocation11 [shape = 's32[1]{0}', space=sflag, size = 0x4, scoped, tag = 'scoped memory for tpu_custom_call.1']
    #allocation12 [shape = 'u8[32768]{0}', space=vmem, size = 0x8000, scoped, tag = 'input window, operand 9, single buffered']
    #allocation13 [shape = 'u8[32768]{0}', space=vmem, size = 0x8000, scoped, tag = 'input window, operand 13, single buffered']
    #allocation14 [shape = 's32[1]{0}', space=sflag, size = 0x4, scoped, tag = 'scoped memory for tpu_custom_call.1']
    #allocation15 [shape = 'u8[131072]{0}', space=vmem, size = 0x20000, scoped, tag = 'output window, operand 0']
    %20 = vsyncpa [#allocation5], 0
    %21 = vsyncpa [#allocation8], 0
    %22 = vsyncpa [#allocation11], 0
    %23 = vsyncpa [#allocation14], 0
    %24 = vsyncpa [#allocation6], 0
    %s25 = scalar_lea.sflag [#allocation6], 1
    %26 = vsyncpa %s25, 0
    loop: start=0, step=1, limit=6
    $region2: #{tpu_custom_call.1} parent=1 // loop_pre_header
      _
    $region3: #{tpu_custom_call.1} parent=1 // loop_header
      %s28 = sphi 0, %s32
      %p29 = scmp.ge.s32.totalorder %s28, 6
      %s35 = sphi 0, %s47
      %s36 = sphi 0, %s43
      %s37 = sphi 0, %s35
      %s38 = sphi 0, %s36
      %s39 = sphi 0, %s37
      %s40 = sphi 0, %s38
      %s48 = sphi 0, %s48
      %s50 = sphi 0, %s48
      %s51 = sphi 0, %s50
      %s65 = sphi 0, %s51
      %s69 = sphi 0, %s69
      %s71 = sphi 0, %s69
      %s72 = sphi 0, %s71
      %s86 = sphi 0, %s72
      %s90 = sphi 0, %s90
      %s92 = sphi 0, %s90
      %s93 = sphi 0, %s92
      %s107 = sphi 0, %s93
      %s111 = sphi 0, %s111
      %s113 = sphi 0, %s111
      %s114 = sphi 0, %s113
      %s128 = sphi 0, %s114
      %s132 = sphi 0, %s132
      %s134 = sphi 0, %s132
      %s135 = sphi 0, %s134
      %s149 = sphi 0, %s135
      %s153 = sphi 0, %s153
      %s155 = sphi 0, %s153
      %s156 = sphi 0, %s155
      %s170 = sphi 0, %s156
      %s174 = sphi 0, %s174
      %s176 = sphi 0, %s174
      %s177 = sphi 0, %s176
      %s191 = sphi 0, %s177
      %s195 = sphi 0, %s195
      %s197 = sphi 0, %s195
      %s198 = sphi 0, %s197
      %s212 = sphi 0, %s198
      %s216 = sphi 0, %s216
      %s218 = sphi 0, %s216
      %s219 = sphi 0, %s218
      %s233 = sphi 0, %s219
      %s237 = sphi 0, %s237
      %s239 = sphi 0, %s237
      %s240 = sphi 0, %s239
      %s254 = sphi 0, %s240
      %s258 = sphi 0, %s258
      %s260 = sphi 0, %s258
      %s261 = sphi 0, %s260
      %s275 = sphi 0, %s261
      %s279 = sphi 0, %s279
      %s281 = sphi 0, %s279
      %s282 = sphi 0, %s281
      %s296 = sphi 0, %s282
      %s300 = sphi 0, %s300
      %s302 = sphi 0, %s300
      %s303 = sphi 0, %s302
      %s317 = sphi 0, %s303
      %s321 = sphi 0, %s321
      %s323 = sphi 0, %s321
      %s324 = sphi 0, %s323
      %s338 = sphi 0, %s324
      %s346 = sphi 0, %s348
      %s349 = sphi 0, %s346
      %s350 = sphi 0, %s349
      %s366 = sphi 0, %s350
    $region4: #{tpu_custom_call.1} parent=1 // loop_header_branch
      %31 = sbr.rel (%p29) target = $region8
    $region5: #{tpu_custom_call.1} parent=1 // loop_body
      %s33 = ssub.s32 %s28, 1
      %s34 = ssub.s32 %s28, 2
      %s41 = sadd.s32 1, %s36
      %p42 = scmp.ge.s32.totalorder %s41, 2
      %s43 = scalar_select %p42, 0, %s41
      %s44 = sadd.s32 1, %s35
      %s45 = scalar_select %p42, %s44, %s35
      %p46 = scmp.ge.s32.totalorder %s45, 2
      %s47 = scalar_select %p46, 0, %s45
      %s49 = sadd.s32 %s48, 1
      %p52 = scmp.eq.s32.totalorder %s28, 3
      %p53 = scmp.ne.s32.totalorder %s48, %s50
      %p54 = scmp.eq.s32.totalorder %s28, 0
      %p55 = por %p53, %p54
      %p56 = scmp.ne.s32.totalorder %s48, %s50
      %p57 = scmp.eq.s32.totalorder %s33, 3
      %p58 = por %p56, %p57
      %p59 = scmp.ne.s32.totalorder %s50, %s51
      %p60 = scmp.eq.s32.totalorder %s33, 0
      %p61 = por %p59, %p60
      %p62 = scmp.ne.s32.totalorder %s50, %s51
      %p63 = scmp.eq.s32.totalorder %s34, 3
      %p64 = por %p62, %p63
      %p66 = scmp.ne.s32.totalorder %s51, %s65
      %p67 = scmp.eq.s32.totalorder %s34, 0
      %p68 = por %p66, %p67
      %s70 = sadd.s32 %s69, 1
      %p73 = scmp.eq.s32.totalorder %s28, 3
      %p74 = scmp.ne.s32.totalorder %s69, %s71
      %p75 = scmp.eq.s32.totalorder %s28, 0
      %p76 = por %p74, %p75
      %p77 = scmp.ne.s32.totalorder %s69, %s71
      %p78 = scmp.eq.s32.totalorder %s33, 3
      %p79 = por %p77, %p78
      %p80 = scmp.ne.s32.totalorder %s71, %s72
      %p81 = scmp.eq.s32.totalorder %s33, 0
      %p82 = por %p80, %p81
      %p83 = scmp.ne.s32.totalorder %s71, %s72
      %p84 = scmp.eq.s32.totalorder %s34, 3
      %p85 = por %p83, %p84
      %p87 = scmp.ne.s32.totalorder %s72, %s86
      %p88 = scmp.eq.s32.totalorder %s34, 0
      %p89 = por %p87, %p88
      %s91 = sadd.s32 %s90, 1
      %p94 = scmp.eq.s32.totalorder %s28, 3
      %p95 = scmp.ne.s32.totalorder %s90, %s92
      %p96 = scmp.eq.s32.totalorder %s28, 0
      %p97 = por %p95, %p96
      %p98 = scmp.ne.s32.totalorder %s90, %s92
      %p99 = scmp.eq.s32.totalorder %s33, 3
      %p100 = por %p98, %p99
      %p101 = scmp.ne.s32.totalorder %s92, %s93
      %p102 = scmp.eq.s32.totalorder %s33, 0
      %p103 = por %p101, %p102
      %p104 = scmp.ne.s32.totalorder %s92, %s93
      %p105 = scmp.eq.s32.totalorder %s34, 3
      %p106 = por %p104, %p105
      %p108 = scmp.ne.s32.totalorder %s93, %s107
      %p109 = scmp.eq.s32.totalorder %s34, 0
      %p110 = por %p108, %p109
      %s112 = sadd.s32 %s111, 1
      %p115 = scmp.eq.s32.totalorder %s28, 3
      %p116 = scmp.ne.s32.totalorder %s111, %s113
      %p117 = scmp.eq.s32.totalorder %s28, 0
      %p118 = por %p116, %p117
      %p119 = scmp.ne.s32.totalorder %s111, %s113
      %p120 = scmp.eq.s32.totalorder %s33, 3
      %p121 = por %p119, %p120
      %p122 = scmp.ne.s32.totalorder %s113, %s114
      %p123 = scmp.eq.s32.totalorder %s33, 0
      %p124 = por %p122, %p123
      %p125 = scmp.ne.s32.totalorder %s113, %s114
      %p126 = scmp.eq.s32.totalorder %s34, 3
      %p127 = por %p125, %p126
      %p129 = scmp.ne.s32.totalorder %s114, %s128
      %p130 = scmp.eq.s32.totalorder %s34, 0
      %p131 = por %p129, %p130
      %s133 = sadd.s32 %s132, 1
      %p136 = scmp.eq.s32.totalorder %s28, 3
      %p137 = scmp.ne.s32.totalorder %s132, %s134
      %p138 = scmp.eq.s32.totalorder %s28, 0
      %p139 = por %p137, %p138
      %p140 = scmp.ne.s32.totalorder %s132, %s134
      %p141 = scmp.eq.s32.totalorder %s33, 3
      %p142 = por %p140, %p141
      %p143 = scmp.ne.s32.totalorder %s134, %s135
      %p144 = scmp.eq.s32.totalorder %s33, 0
      %p145 = por %p143, %p144
      %p146 = scmp.ne.s32.totalorder %s134, %s135
      %p147 = scmp.eq.s32.totalorder %s34, 3
      %p148 = por %p146, %p147
      %p150 = scmp.ne.s32.totalorder %s135, %s149
      %p151 = scmp.eq.s32.totalorder %s34, 0
      %p152 = por %p150, %p151
      %s154 = sadd.s32 %s153, 1
      %p157 = scmp.eq.s32.totalorder %s28, 3
      %p158 = scmp.ne.s32.totalorder %s153, %s155
      %p159 = scmp.eq.s32.totalorder %s28, 0
      %p160 = por %p158, %p159
      %p161 = scmp.ne.s32.totalorder %s153, %s155
      %p162 = scmp.eq.s32.totalorder %s33, 3
      %p163 = por %p161, %p162
      %p164 = scmp.ne.s32.totalorder %s155, %s156
      %p165 = scmp.eq.s32.totalorder %s33, 0
      %p166 = por %p164, %p165
      %p167 = scmp.ne.s32.totalorder %s155, %s156
      %p168 = scmp.eq.s32.totalorder %s34, 3
      %p169 = por %p167, %p168
      %p171 = scmp.ne.s32.totalorder %s156, %s170
      %p172 = scmp.eq.s32.totalorder %s34, 0
      %p173 = por %p171, %p172
      %s175 = sadd.s32 %s174, 1
      %p178 = scmp.eq.s32.totalorder %s28, 3
      %p179 = scmp.ne.s32.totalorder %s174, %s176
      %p180 = scmp.eq.s32.totalorder %s28, 0
      %p181 = por %p179, %p180
      %p182 = scmp.ne.s32.totalorder %s174, %s176
      %p183 = scmp.eq.s32.totalorder %s33, 3
      %p184 = por %p182, %p183
      %p185 = scmp.ne.s32.totalorder %s176, %s177
      %p186 = scmp.eq.s32.totalorder %s33, 0
      %p187 = por %p185, %p186
      %p188 = scmp.ne.s32.totalorder %s176, %s177
      %p189 = scmp.eq.s32.totalorder %s34, 3
      %p190 = por %p188, %p189
      %p192 = scmp.ne.s32.totalorder %s177, %s191
      %p193 = scmp.eq.s32.totalorder %s34, 0
      %p194 = por %p192, %p193
      %s196 = sadd.s32 %s195, 1
      %p199 = scmp.eq.s32.totalorder %s28, 3
      %p200 = scmp.ne.s32.totalorder %s195, %s197
      %p201 = scmp.eq.s32.totalorder %s28, 0
      %p202 = por %p200, %p201
      %p203 = scmp.ne.s32.totalorder %s195, %s197
      %p204 = scmp.eq.s32.totalorder %s33, 3
      %p205 = por %p203, %p204
      %p206 = scmp.ne.s32.totalorder %s197, %s198
      %p207 = scmp.eq.s32.totalorder %s33, 0
      %p208 = por %p206, %p207
      %p209 = scmp.ne.s32.totalorder %s197, %s198
      %p210 = scmp.eq.s32.totalorder %s34, 3
      %p211 = por %p209, %p210
      %p213 = scmp.ne.s32.totalorder %s198, %s212
      %p214 = scmp.eq.s32.totalorder %s34, 0
      %p215 = por %p213, %p214
      %s217 = sadd.s32 %s216, 1
      %p220 = scmp.eq.s32.totalorder %s28, 3
      %p221 = scmp.ne.s32.totalorder %s216, %s218
      %p222 = scmp.eq.s32.totalorder %s28, 0
      %p223 = por %p221, %p222
      %p224 = scmp.ne.s32.totalorder %s216, %s218
      %p225 = scmp.eq.s32.totalorder %s33, 3
      %p226 = por %p224, %p225
      %p227 = scmp.ne.s32.totalorder %s218, %s219
      %p228 = scmp.eq.s32.totalorder %s33, 0
      %p229 = por %p227, %p228
      %p230 = scmp.ne.s32.totalorder %s218, %s219
      %p231 = scmp.eq.s32.totalorder %s34, 3
      %p232 = por %p230, %p231
      %p234 = scmp.ne.s32.totalorder %s219, %s233
      %p235 = scmp.eq.s32.totalorder %s34, 0
      %p236 = por %p234, %p235
      %s238 = sadd.s32 %s237, 1
      %p241 = scmp.eq.s32.totalorder %s28, 3
      %p242 = scmp.ne.s32.totalorder %s237, %s239
      %p243 = scmp.eq.s32.totalorder %s28, 0
      %p244 = por %p242, %p243
      %p245 = scmp.ne.s32.totalorder %s237, %s239
      %p246 = scmp.eq.s32.totalorder %s33, 3
      %p247 = por %p245, %p246
      %p248 = scmp.ne.s32.totalorder %s239, %s240
      %p249 = scmp.eq.s32.totalorder %s33, 0
      %p250 = por %p248, %p249
      %p251 = scmp.ne.s32.totalorder %s239, %s240
      %p252 = scmp.eq.s32.totalorder %s34, 3
      %p253 = por %p251, %p252
      %p255 = scmp.ne.s32.totalorder %s240, %s254
      %p256 = scmp.eq.s32.totalorder %s34, 0
      %p257 = por %p255, %p256
      %s259 = sadd.s32 %s258, 1
      %p262 = scmp.eq.s32.totalorder %s28, 3
      %p263 = scmp.ne.s32.totalorder %s258, %s260
      %p264 = scmp.eq.s32.totalorder %s28, 0
      %p265 = por %p263, %p264
      %p266 = scmp.ne.s32.totalorder %s258, %s260
      %p267 = scmp.eq.s32.totalorder %s33, 3
      %p268 = por %p266, %p267
      %p269 = scmp.ne.s32.totalorder %s260, %s261
      %p270 = scmp.eq.s32.totalorder %s33, 0
      %p271 = por %p269, %p270
      %p272 = scmp.ne.s32.totalorder %s260, %s261
      %p273 = scmp.eq.s32.totalorder %s34, 3
      %p274 = por %p272, %p273
      %p276 = scmp.ne.s32.totalorder %s261, %s275
      %p277 = scmp.eq.s32.totalorder %s34, 0
      %p278 = por %p276, %p277
      %s280 = sadd.s32 %s279, 1
      %p283 = scmp.eq.s32.totalorder %s28, 3
      %p284 = scmp.ne.s32.totalorder %s279, %s281
      %p285 = scmp.eq.s32.totalorder %s28, 0
      %p286 = por %p284, %p285
      %p287 = scmp.ne.s32.totalorder %s279, %s281
      %p288 = scmp.eq.s32.totalorder %s33, 3
      %p289 = por %p287, %p288
      %p290 = scmp.ne.s32.totalorder %s281, %s282
      %p291 = scmp.eq.s32.totalorder %s33, 0
      %p292 = por %p290, %p291
      %p293 = scmp.ne.s32.totalorder %s281, %s282
      %p294 = scmp.eq.s32.totalorder %s34, 3
      %p295 = por %p293, %p294
      %p297 = scmp.ne.s32.totalorder %s282, %s296
      %p298 = scmp.eq.s32.totalorder %s34, 0
      %p299 = por %p297, %p298
      %s301 = sadd.s32 %s300, 1
      %p304 = scmp.eq.s32.totalorder %s28, 3
      %p305 = scmp.ne.s32.totalorder %s300, %s302
      %p306 = scmp.eq.s32.totalorder %s28, 0
      %p307 = por %p305, %p306
      %p308 = scmp.ne.s32.totalorder %s300, %s302
      %p309 = scmp.eq.s32.totalorder %s33, 3
      %p310 = por %p308, %p309
      %p311 = scmp.ne.s32.totalorder %s302, %s303
      %p312 = scmp.eq.s32.totalorder %s33, 0
      %p313 = por %p311, %p312
      %p314 = scmp.ne.s32.totalorder %s302, %s303
      %p315 = scmp.eq.s32.totalorder %s34, 3
      %p316 = por %p314, %p315
      %p318 = scmp.ne.s32.totalorder %s303, %s317
      %p319 = scmp.eq.s32.totalorder %s34, 0
      %p320 = por %p318, %p319
      %s322 = sadd.s32 %s321, 1
      %p325 = scmp.eq.s32.totalorder %s28, 3
      %p326 = scmp.ne.s32.totalorder %s321, %s323
      %p327 = scmp.eq.s32.totalorder %s28, 0
      %p328 = por %p326, %p327
      %p329 = scmp.ne.s32.totalorder %s321, %s323
      %p330 = scmp.eq.s32.totalorder %s33, 3
      %p331 = por %p329, %p330
      %p332 = scmp.ne.s32.totalorder %s323, %s324
      %p333 = scmp.eq.s32.totalorder %s33, 0
      %p334 = por %p332, %p333
      %p335 = scmp.ne.s32.totalorder %s323, %s324
      %p336 = scmp.eq.s32.totalorder %s34, 3
      %p337 = por %p335, %p336
      %p339 = scmp.ne.s32.totalorder %s324, %s338
      %p340 = scmp.eq.s32.totalorder %s34, 0
      %p341 = por %p339, %p340
      %s342 = ssub.s32 %s35, %s47
      %s343 = ssub.s32 %s36, %s43
      %s344 = sor.u32 %s342, %s343
      %p345 = scmp.eq.s32.totalorder %s344, 0
      %s347 = sadd.s32 %s346, 1
      %s348 = scalar_select %p345, %s346, %s347
      %p351 = pneg %p345
      %p352 = scmp.eq.s32.totalorder %s28, 3
      %p353 = por %p351, %p352
      %p354 = scmp.ne.s32.totalorder %s346, %s349
      %p355 = scmp.eq.s32.totalorder %s28, 0
      %p356 = por %p354, %p355
      %p357 = scmp.ne.s32.totalorder %s346, %s349
      %p358 = scmp.eq.s32.totalorder %s33, 3
      %p359 = por %p357, %p358
      %p360 = scmp.ne.s32.totalorder %s349, %s350
      %p361 = scmp.eq.s32.totalorder %s33, 0
      %p362 = por %p360, %p361
      %p363 = scmp.ne.s32.totalorder %s349, %s350
      %p364 = scmp.eq.s32.totalorder %s34, 3
      %p365 = por %p363, %p364
      %p367 = scmp.ne.s32.totalorder %s350, %s366
      %p368 = scmp.eq.s32.totalorder %s34, 0
      %p369 = por %p367, %p368
      %p370 = scmp.le.s32.totalorder 1, %s28
      %p371 = scmp.lt.s32.totalorder %s28, 5
      %p372 = pnand %p370, %p371
      %p373 = pneg %p372
      // Predicated region
      $region9: #{tpu_custom_call.1} parent=5 // pred_check
        _
      $region10: #{tpu_custom_call.1} parent=5 // pred_check_branch
        %375 = sbr.rel (%p372) target = $region12
      $region11: #{tpu_custom_call.1} parent=5 // pred_region
        %s376 = ssub.s32 %s28, 1
        // Predicated region
        $region13: #{tpu_custom_call.1} parent=11 // pred_check
          %p377 = pneg %p61
        $region14: #{tpu_custom_call.1} parent=11 // pred_check_branch
          %379 = sbr.rel (%p377) target = $region16
        $region15: #{tpu_custom_call.1} parent=11 // pred_region
          %s381 = ssub.s32 1024, 1024
          %382 = vsyncadd [#allocation5], %s381
          %s383 = sshll.u32 [#allocation4], 4
          %s384 = int_to_ptr.vmem [resolvable:$true] %s383
          %389 = dma.hbm_to_vmem [thread:$0]  %s1, 1024, %s384, [#allocation5], 64, 64, 4
        $region16: #{tpu_custom_call.1} parent=11 // pred_fallthru
          _
        // Predicated region
        $region17: #{tpu_custom_call.1} parent=11 // pred_check
          %p390 = pneg %p82
        $region18: #{tpu_custom_call.1} parent=11 // pred_check_branch
          %392 = sbr.rel (%p390) target = $region20
        $region19: #{tpu_custom_call.1} parent=11 // pred_region
          _
        $region20: #{tpu_custom_call.1} parent=11 // pred_fallthru
          _
        // Predicated region
        $region21: #{tpu_custom_call.1} parent=11 // pred_check
          %p393 = pneg %p103
        $region22: #{tpu_custom_call.1} parent=11 // pred_check_branch
          %395 = sbr.rel (%p393) target = $region24
        $region23: #{tpu_custom_call.1} parent=11 // pred_region
          %s397 = ssub.s32 192, 192
          %398 = vsyncadd [#allocation8], %s397
          %s399 = sshll.u32 [#allocation7], 4
          %s400 = int_to_ptr.vmem [resolvable:$true] %s399
          %405 = dma.hbm_to_vmem [thread:$0]  %s3, 192, %s400, [#allocation8], 64, 64, 4
        $region24: #{tpu_custom_call.1} parent=11 // pred_fallthru
          _
        // Predicated region
        $region25: #{tpu_custom_call.1} parent=11 // pred_check
          %p406 = pneg %p124
        $region26: #{tpu_custom_call.1} parent=11 // pred_check_branch
          %408 = sbr.rel (%p406) target = $region28
        $region27: #{tpu_custom_call.1} parent=11 // pred_region
          _
        $region28: #{tpu_custom_call.1} parent=11 // pred_fallthru
          _
        // Predicated region
        $region29: #{tpu_custom_call.1} parent=11 // pred_check
          %p409 = pneg %p145
        $region30: #{tpu_custom_call.1} parent=11 // pred_check_branch
          %411 = sbr.rel (%p409) target = $region32
        $region31: #{tpu_custom_call.1} parent=11 // pred_region
          %s413 = ssub.s32 1024, 1024
          %414 = vsyncadd [#allocation8], %s413
          %s415 = sshll.u32 [#allocation9], 4
          %s416 = int_to_ptr.vmem [resolvable:$true] %s415
          %421 = dma.hbm_to_vmem [thread:$0]  %s5, 1024, %s416, [#allocation8], 64, 64, 4
        $region32: #{tpu_custom_call.1} parent=11 // pred_fallthru
          _
        // Predicated region
        $region33: #{tpu_custom_call.1} parent=11 // pred_check
          %p422 = pneg %p166
        $region34: #{tpu_custom_call.1} parent=11 // pred_check_branch
          %424 = sbr.rel (%p422) target = $region36
        $region35: #{tpu_custom_call.1} parent=11 // pred_region
          %s426 = ssub.s32 16, 16
          %427 = vsyncadd [#allocation11], %s426
          %s429 = sshll.u32 [#allocation10], 4
          %s430 = int_to_ptr.vmem [resolvable:$true] %s429
          %432 = dma.hbm_to_vmem [thread:$0]  %s6, 16, %s430, [#allocation11]
        $region36: #{tpu_custom_call.1} parent=11 // pred_fallthru
          _
        // Predicated region
        $region37: #{tpu_custom_call.1} parent=11 // pred_check
          %p433 = pneg %p187
        $region38: #{tpu_custom_call.1} parent=11 // pred_check_branch
          %435 = sbr.rel (%p433) target = $region40
        $region39: #{tpu_custom_call.1} parent=11 // pred_region
          _
        $region40: #{tpu_custom_call.1} parent=11 // pred_fallthru
          _
        // Predicated region
        $region41: #{tpu_custom_call.1} parent=11 // pred_check
          %p436 = pneg %p208
        $region42: #{tpu_custom_call.1} parent=11 // pred_check_branch
          %438 = sbr.rel (%p436) target = $region44
        $region43: #{tpu_custom_call.1} parent=11 // pred_region
          _
        $region44: #{tpu_custom_call.1} parent=11 // pred_fallthru
          _
        // Predicated region
        $region45: #{tpu_custom_call.1} parent=11 // pred_check
          %p439 = pneg %p229
        $region46: #{tpu_custom_call.1} parent=11 // pred_check_branch
          %441 = sbr.rel (%p439) target = $region48
        $region47: #{tpu_custom_call.1} parent=11 // pred_region
          %s443 = ssub.s32 1024, 1024
          %444 = vsyncadd [#allocation11], %s443
          %s445 = sshll.u32 [#allocation12], 4
          %s446 = int_to_ptr.vmem [resolvable:$true] %s445
          %451 = dma.hbm_to_vmem [thread:$0]  %s9, 1024, %s446, [#allocation11], 64, 64, 4
        $region48: #{tpu_custom_call.1} parent=11 // pred_fallthru
          _
        // Predicated region
        $region49: #{tpu_custom_call.1} parent=11 // pred_check
          %p452 = pneg %p250
        $region50: #{tpu_custom_call.1} parent=11 // pred_check_branch
          %454 = sbr.rel (%p452) target = $region52
        $region51: #{tpu_custom_call.1} parent=11 // pred_region
          _
        $region52: #{tpu_custom_call.1} parent=11 // pred_fallthru
          _
        // Predicated region
        $region53: #{tpu_custom_call.1} parent=11 // pred_check
          %p455 = pneg %p271
        $region54: #{tpu_custom_call.1} parent=11 // pred_check_branch
          %457 = sbr.rel (%p455) target = $region56
        $region55: #{tpu_custom_call.1} parent=11 // pred_region
          _
        $region56: #{tpu_custom_call.1} parent=11 // pred_fallthru
          _
        // Predicated region
        $region57: #{tpu_custom_call.1} parent=11 // pred_check
          %p458 = pneg %p292
        $region58: #{tpu_custom_call.1} parent=11 // pred_check_branch
          %460 = sbr.rel (%p458) target = $region60
        $region59: #{tpu_custom_call.1} parent=11 // pred_region
          _
        $region60: #{tpu_custom_call.1} parent=11 // pred_fallthru
          _
        // Predicated region
        $region61: #{tpu_custom_call.1} parent=11 // pred_check
          %p461 = pneg %p313
        $region62: #{tpu_custom_call.1} parent=11 // pred_check_branch
          %463 = sbr.rel (%p461) target = $region64
        $region63: #{tpu_custom_call.1} parent=11 // pred_region
          %s465 = ssub.s32 1024, 1024
          %466 = vsyncadd [#allocation14], %s465
          %s467 = sshll.u32 [#allocation13], 4
          %s468 = int_to_ptr.vmem [resolvable:$true] %s467
          %473 = dma.hbm_to_vmem [thread:$0]  %s13, 1024, %s468, [#allocation14], 64, 64, 4
        $region64: #{tpu_custom_call.1} parent=11 // pred_fallthru
          _
        // Predicated region
        $region65: #{tpu_custom_call.1} parent=11 // pred_check
          %p474 = pneg %p334
        $region66: #{tpu_custom_call.1} parent=11 // pred_check_branch
          %476 = sbr.rel (%p474) target = $region68
        $region67: #{tpu_custom_call.1} parent=11 // pred_region
          _
        $region68: #{tpu_custom_call.1} parent=11 // pred_fallthru
          _
      $region12: #{tpu_custom_call.1} parent=5 // pred_fallthru
        _
      %p477 = scmp.lt.s32.totalorder %s28, 4
      // Predicated region
      $region69: #{tpu_custom_call.1} parent=5 // pred_check
        %p478 = pneg %p477
      $region70: #{tpu_custom_call.1} parent=5 // pred_check_branch
        %480 = sbr.rel (%p478) target = $region72
      $region71: #{tpu_custom_call.1} parent=5 // pred_region
        _
      $region72: #{tpu_custom_call.1} parent=5 // pred_fallthru
        _
      %p481 = scmp.le.s32.totalorder 1, %s28
      %p482 = scmp.lt.s32.totalorder %s28, 5
      %p483 = pnand %p481, %p482
      %p484 = pneg %p483
      // Predicated region
      $region73: #{tpu_custom_call.1} parent=5 // pred_check
        _
      $region74: #{tpu_custom_call.1} parent=5 // pred_check_branch
        %486 = sbr.rel (%p483) target = $region76
      $region75: #{tpu_custom_call.1} parent=5 // pred_region
        %s487 = ssub.s32 %s28, 1
        // Predicated region
        $region77: #{tpu_custom_call.1} parent=75 // pred_check
          %p488 = pneg %p61
        $region78: #{tpu_custom_call.1} parent=75 // pred_check_branch
          %490 = sbr.rel (%p488) target = $region80
        $region79: #{tpu_custom_call.1} parent=75 // pred_region
          %491 = dma.done [#allocation5], 1024
        $region80: #{tpu_custom_call.1} parent=75 // pred_fallthru
          _
        // Predicated region
        $region81: #{tpu_custom_call.1} parent=75 // pred_check
          %p492 = pneg %p103
        $region82: #{tpu_custom_call.1} parent=75 // pred_check_branch
          %494 = sbr.rel (%p492) target = $region84
        $region83: #{tpu_custom_call.1} parent=75 // pred_region
          %495 = dma.done [#allocation8], 192
        $region84: #{tpu_custom_call.1} parent=75 // pred_fallthru
          _
        // Predicated region
        $region85: #{tpu_custom_call.1} parent=75 // pred_check
          %p496 = pneg %p145
        $region86: #{tpu_custom_call.1} parent=75 // pred_check_branch
          %498 = sbr.rel (%p496) target = $region88
        $region87: #{tpu_custom_call.1} parent=75 // pred_region
          %499 = dma.done [#allocation8], 1024
        $region88: #{tpu_custom_call.1} parent=75 // pred_fallthru
          _
        // Predicated region
        $region89: #{tpu_custom_call.1} parent=75 // pred_check
          %p500 = pneg %p166
        $region90: #{tpu_custom_call.1} parent=75 // pred_check_branch
          %502 = sbr.rel (%p500) target = $region92
        $region91: #{tpu_custom_call.1} parent=75 // pred_region
          %503 = dma.done [#allocation11], 16
        $region92: #{tpu_custom_call.1} parent=75 // pred_fallthru
          _
        // Predicated region
        $region93: #{tpu_custom_call.1} parent=75 // pred_check
          %p504 = pneg %p229
        $region94: #{tpu_custom_call.1} parent=75 // pred_check_branch
          %506 = sbr.rel (%p504) target = $region96
        $region95: #{tpu_custom_call.1} parent=75 // pred_region
          %507 = dma.done [#allocation11], 1024
        $region96: #{tpu_custom_call.1} parent=75 // pred_fallthru
          _
        // Predicated region
        $region97: #{tpu_custom_call.1} parent=75 // pred_check
          %p508 = pneg %p313
        $region98: #{tpu_custom_call.1} parent=75 // pred_check_branch
          %510 = sbr.rel (%p508) target = $region100
        $region99: #{tpu_custom_call.1} parent=75 // pred_region
          %511 = dma.done [#allocation14], 1024
        $region100: #{tpu_custom_call.1} parent=75 // pred_fallthru
          _
        %p512 = pneg %p61
        %p513 = pneg %p58
        %p514 = pneg %p82
        %p515 = pneg %p79
        %p516 = pneg %p103
        %p517 = pneg %p100
        %p518 = pneg %p124
        %p519 = pneg %p121
        %p520 = pneg %p145
        %p521 = pneg %p142
        %p522 = pneg %p166
        %p523 = pneg %p163
        %p524 = pneg %p187
        %p525 = pneg %p184
        %p526 = pneg %p208
        %p527 = pneg %p205
        %p528 = pneg %p229
        %p529 = pneg %p226
        %p530 = pneg %p250
        %p531 = pneg %p247
        %p532 = pneg %p271
        %p533 = pneg %p268
        %p534 = pneg %p292
        %p535 = pneg %p289
        %p536 = pneg %p313
        %p537 = pneg %p310
        %p538 = pneg %p334
        %p539 = pneg %p331
        %p540 = pneg %p362
        %p541 = pneg %p359
        %s542 = sand.u32 %s349, 1
        %s543 = scalar_lea.sflag [#allocation6], %s542
        %s544 = sand.u32 %s349, 1
        %s545 = smul.addr %s544, 128
        %s546 = scalar_lea.vmem [#allocation15], %s545
        %s547 = smul.u32 8, %s38
        %s549 = smul.u32 %s38, 8
        %p550 = scmp.lt.s32.totalorder %s38, 0
        %s551 = ssub.s32 0, %s38
        %s552 = scalar_select %p550, %s551, %s38
        %s553 = sand.u32 %s552, 1
        %s554 = ssub.s32 0, %s553
        %s555 = scalar_select %p550, %s554, %s553
        %p556 = scmp.ne.s32.totalorder %s555, 0
        %p557 = scmp.lt.s32.totalorder %s555, 0
        %p558 = pnand %p557, %p556
        %p559 = pneg %p558
        %s560 = sadd.s32 %s555, 2
        %s561 = scalar_select %p559, %s560, %s555
        %p562 = scmp.eq.s32.totalorder %s38, 0
        // Predicated region
        $region101: #{tpu_custom_call.1} parent=75 // pred_check
          %p563 = pneg %p562
        $region102: #{tpu_custom_call.1} parent=75 // pred_check_branch
          %565 = sbr.rel (%p563) target = $region104
        $region103: #{tpu_custom_call.1} parent=75 // pred_region
          %s566 = smul.u32 %s549, 40
          %s567 = smul.u32 %s37, 880
          %s568 = sadd.s32 %s566, %s567
          %s569 = smul.addr %s568, 16
          %s570 = scalar_lea.hbm %s0, %s569
          %s571 = smul.u32 %s561, 560
          %s572 = scalar_lea.vmem [#allocation2], %s571
          %s573 = scalar_lea.sflag [#allocation3], %s561
          // Predicated region
          $region105: #{tpu_custom_call.1} parent=103 // pred_check
            _
          $region106: #{tpu_custom_call.1} parent=103 // pred_check_branch
            %575 = sbr.rel target = $region108
          $region107: #{tpu_custom_call.1} parent=103 // pred_region
            %576 = sst [smem:[#allocation18]] [#allocation17]
            %577 = sst [smem:[#allocation19]] [#allocation16]
          $region108: #{tpu_custom_call.1} parent=103 // pred_fallthru
            _
          %579 = shalt.err (0)
          %s581 = sshll.u32 %s572, 4
          %s582 = int_to_ptr.vmem [resolvable:$true] %s581
          %584 = dma.hbm_to_vmem [thread:$0]  %s570, 8960, %s582, %s573
        $region104: #{tpu_custom_call.1} parent=75 // pred_fallthru
          _
        %s585 = sadd.s32 %s38, 1
        %p586 = scmp.lt.s32.totalorder %s585, 2
        // Predicated region
        $region109: #{tpu_custom_call.1} parent=75 // pred_check
          %p587 = pneg %p586
        $region110: #{tpu_custom_call.1} parent=75 // pred_check_branch
          %589 = sbr.rel (%p587) target = $region112
        $region111: #{tpu_custom_call.1} parent=75 // pred_region
          %s590 = ssub.s32 1, %s561
          %s591 = smul.u32 %s585, 8
          %s592 = smul.u32 %s591, 40
          %s593 = smul.u32 %s37, 880
          %s594 = sadd.s32 %s592, %s593
          %s595 = smul.addr %s594, 16
          %s596 = scalar_lea.hbm %s0, %s595
          %s597 = smul.u32 %s590, 560
          %s598 = scalar_lea.vmem [#allocation2], %s597
          %s599 = scalar_lea.sflag [#allocation3], %s590
          // Predicated region
          $region113: #{tpu_custom_call.1} parent=111 // pred_check
            _
          $region114: #{tpu_custom_call.1} parent=111 // pred_check_branch
            %601 = sbr.rel target = $region116
          $region115: #{tpu_custom_call.1} parent=111 // pred_region
            %602 = sst [smem:[#allocation18]] [#allocation21]
            %603 = sst [smem:[#allocation19]] [#allocation20]
          $region116: #{tpu_custom_call.1} parent=111 // pred_fallthru
            _
          %605 = shalt.err (0)
          %s607 = sshll.u32 %s598, 4
          %s608 = int_to_ptr.vmem [resolvable:$true] %s607
          %610 = dma.hbm_to_vmem [thread:$0]  %s596, 8960, %s608, %s599
        $region112: #{tpu_custom_call.1} parent=75 // pred_fallthru
          _
        %s611 = smul.u32 %s561, 560
        %s612 = scalar_lea.vmem [#allocation2], %s611
        %s613 = scalar_lea.sflag [#allocation3], %s561
        %s614 = smul.u32 14, 40
        %s615 = smul.u32 %s614, 1
        %s616 = sshll.u32 %s615, 4
        %617 = dma.done %s613, %s616
        %v618 = vld [vmem:[%s612] sm:$0xff]
        %v619 = vld [vmem:[%s612 + $0x8] sm:$0xff]
        %v620 = vld [vmem:[%s612 + $0x10] sm:$0xff]
        %v621 = vld [vmem:[%s612 + $0x18] sm:$0xff]
        %v622 = vld [vmem:[%s612 + $0x20] sm:$0xff]
        %v623 = vld [vmem:[%s612 + $0x28] sm:$0xff]
        %v624 = vld [vmem:[%s612 + $0x30] sm:$0xff]
        %v625 = vld [vmem:[%s612 + $0x38] sm:$0xff]
        %v626 = vld [vmem:[%s612 + $0x40] sm:$0xff]
        %v627 = vld [vmem:[%s612 + $0x48] sm:$0xff]
        %v628 = vld [vmem:[%s612 + $0x50] sm:$0xff]
        %v629 = vld [vmem:[%s612 + $0x58] sm:$0xff]
        %v630 = vld [vmem:[%s612 + $0x60] sm:$0xff]
        %v631 = vld [vmem:[%s612 + $0x68] sm:$0xff]
        %v632 = vld [vmem:[%s612 + $0x70] sm:$0xff]
        %v633 = vld [vmem:[%s612 + $0x78] sm:$0xff]
        %v634 = vld [vmem:[%s612 + $0x80] sm:$0xff]
        %v635 = vld [vmem:[%s612 + $0x88] sm:$0xff]
        %v636 = vld [vmem:[%s612 + $0x90] sm:$0xff]
        %v637 = vld [vmem:[%s612 + $0x98] sm:$0xff]
        %v638 = vld [vmem:[%s612 + $0xa0] sm:$0xff]
        %v639 = vld [vmem:[%s612 + $0xa8] sm:$0xff]
        %v640 = vld [vmem:[%s612 + $0xb0] sm:$0xff]
        %v641 = vld [vmem:[%s612 + $0xb8] sm:$0xff]
        %v642 = vld [vmem:[%s612 + $0xc0] sm:$0xff]
        %v643 = vld [vmem:[%s612 + $0xc8] sm:$0xff]
        %v644 = vld [vmem:[%s612 + $0xd0] sm:$0xff]
        %v645 = vld [vmem:[%s612 + $0xd8] sm:$0xff]
        %v646 = vld [vmem:[%s612 + $0xe0] sm:$0xff]
        %v647 = vld [vmem:[%s612 + $0xe8] sm:$0xff]
        %v648 = vld [vmem:[%s612 + $0xf0] sm:$0xff]
        %v649 = vld [vmem:[%s612 + $0xf8] sm:$0xff]
        %v650 = vld [vmem:[%s612 + $0x100] sm:$0xff]
        %v651 = vld [vmem:[%s612 + $0x108] sm:$0xff]
        %v652 = vld [vmem:[%s612 + $0x110] sm:$0xff]
        %v653 = vld [vmem:[%s612 + $0x118] sm:$0xff]
        %v654 = vld [vmem:[%s612 + $0x120] sm:$0xff]
        %v655 = vld [vmem:[%s612 + $0x128] sm:$0xff]
        %v656 = vld [vmem:[%s612 + $0x130] sm:$0xff]
        %v657 = vld [vmem:[%s612 + $0x138] sm:$0xff]
        %v658 = vld [vmem:[%s612 + $0x140] sm:$0xff]
        %v659 = vld [vmem:[%s612 + $0x148] sm:$0xff]
        %v660 = vld [vmem:[%s612 + $0x150] sm:$0xff]
        %v661 = vld [vmem:[%s612 + $0x158] sm:$0xff]
        %v662 = vld [vmem:[%s612 + $0x160] sm:$0xff]
        %v663 = vld [vmem:[%s612 + $0x168] sm:$0xff]
        %v664 = vld [vmem:[%s612 + $0x170] sm:$0xff]
        %v665 = vld [vmem:[%s612 + $0x178] sm:$0xff]
        %v666 = vld [vmem:[%s612 + $0x180] sm:$0xff]
        %v667 = vld [vmem:[%s612 + $0x188] sm:$0xff]
        %v668 = vld [vmem:[%s612 + $0x190] sm:$0xff]
        %v669 = vld [vmem:[%s612 + $0x198] sm:$0xff]
        %v670 = vld [vmem:[%s612 + $0x1a0] sm:$0xff]
        %v671 = vld [vmem:[%s612 + $0x1a8] sm:$0xff]
        %v672 = vld [vmem:[%s612 + $0x1b0] sm:$0xff]
        %v673 = vld [vmem:[%s612 + $0x1b8] sm:$0xff]
        %v674 = vld [vmem:[%s612 + $0x1c0] sm:$0xff]
        %v675 = vld [vmem:[%s612 + $0x1c8] sm:$0xff]
        %v676 = vld [vmem:[%s612 + $0x1d0] sm:$0xff]
        %v677 = vld [vmem:[%s612 + $0x1d8] sm:$0xff]
        %v678 = vld [vmem:[%s612 + $0x1e0] sm:$0xff]
        %v679 = vld [vmem:[%s612 + $0x1e8] sm:$0xff]
        %v680 = vld [vmem:[%s612 + $0x1f0] sm:$0xff]
        %v681 = vld [vmem:[%s612 + $0x1f8] sm:$0xff]
        %v682 = vld [vmem:[%s612 + $0x200] sm:$0xff]
        %v683 = vld [vmem:[%s612 + $0x208] sm:$0xff]
        %v684 = vld [vmem:[%s612 + $0x210] sm:$0xff]
        %v685 = vld [vmem:[%s612 + $0x218] sm:$0xff]
        %v686 = vld [vmem:[%s612 + $0x220] sm:$0xff]
        %v687 = vld [vmem:[%s612 + $0x228] sm:$0xff]
        %v688 = vmax.f32 %v618, 0.0
        %v689 = vmax.f32 %v619, 0.0
        %v690 = vmax.f32 %v620, 0.0
        %v691 = vmax.f32 %v621, 0.0
        %v692 = vmax.f32 %v622, 0.0
        %v693 = vmax.f32 %v623, 0.0
        %v694 = vmax.f32 %v624, 0.0
        %v695 = vmax.f32 %v625, 0.0
        %v696 = vmax.f32 %v626, 0.0
        %v697 = vmax.f32 %v627, 0.0
        %v698 = vmax.f32 %v628, 0.0
        %v699 = vmax.f32 %v629, 0.0
        %v700 = vmax.f32 %v630, 0.0
        %v701 = vmax.f32 %v631, 0.0
        %v702 = vmax.f32 %v632, 0.0
        %v703 = vmax.f32 %v633, 0.0
        %v704 = vmax.f32 %v634, 0.0
        %v705 = vmax.f32 %v635, 0.0
        %v706 = vmax.f32 %v636, 0.0
        %v707 = vmax.f32 %v637, 0.0
        %v708 = vmax.f32 %v638, 0.0
        %v709 = vmax.f32 %v639, 0.0
        %v710 = vmax.f32 %v640, 0.0
        %v711 = vmax.f32 %v641, 0.0
        %v712 = vmax.f32 %v642, 0.0
        %v713 = vmax.f32 %v643, 0.0
        %v714 = vmax.f32 %v644, 0.0
        %v715 = vmax.f32 %v645, 0.0
        %v716 = vmax.f32 %v646, 0.0
        %v717 = vmax.f32 %v647, 0.0
        %v718 = vmax.f32 %v648, 0.0
        %v719 = vmax.f32 %v649, 0.0
        %v720 = vmax.f32 %v650, 0.0
        %v721 = vmax.f32 %v651, 0.0
        %v722 = vmax.f32 %v652, 0.0
        %v723 = vmax.f32 %v653, 0.0
        %v724 = vmax.f32 %v654, 0.0
        %v725 = vmax.f32 %v655, 0.0
        %v726 = vmax.f32 %v656, 0.0
        %v727 = vmax.f32 %v657, 0.0
        %v728 = vmax.f32 %v658, 0.0
        %v729 = vmax.f32 %v659, 0.0
        %v730 = vmax.f32 %v660, 0.0
        %v731 = vmax.f32 %v661, 0.0
        %v732 = vmax.f32 %v662, 0.0
        %v733 = vmax.f32 %v663, 0.0
        %v734 = vmax.f32 %v664, 0.0
        %v735 = vmax.f32 %v665, 0.0
        %v736 = vmax.f32 %v666, 0.0
        %v737 = vmax.f32 %v667, 0.0
        %v738 = vmax.f32 %v668, 0.0
        %v739 = vmax.f32 %v669, 0.0
        %v740 = vmax.f32 %v670, 0.0
        %v741 = vmax.f32 %v671, 0.0
        %v742 = vmax.f32 %v672, 0.0
        %v743 = vmax.f32 %v673, 0.0
        %v744 = vmax.f32 %v674, 0.0
        %v745 = vmax.f32 %v675, 0.0
        %v746 = vmax.f32 %v676, 0.0
        %v747 = vmax.f32 %v677, 0.0
        %v748 = vmax.f32 %v678, 0.0
        %v749 = vmax.f32 %v679, 0.0
        %v750 = vmax.f32 %v680, 0.0
        %v751 = vmax.f32 %v681, 0.0
        %v752 = vmax.f32 %v682, 0.0
        %v753 = vmax.f32 %v683, 0.0
        %v754 = vmax.f32 %v684, 0.0
        %v755 = vmax.f32 %v685, 0.0
        %v756 = vmax.f32 %v686, 0.0
        %v757 = vmax.f32 %v687, 0.0
        %v758 = vld [vmem:[#allocation7] sm:$0x7]
        %v759 = vld [vmem:[#allocation7 + $0x4] sm:$0x7]
        %v760 = vld [vmem:[#allocation7 + $0x8] sm:$0x7]
        %v761 = vlaneseq
        %v762 = vshrl.u32 %v761, 7
        %v763 = vsub.s32 0, %v762
        %v764 = vrot.slane %v758, %v763
        %v765 = vmul.f32 %v688, %v764
        %v766 = vmul.f32 %v689, %v764
        %v767 = vmul.f32 %v690, %v764
        %v768 = vmul.f32 %v691, %v764
        %v769 = vmul.f32 %v693, %v764
        %v770 = vmul.f32 %v694, %v764
        %v771 = vmul.f32 %v695, %v764
        %v772 = vmul.f32 %v696, %v764
        %v773 = vmul.f32 %v698, %v764
        %v774 = vmul.f32 %v699, %v764
        %v775 = vmul.f32 %v700, %v764
        %v776 = vmul.f32 %v701, %v764
        %v777 = vmul.f32 %v703, %v764
        %v778 = vmul.f32 %v704, %v764
        %v779 = vmul.f32 %v705, %v764
        %v780 = vmul.f32 %v706, %v764
        %v781 = vmul.f32 %v708, %v764
        %v782 = vmul.f32 %v709, %v764
        %v783 = vmul.f32 %v710, %v764
        %v784 = vmul.f32 %v711, %v764
        %v785 = vmul.f32 %v713, %v764
        %v786 = vmul.f32 %v714, %v764
        %v787 = vmul.f32 %v715, %v764
        %v788 = vmul.f32 %v716, %v764
        %v789 = vmul.f32 %v718, %v764
        %v790 = vmul.f32 %v719, %v764
        %v791 = vmul.f32 %v720, %v764
        %v792 = vmul.f32 %v721, %v764
        %v793 = vmul.f32 %v723, %v764
        %v794 = vmul.f32 %v724, %v764
        %v795 = vmul.f32 %v725, %v764
        %v796 = vmul.f32 %v726, %v764
        %v797 = vmul.f32 %v728, %v764
        %v798 = vmul.f32 %v729, %v764
        %v799 = vmul.f32 %v730, %v764
        %v800 = vmul.f32 %v731, %v764
        %v801 = vmul.f32 %v733, %v764
        %v802 = vmul.f32 %v734, %v764
        %v803 = vmul.f32 %v735, %v764
        %v804 = vmul.f32 %v736, %v764
        %v805 = vmul.f32 %v738, %v764
        %v806 = vmul.f32 %v739, %v764
        %v807 = vmul.f32 %v740, %v764
        %v808 = vmul.f32 %v741, %v764
        %v809 = vmul.f32 %v743, %v764
        %v810 = vmul.f32 %v744, %v764
        %v811 = vmul.f32 %v745, %v764
        %v812 = vmul.f32 %v746, %v764
        %v813 = vlaneseq
        %v814 = vshrl.u32 %v813, 7
        %v815 = vsub.s32 0, %v814
        %v816 = vrot.slane %v759, %v815
        %v817 = vmul.f32 %v693, %v816
        %v818 = vmul.f32 %v694, %v816
        %v819 = vmul.f32 %v695, %v816
        %v820 = vmul.f32 %v696, %v816
        %v821 = vmul.f32 %v698, %v816
        %v822 = vmul.f32 %v699, %v816
        %v823 = vmul.f32 %v700, %v816
        %v824 = vmul.f32 %v701, %v816
        %v825 = vmul.f32 %v703, %v816
        %v826 = vmul.f32 %v704, %v816
        %v827 = vmul.f32 %v705, %v816
        %v828 = vmul.f32 %v706, %v816
        %v829 = vmul.f32 %v708, %v816
        %v830 = vmul.f32 %v709, %v816
        %v831 = vmul.f32 %v710, %v816
        %v832 = vmul.f32 %v711, %v816
        %v833 = vmul.f32 %v713, %v816
        %v834 = vmul.f32 %v714, %v816
        %v835 = vmul.f32 %v715, %v816
        %v836 = vmul.f32 %v716, %v816
        %v837 = vmul.f32 %v718, %v816
        %v838 = vmul.f32 %v719, %v816
        %v839 = vmul.f32 %v720, %v816
        %v840 = vmul.f32 %v721, %v816
        %v841 = vmul.f32 %v723, %v816
        %v842 = vmul.f32 %v724, %v816
        %v843 = vmul.f32 %v725, %v816
        %v844 = vmul.f32 %v726, %v816
        %v845 = vmul.f32 %v728, %v816
        %v846 = vmul.f32 %v729, %v816
        %v847 = vmul.f32 %v730, %v816
        %v848 = vmul.f32 %v731, %v816
        %v849 = vmul.f32 %v733, %v816
        %v850 = vmul.f32 %v734, %v816
        %v851 = vmul.f32 %v735, %v816
        %v852 = vmul.f32 %v736, %v816
        %v853 = vmul.f32 %v738, %v816
        %v854 = vmul.f32 %v739, %v816
        %v855 = vmul.f32 %v740, %v816
        %v856 = vmul.f32 %v741, %v816
        %v857 = vmul.f32 %v743, %v816
        %v858 = vmul.f32 %v744, %v816
        %v859 = vmul.f32 %v745, %v816
        %v860 = vmul.f32 %v746, %v816
        %v861 = vmul.f32 %v748, %v816
        %v862 = vmul.f32 %v749, %v816
        %v863 = vmul.f32 %v750, %v816
        %v864 = vmul.f32 %v751, %v816
        %v865 = vadd.f32 %v765, %v817
        %v866 = vadd.f32 %v766, %v818
        %v867 = vadd.f32 %v767, %v819
        %v868 = vadd.f32 %v768, %v820
        %v869 = vadd.f32 %v769, %v821
        %v870 = vadd.f32 %v770, %v822
        %v871 = vadd.f32 %v771, %v823
        %v872 = vadd.f32 %v772, %v824
        %v873 = vadd.f32 %v773, %v825
        %v874 = vadd.f32 %v774, %v826
        %v875 = vadd.f32 %v775, %v827
        %v876 = vadd.f32 %v776, %v828
        %v877 = vadd.f32 %v777, %v829
        %v878 = vadd.f32 %v778, %v830
        %v879 = vadd.f32 %v779, %v831
        %v880 = vadd.f32 %v780, %v832
        %v881 = vadd.f32 %v781, %v833
        %v882 = vadd.f32 %v782, %v834
        %v883 = vadd.f32 %v783, %v835
        %v884 = vadd.f32 %v784, %v836
        %v885 = vadd.f32 %v785, %v837
        %v886 = vadd.f32 %v786, %v838
        %v887 = vadd.f32 %v787, %v839
        %v888 = vadd.f32 %v788, %v840
        %v889 = vadd.f32 %v789, %v841
        %v890 = vadd.f32 %v790, %v842
        %v891 = vadd.f32 %v791, %v843
        %v892 = vadd.f32 %v792, %v844
        %v893 = vadd.f32 %v793, %v845
        %v894 = vadd.f32 %v794, %v846
        %v895 = vadd.f32 %v795, %v847
        %v896 = vadd.f32 %v796, %v848
        %v897 = vadd.f32 %v797, %v849
        %v898 = vadd.f32 %v798, %v850
        %v899 = vadd.f32 %v799, %v851
        %v900 = vadd.f32 %v800, %v852
        %v901 = vadd.f32 %v801, %v853
        %v902 = vadd.f32 %v802, %v854
        %v903 = vadd.f32 %v803, %v855
        %v904 = vadd.f32 %v804, %v856
        %v905 = vadd.f32 %v805, %v857
        %v906 = vadd.f32 %v806, %v858
        %v907 = vadd.f32 %v807, %v859
        %v908 = vadd.f32 %v808, %v860
        %v909 = vadd.f32 %v809, %v861
        %v910 = vadd.f32 %v810, %v862
        %v911 = vadd.f32 %v811, %v863
        %v912 = vadd.f32 %v812, %v864
        %v913 = vlaneseq
        %v914 = vshrl.u32 %v913, 7
        %v915 = vsub.s32 0, %v914
        %v916 = vrot.slane %v760, %v915
        %v917 = vmul.f32 %v698, %v916
        %v918 = vmul.f32 %v699, %v916
        %v919 = vmul.f32 %v700, %v916
        %v920 = vmul.f32 %v701, %v916
        %v921 = vmul.f32 %v703, %v916
        %v922 = vmul.f32 %v704, %v916
        %v923 = vmul.f32 %v705, %v916
        %v924 = vmul.f32 %v706, %v916
        %v925 = vmul.f32 %v708, %v916
        %v926 = vmul.f32 %v709, %v916
        %v927 = vmul.f32 %v710, %v916
        %v928 = vmul.f32 %v711, %v916
        %v929 = vmul.f32 %v713, %v916
        %v930 = vmul.f32 %v714, %v916
        %v931 = vmul.f32 %v715, %v916
        %v932 = vmul.f32 %v716, %v916
        %v933 = vmul.f32 %v718, %v916
        %v934 = vmul.f32 %v719, %v916
        %v935 = vmul.f32 %v720, %v916
        %v936 = vmul.f32 %v721, %v916
        %v937 = vmul.f32 %v723, %v916
        %v938 = vmul.f32 %v724, %v916
        %v939 = vmul.f32 %v725, %v916
        %v940 = vmul.f32 %v726, %v916
        %v941 = vmul.f32 %v728, %v916
        %v942 = vmul.f32 %v729, %v916
        %v943 = vmul.f32 %v730, %v916
        %v944 = vmul.f32 %v731, %v916
        %v945 = vmul.f32 %v733, %v916
        %v946 = vmul.f32 %v734, %v916
        %v947 = vmul.f32 %v735, %v916
        %v948 = vmul.f32 %v736, %v916
        %v949 = vmul.f32 %v738, %v916
        %v950 = vmul.f32 %v739, %v916
        %v951 = vmul.f32 %v740, %v916
        %v952 = vmul.f32 %v741, %v916
        %v953 = vmul.f32 %v743, %v916
        %v954 = vmul.f32 %v744, %v916
        %v955 = vmul.f32 %v745, %v916
        %v956 = vmul.f32 %v746, %v916
        %v957 = vmul.f32 %v748, %v916
        %v958 = vmul.f32 %v749, %v916
        %v959 = vmul.f32 %v750, %v916
        %v960 = vmul.f32 %v751, %v916
        %v961 = vmul.f32 %v753, %v916
        %v962 = vmul.f32 %v754, %v916
        %v963 = vmul.f32 %v755, %v916
        %v964 = vmul.f32 %v756, %v916
        %v965 = vadd.f32 %v865, %v917
        %v966 = vadd.f32 %v866, %v918
        %v967 = vadd.f32 %v867, %v919
        %v968 = vadd.f32 %v868, %v920
        %v969 = vadd.f32 %v869, %v921
        %v970 = vadd.f32 %v870, %v922
        %v971 = vadd.f32 %v871, %v923
        %v972 = vadd.f32 %v872, %v924
        %v973 = vadd.f32 %v873, %v925
        %v974 = vadd.f32 %v874, %v926
        %v975 = vadd.f32 %v875, %v927
        %v976 = vadd.f32 %v876, %v928
        %v977 = vadd.f32 %v877, %v929
        %v978 = vadd.f32 %v878, %v930
        %v979 = vadd.f32 %v879, %v931
        %v980 = vadd.f32 %v880, %v932
        %v981 = vadd.f32 %v881, %v933
        %v982 = vadd.f32 %v882, %v934
        %v983 = vadd.f32 %v883, %v935
        %v984 = vadd.f32 %v884, %v936
        %v985 = vadd.f32 %v885, %v937
        %v986 = vadd.f32 %v886, %v938
        %v987 = vadd.f32 %v887, %v939
        %v988 = vadd.f32 %v888, %v940
        %v989 = vadd.f32 %v889, %v941
        %v990 = vadd.f32 %v890, %v942
        %v991 = vadd.f32 %v891, %v943
        %v992 = vadd.f32 %v892, %v944
        %v993 = vadd.f32 %v893, %v945
        %v994 = vadd.f32 %v894, %v946
        %v995 = vadd.f32 %v895, %v947
        %v996 = vadd.f32 %v896, %v948
        %v997 = vadd.f32 %v897, %v949
        %v998 = vadd.f32 %v898, %v950
        %v999 = vadd.f32 %v899, %v951
        %v1000 = vadd.f32 %v900, %v952
        %v1001 = vadd.f32 %v901, %v953
        %v1002 = vadd.f32 %v902, %v954
        %v1003 = vadd.f32 %v903, %v955
        %v1004 = vadd.f32 %v904, %v956
        %v1005 = vadd.f32 %v905, %v957
        %v1006 = vadd.f32 %v906, %v958
        %v1007 = vadd.f32 %v907, %v959
        %v1008 = vadd.f32 %v908, %v960
        %v1009 = vadd.f32 %v909, %v961
        %v1010 = vadd.f32 %v910, %v962
        %v1011 = vadd.f32 %v911, %v963
        %v1012 = vadd.f32 %v912, %v964
        %v1013 = vlaneseq
        %v1014 = vshrl.u32 %v1013, 7
        %v1015 = vsub.s32 1, %v1014
        %v1016 = vrot.slane %v758, %v1015
        %v1017 = vmul.f32 %v688, %v1016
        %v1018 = vmul.f32 %v689, %v1016
        %v1019 = vmul.f32 %v690, %v1016
        %v1020 = vmul.f32 %v691, %v1016
        %v1021 = vmul.f32 %v692, %v1016
        %v1022 = vmul.f32 %v693, %v1016
        %v1023 = vmul.f32 %v694, %v1016
        %v1024 = vmul.f32 %v695, %v1016
        %v1025 = vmul.f32 %v696, %v1016
        %v1026 = vmul.f32 %v697, %v1016
        %v1027 = vmul.f32 %v698, %v1016
        %v1028 = vmul.f32 %v699, %v1016
        %v1029 = vmul.f32 %v700, %v1016
        %v1030 = vmul.f32 %v701, %v1016
        %v1031 = vmul.f32 %v702, %v1016
        %v1032 = vmul.f32 %v703, %v1016
        %v1033 = vmul.f32 %v704, %v1016
        %v1034 = vmul.f32 %v705, %v1016
        %v1035 = vmul.f32 %v706, %v1016
        %v1036 = vmul.f32 %v707, %v1016
        %v1037 = vmul.f32 %v708, %v1016
        %v1038 = vmul.f32 %v709, %v1016
        %v1039 = vmul.f32 %v710, %v1016
        %v1040 = vmul.f32 %v711, %v1016
        %v1041 = vmul.f32 %v712, %v1016
        %v1042 = vmul.f32 %v713, %v1016
        %v1043 = vmul.f32 %v714, %v1016
        %v1044 = vmul.f32 %v715, %v1016
        %v1045 = vmul.f32 %v716, %v1016
        %v1046 = vmul.f32 %v717, %v1016
        %v1047 = vmul.f32 %v718, %v1016
        %v1048 = vmul.f32 %v719, %v1016
        %v1049 = vmul.f32 %v720, %v1016
        %v1050 = vmul.f32 %v721, %v1016
        %v1051 = vmul.f32 %v722, %v1016
        %v1052 = vmul.f32 %v723, %v1016
        %v1053 = vmul.f32 %v724, %v1016
        %v1054 = vmul.f32 %v725, %v1016
        %v1055 = vmul.f32 %v726, %v1016
        %v1056 = vmul.f32 %v727, %v1016
        %v1057 = vmul.f32 %v728, %v1016
        %v1058 = vmul.f32 %v729, %v1016
        %v1059 = vmul.f32 %v730, %v1016
        %v1060 = vmul.f32 %v731, %v1016
        %v1061 = vmul.f32 %v732, %v1016
        %v1062 = vmul.f32 %v733, %v1016
        %v1063 = vmul.f32 %v734, %v1016
        %v1064 = vmul.f32 %v735, %v1016
        %v1065 = vmul.f32 %v736, %v1016
        %v1066 = vmul.f32 %v737, %v1016
        %v1067 = vmul.f32 %v738, %v1016
        %v1068 = vmul.f32 %v739, %v1016
        %v1069 = vmul.f32 %v740, %v1016
        %v1070 = vmul.f32 %v741, %v1016
        %v1071 = vmul.f32 %v742, %v1016
        %v1072 = vmul.f32 %v743, %v1016
        %v1073 = vmul.f32 %v744, %v1016
        %v1074 = vmul.f32 %v745, %v1016
        %v1075 = vmul.f32 %v746, %v1016
        %v1076 = vmul.f32 %v747, %v1016
        %v1077 = vlaneseq
        %v1078 = vshrl.u32 %v1077, 7
        %v1079 = vsub.s32 1, %v1078
        %v1080 = vrot.slane %v759, %v1079
        %v1081 = vmul.f32 %v693, %v1080
        %v1082 = vmul.f32 %v694, %v1080
        %v1083 = vmul.f32 %v695, %v1080
        %v1084 = vmul.f32 %v696, %v1080
        %v1085 = vmul.f32 %v697, %v1080
        %v1086 = vmul.f32 %v698, %v1080
        %v1087 = vmul.f32 %v699, %v1080
        %v1088 = vmul.f32 %v700, %v1080
        %v1089 = vmul.f32 %v701, %v1080
        %v1090 = vmul.f32 %v702, %v1080
        %v1091 = vmul.f32 %v703, %v1080
        %v1092 = vmul.f32 %v704, %v1080
        %v1093 = vmul.f32 %v705, %v1080
        %v1094 = vmul.f32 %v706, %v1080
        %v1095 = vmul.f32 %v707, %v1080
        %v1096 = vmul.f32 %v708, %v1080
        %v1097 = vmul.f32 %v709, %v1080
        %v1098 = vmul.f32 %v710, %v1080
        %v1099 = vmul.f32 %v711, %v1080
        %v1100 = vmul.f32 %v712, %v1080
        %v1101 = vmul.f32 %v713, %v1080
        %v1102 = vmul.f32 %v714, %v1080
        %v1103 = vmul.f32 %v715, %v1080
        %v1104 = vmul.f32 %v716, %v1080
        %v1105 = vmul.f32 %v717, %v1080
        %v1106 = vmul.f32 %v718, %v1080
        %v1107 = vmul.f32 %v719, %v1080
        %v1108 = vmul.f32 %v720, %v1080
        %v1109 = vmul.f32 %v721, %v1080
        %v1110 = vmul.f32 %v722, %v1080
        %v1111 = vmul.f32 %v723, %v1080
        %v1112 = vmul.f32 %v724, %v1080
        %v1113 = vmul.f32 %v725, %v1080
        %v1114 = vmul.f32 %v726, %v1080
        %v1115 = vmul.f32 %v727, %v1080
        %v1116 = vmul.f32 %v728, %v1080
        %v1117 = vmul.f32 %v729, %v1080
        %v1118 = vmul.f32 %v730, %v1080
        %v1119 = vmul.f32 %v731, %v1080
        %v1120 = vmul.f32 %v732, %v1080
        %v1121 = vmul.f32 %v733, %v1080
        %v1122 = vmul.f32 %v734, %v1080
        %v1123 = vmul.f32 %v735, %v1080
        %v1124 = vmul.f32 %v736, %v1080
        %v1125 = vmul.f32 %v737, %v1080
        %v1126 = vmul.f32 %v738, %v1080
        %v1127 = vmul.f32 %v739, %v1080
        %v1128 = vmul.f32 %v740, %v1080
        %v1129 = vmul.f32 %v741, %v1080
        %v1130 = vmul.f32 %v742, %v1080
        %v1131 = vmul.f32 %v743, %v1080
        %v1132 = vmul.f32 %v744, %v1080
        %v1133 = vmul.f32 %v745, %v1080
        %v1134 = vmul.f32 %v746, %v1080
        %v1135 = vmul.f32 %v747, %v1080
        %v1136 = vmul.f32 %v748, %v1080
        %v1137 = vmul.f32 %v749, %v1080
        %v1138 = vmul.f32 %v750, %v1080
        %v1139 = vmul.f32 %v751, %v1080
        %v1140 = vmul.f32 %v752, %v1080
        %v1141 = vadd.f32 %v1017, %v1081
        %v1142 = vadd.f32 %v1018, %v1082
        %v1143 = vadd.f32 %v1019, %v1083
        %v1144 = vadd.f32 %v1020, %v1084
        %v1145 = vadd.f32 %v1021, %v1085
        %v1146 = vadd.f32 %v1022, %v1086
        %v1147 = vadd.f32 %v1023, %v1087
        %v1148 = vadd.f32 %v1024, %v1088
        %v1149 = vadd.f32 %v1025, %v1089
        %v1150 = vadd.f32 %v1026, %v1090
        %v1151 = vadd.f32 %v1027, %v1091
        %v1152 = vadd.f32 %v1028, %v1092
        %v1153 = vadd.f32 %v1029, %v1093
        %v1154 = vadd.f32 %v1030, %v1094
        %v1155 = vadd.f32 %v1031, %v1095
        %v1156 = vadd.f32 %v1032, %v1096
        %v1157 = vadd.f32 %v1033, %v1097
        %v1158 = vadd.f32 %v1034, %v1098
        %v1159 = vadd.f32 %v1035, %v1099
        %v1160 = vadd.f32 %v1036, %v1100
        %v1161 = vadd.f32 %v1037, %v1101
        %v1162 = vadd.f32 %v1038, %v1102
        %v1163 = vadd.f32 %v1039, %v1103
        %v1164 = vadd.f32 %v1040, %v1104
        %v1165 = vadd.f32 %v1041, %v1105
        %v1166 = vadd.f32 %v1042, %v1106
        %v1167 = vadd.f32 %v1043, %v1107
        %v1168 = vadd.f32 %v1044, %v1108
        %v1169 = vadd.f32 %v1045, %v1109
        %v1170 = vadd.f32 %v1046, %v1110
        %v1171 = vadd.f32 %v1047, %v1111
        %v1172 = vadd.f32 %v1048, %v1112
        %v1173 = vadd.f32 %v1049, %v1113
        %v1174 = vadd.f32 %v1050, %v1114
        %v1175 = vadd.f32 %v1051, %v1115
        %v1176 = vadd.f32 %v1052, %v1116
        %v1177 = vadd.f32 %v1053, %v1117
        %v1178 = vadd.f32 %v1054, %v1118
        %v1179 = vadd.f32 %v1055, %v1119
        %v1180 = vadd.f32 %v1056, %v1120
        %v1181 = vadd.f32 %v1057, %v1121
        %v1182 = vadd.f32 %v1058, %v1122
        %v1183 = vadd.f32 %v1059, %v1123
        %v1184 = vadd.f32 %v1060, %v1124
        %v1185 = vadd.f32 %v1061, %v1125
        %v1186 = vadd.f32 %v1062, %v1126
        %v1187 = vadd.f32 %v1063, %v1127
        %v1188 = vadd.f32 %v1064, %v1128
        %v1189 = vadd.f32 %v1065, %v1129
        %v1190 = vadd.f32 %v1066, %v1130
        %v1191 = vadd.f32 %v1067, %v1131
        %v1192 = vadd.f32 %v1068, %v1132
        %v1193 = vadd.f32 %v1069, %v1133
        %v1194 = vadd.f32 %v1070, %v1134
        %v1195 = vadd.f32 %v1071, %v1135
        %v1196 = vadd.f32 %v1072, %v1136
        %v1197 = vadd.f32 %v1073, %v1137
        %v1198 = vadd.f32 %v1074, %v1138
        %v1199 = vadd.f32 %v1075, %v1139
        %v1200 = vadd.f32 %v1076, %v1140
        %v1201 = vlaneseq
        %v1202 = vshrl.u32 %v1201, 7
        %v1203 = vsub.s32 1, %v1202
        %v1204 = vrot.slane %v760, %v1203
        %v1205 = vmul.f32 %v698, %v1204
        %v1206 = vmul.f32 %v699, %v1204
        %v1207 = vmul.f32 %v700, %v1204
        %v1208 = vmul.f32 %v701, %v1204
        %v1209 = vmul.f32 %v702, %v1204
        %v1210 = vmul.f32 %v703, %v1204
        %v1211 = vmul.f32 %v704, %v1204
        %v1212 = vmul.f32 %v705, %v1204
        %v1213 = vmul.f32 %v706, %v1204
        %v1214 = vmul.f32 %v707, %v1204
        %v1215 = vmul.f32 %v708, %v1204
        %v1216 = vmul.f32 %v709, %v1204
        %v1217 = vmul.f32 %v710, %v1204
        %v1218 = vmul.f32 %v711, %v1204
        %v1219 = vmul.f32 %v712, %v1204
        %v1220 = vmul.f32 %v713, %v1204
        %v1221 = vmul.f32 %v714, %v1204
        %v1222 = vmul.f32 %v715, %v1204
        %v1223 = vmul.f32 %v716, %v1204
        %v1224 = vmul.f32 %v717, %v1204
        %v1225 = vmul.f32 %v718, %v1204
        %v1226 = vmul.f32 %v719, %v1204
        %v1227 = vmul.f32 %v720, %v1204
        %v1228 = vmul.f32 %v721, %v1204
        %v1229 = vmul.f32 %v722, %v1204
        %v1230 = vmul.f32 %v723, %v1204
        %v1231 = vmul.f32 %v724, %v1204
        %v1232 = vmul.f32 %v725, %v1204
        %v1233 = vmul.f32 %v726, %v1204
        %v1234 = vmul.f32 %v727, %v1204
        %v1235 = vmul.f32 %v728, %v1204
        %v1236 = vmul.f32 %v729, %v1204
        %v1237 = vmul.f32 %v730, %v1204
        %v1238 = vmul.f32 %v731, %v1204
        %v1239 = vmul.f32 %v732, %v1204
        %v1240 = vmul.f32 %v733, %v1204
        %v1241 = vmul.f32 %v734, %v1204
        %v1242 = vmul.f32 %v735, %v1204
        %v1243 = vmul.f32 %v736, %v1204
        %v1244 = vmul.f32 %v737, %v1204
        %v1245 = vmul.f32 %v738, %v1204
        %v1246 = vmul.f32 %v739, %v1204
        %v1247 = vmul.f32 %v740, %v1204
        %v1248 = vmul.f32 %v741, %v1204
        %v1249 = vmul.f32 %v742, %v1204
        %v1250 = vmul.f32 %v743, %v1204
        %v1251 = vmul.f32 %v744, %v1204
        %v1252 = vmul.f32 %v745, %v1204
        %v1253 = vmul.f32 %v746, %v1204
        %v1254 = vmul.f32 %v747, %v1204
        %v1255 = vmul.f32 %v748, %v1204
        %v1256 = vmul.f32 %v749, %v1204
        %v1257 = vmul.f32 %v750, %v1204
        %v1258 = vmul.f32 %v751, %v1204
        %v1259 = vmul.f32 %v752, %v1204
        %v1260 = vmul.f32 %v753, %v1204
        %v1261 = vmul.f32 %v754, %v1204
        %v1262 = vmul.f32 %v755, %v1204
        %v1263 = vmul.f32 %v756, %v1204
        %v1264 = vmul.f32 %v757, %v1204
        %v1265 = vadd.f32 %v1141, %v1205
        %v1266 = vadd.f32 %v1142, %v1206
        %v1267 = vadd.f32 %v1143, %v1207
        %v1268 = vadd.f32 %v1144, %v1208
        %v1269 = vadd.f32 %v1145, %v1209
        %v1270 = vadd.f32 %v1146, %v1210
        %v1271 = vadd.f32 %v1147, %v1211
        %v1272 = vadd.f32 %v1148, %v1212
        %v1273 = vadd.f32 %v1149, %v1213
        %v1274 = vadd.f32 %v1150, %v1214
        %v1275 = vadd.f32 %v1151, %v1215
        %v1276 = vadd.f32 %v1152, %v1216
        %v1277 = vadd.f32 %v1153, %v1217
        %v1278 = vadd.f32 %v1154, %v1218
        %v1279 = vadd.f32 %v1155, %v1219
        %v1280 = vadd.f32 %v1156, %v1220
        %v1281 = vadd.f32 %v1157, %v1221
        %v1282 = vadd.f32 %v1158, %v1222
        %v1283 = vadd.f32 %v1159, %v1223
        %v1284 = vadd.f32 %v1160, %v1224
        %v1285 = vadd.f32 %v1161, %v1225
        %v1286 = vadd.f32 %v1162, %v1226
        %v1287 = vadd.f32 %v1163, %v1227
        %v1288 = vadd.f32 %v1164, %v1228
        %v1289 = vadd.f32 %v1165, %v1229
        %v1290 = vadd.f32 %v1166, %v1230
        %v1291 = vadd.f32 %v1167, %v1231
        %v1292 = vadd.f32 %v1168, %v1232
        %v1293 = vadd.f32 %v1169, %v1233
        %v1294 = vadd.f32 %v1170, %v1234
        %v1295 = vadd.f32 %v1171, %v1235
        %v1296 = vadd.f32 %v1172, %v1236
        %v1297 = vadd.f32 %v1173, %v1237
        %v1298 = vadd.f32 %v1174, %v1238
        %v1299 = vadd.f32 %v1175, %v1239
        %v1300 = vadd.f32 %v1176, %v1240
        %v1301 = vadd.f32 %v1177, %v1241
        %v1302 = vadd.f32 %v1178, %v1242
        %v1303 = vadd.f32 %v1179, %v1243
        %v1304 = vadd.f32 %v1180, %v1244
        %v1305 = vadd.f32 %v1181, %v1245
        %v1306 = vadd.f32 %v1182, %v1246
        %v1307 = vadd.f32 %v1183, %v1247
        %v1308 = vadd.f32 %v1184, %v1248
        %v1309 = vadd.f32 %v1185, %v1249
        %v1310 = vadd.f32 %v1186, %v1250
        %v1311 = vadd.f32 %v1187, %v1251
        %v1312 = vadd.f32 %v1188, %v1252
        %v1313 = vadd.f32 %v1189, %v1253
        %v1314 = vadd.f32 %v1190, %v1254
        %v1315 = vadd.f32 %v1191, %v1255
        %v1316 = vadd.f32 %v1192, %v1256
        %v1317 = vadd.f32 %v1193, %v1257
        %v1318 = vadd.f32 %v1194, %v1258
        %v1319 = vadd.f32 %v1195, %v1259
        %v1320 = vadd.f32 %v1196, %v1260
        %v1321 = vadd.f32 %v1197, %v1261
        %v1322 = vadd.f32 %v1198, %v1262
        %v1323 = vadd.f32 %v1199, %v1263
        %v1324 = vadd.f32 %v1200, %v1264
        %v1325 = vlaneseq
        %v1326 = vshrl.u32 %v1325, 7
        %v1327 = vsub.s32 2, %v1326
        %v1328 = vrot.slane %v758, %v1327
        %v1329 = vmul.f32 %v688, %v1328
        %v1330 = vmul.f32 %v689, %v1328
        %v1331 = vmul.f32 %v690, %v1328
        %v1332 = vmul.f32 %v691, %v1328
        %v1333 = vmul.f32 %v692, %v1328
        %v1334 = vmul.f32 %v693, %v1328
        %v1335 = vmul.f32 %v694, %v1328
        %v1336 = vmul.f32 %v695, %v1328
        %v1337 = vmul.f32 %v696, %v1328
        %v1338 = vmul.f32 %v697, %v1328
        %v1339 = vmul.f32 %v698, %v1328
        %v1340 = vmul.f32 %v699, %v1328
        %v1341 = vmul.f32 %v700, %v1328
        %v1342 = vmul.f32 %v701, %v1328
        %v1343 = vmul.f32 %v702, %v1328
        %v1344 = vmul.f32 %v703, %v1328
        %v1345 = vmul.f32 %v704, %v1328
        %v1346 = vmul.f32 %v705, %v1328
        %v1347 = vmul.f32 %v706, %v1328
        %v1348 = vmul.f32 %v707, %v1328
        %v1349 = vmul.f32 %v708, %v1328
        %v1350 = vmul.f32 %v709, %v1328
        %v1351 = vmul.f32 %v710, %v1328
        %v1352 = vmul.f32 %v711, %v1328
        %v1353 = vmul.f32 %v712, %v1328
        %v1354 = vmul.f32 %v713, %v1328
        %v1355 = vmul.f32 %v714, %v1328
        %v1356 = vmul.f32 %v715, %v1328
        %v1357 = vmul.f32 %v716, %v1328
        %v1358 = vmul.f32 %v717, %v1328
        %v1359 = vmul.f32 %v718, %v1328
        %v1360 = vmul.f32 %v719, %v1328
        %v1361 = vmul.f32 %v720, %v1328
        %v1362 = vmul.f32 %v721, %v1328
        %v1363 = vmul.f32 %v722, %v1328
        %v1364 = vmul.f32 %v723, %v1328
        %v1365 = vmul.f32 %v724, %v1328
        %v1366 = vmul.f32 %v725, %v1328
        %v1367 = vmul.f32 %v726, %v1328
        %v1368 = vmul.f32 %v727, %v1328
        %v1369 = vmul.f32 %v728, %v1328
        %v1370 = vmul.f32 %v729, %v1328
        %v1371 = vmul.f32 %v730, %v1328
        %v1372 = vmul.f32 %v731, %v1328
        %v1373 = vmul.f32 %v732, %v1328
        %v1374 = vmul.f32 %v733, %v1328
        %v1375 = vmul.f32 %v734, %v1328
        %v1376 = vmul.f32 %v735, %v1328
        %v1377 = vmul.f32 %v736, %v1328
        %v1378 = vmul.f32 %v737, %v1328
        %v1379 = vmul.f32 %v738, %v1328
        %v1380 = vmul.f32 %v739, %v1328
        %v1381 = vmul.f32 %v740, %v1328
        %v1382 = vmul.f32 %v741, %v1328
        %v1383 = vmul.f32 %v742, %v1328
        %v1384 = vmul.f32 %v743, %v1328
        %v1385 = vmul.f32 %v744, %v1328
        %v1386 = vmul.f32 %v745, %v1328
        %v1387 = vmul.f32 %v746, %v1328
        %v1388 = vmul.f32 %v747, %v1328
        %v1389 = vlaneseq
        %v1390 = vshrl.u32 %v1389, 7
        %v1391 = vsub.s32 2, %v1390
        %v1392 = vrot.slane %v759, %v1391
        %v1393 = vmul.f32 %v693, %v1392
        %v1394 = vmul.f32 %v694, %v1392
        %v1395 = vmul.f32 %v695, %v1392
        %v1396 = vmul.f32 %v696, %v1392
        %v1397 = vmul.f32 %v697, %v1392
        %v1398 = vmul.f32 %v698, %v1392
        %v1399 = vmul.f32 %v699, %v1392
        %v1400 = vmul.f32 %v700, %v1392
        %v1401 = vmul.f32 %v701, %v1392
        %v1402 = vmul.f32 %v702, %v1392
        %v1403 = vmul.f32 %v703, %v1392
        %v1404 = vmul.f32 %v704, %v1392
        %v1405 = vmul.f32 %v705, %v1392
        %v1406 = vmul.f32 %v706, %v1392
        %v1407 = vmul.f32 %v707, %v1392
        %v1408 = vmul.f32 %v708, %v1392
        %v1409 = vmul.f32 %v709, %v1392
        %v1410 = vmul.f32 %v710, %v1392
        %v1411 = vmul.f32 %v711, %v1392
        %v1412 = vmul.f32 %v712, %v1392
        %v1413 = vmul.f32 %v713, %v1392
        %v1414 = vmul.f32 %v714, %v1392
        %v1415 = vmul.f32 %v715, %v1392
        %v1416 = vmul.f32 %v716, %v1392
        %v1417 = vmul.f32 %v717, %v1392
        %v1418 = vmul.f32 %v718, %v1392
        %v1419 = vmul.f32 %v719, %v1392
        %v1420 = vmul.f32 %v720, %v1392
        %v1421 = vmul.f32 %v721, %v1392
        %v1422 = vmul.f32 %v722, %v1392
        %v1423 = vmul.f32 %v723, %v1392
        %v1424 = vmul.f32 %v724, %v1392
        %v1425 = vmul.f32 %v725, %v1392
        %v1426 = vmul.f32 %v726, %v1392
        %v1427 = vmul.f32 %v727, %v1392
        %v1428 = vmul.f32 %v728, %v1392
        %v1429 = vmul.f32 %v729, %v1392
        %v1430 = vmul.f32 %v730, %v1392
        %v1431 = vmul.f32 %v731, %v1392
        %v1432 = vmul.f32 %v732, %v1392
        %v1433 = vmul.f32 %v733, %v1392
        %v1434 = vmul.f32 %v734, %v1392
        %v1435 = vmul.f32 %v735, %v1392
        %v1436 = vmul.f32 %v736, %v1392
        %v1437 = vmul.f32 %v737, %v1392
        %v1438 = vmul.f32 %v738, %v1392
        %v1439 = vmul.f32 %v739, %v1392
        %v1440 = vmul.f32 %v740, %v1392
        %v1441 = vmul.f32 %v741, %v1392
        %v1442 = vmul.f32 %v742, %v1392
        %v1443 = vmul.f32 %v743, %v1392
        %v1444 = vmul.f32 %v744, %v1392
        %v1445 = vmul.f32 %v745, %v1392
        %v1446 = vmul.f32 %v746, %v1392
        %v1447 = vmul.f32 %v747, %v1392
        %v1448 = vmul.f32 %v748, %v1392
        %v1449 = vmul.f32 %v749, %v1392
        %v1450 = vmul.f32 %v750, %v1392
        %v1451 = vmul.f32 %v751, %v1392
        %v1452 = vmul.f32 %v752, %v1392
        %v1453 = vadd.f32 %v1329, %v1393
        %v1454 = vadd.f32 %v1330, %v1394
        %v1455 = vadd.f32 %v1331, %v1395
        %v1456 = vadd.f32 %v1332, %v1396
        %v1457 = vadd.f32 %v1333, %v1397
        %v1458 = vadd.f32 %v1334, %v1398
        %v1459 = vadd.f32 %v1335, %v1399
        %v1460 = vadd.f32 %v1336, %v1400
        %v1461 = vadd.f32 %v1337, %v1401
        %v1462 = vadd.f32 %v1338, %v1402
        %v1463 = vadd.f32 %v1339, %v1403
        %v1464 = vadd.f32 %v1340, %v1404
        %v1465 = vadd.f32 %v1341, %v1405
        %v1466 = vadd.f32 %v1342, %v1406
        %v1467 = vadd.f32 %v1343, %v1407
        %v1468 = vadd.f32 %v1344, %v1408
        %v1469 = vadd.f32 %v1345, %v1409
        %v1470 = vadd.f32 %v1346, %v1410
        %v1471 = vadd.f32 %v1347, %v1411
        %v1472 = vadd.f32 %v1348, %v1412
        %v1473 = vadd.f32 %v1349, %v1413
        %v1474 = vadd.f32 %v1350, %v1414
        %v1475 = vadd.f32 %v1351, %v1415
        %v1476 = vadd.f32 %v1352, %v1416
        %v1477 = vadd.f32 %v1353, %v1417
        %v1478 = vadd.f32 %v1354, %v1418
        %v1479 = vadd.f32 %v1355, %v1419
        %v1480 = vadd.f32 %v1356, %v1420
        %v1481 = vadd.f32 %v1357, %v1421
        %v1482 = vadd.f32 %v1358, %v1422
        %v1483 = vadd.f32 %v1359, %v1423
        %v1484 = vadd.f32 %v1360, %v1424
        %v1485 = vadd.f32 %v1361, %v1425
        %v1486 = vadd.f32 %v1362, %v1426
        %v1487 = vadd.f32 %v1363, %v1427
        %v1488 = vadd.f32 %v1364, %v1428
        %v1489 = vadd.f32 %v1365, %v1429
        %v1490 = vadd.f32 %v1366, %v1430
        %v1491 = vadd.f32 %v1367, %v1431
        %v1492 = vadd.f32 %v1368, %v1432
        %v1493 = vadd.f32 %v1369, %v1433
        %v1494 = vadd.f32 %v1370, %v1434
        %v1495 = vadd.f32 %v1371, %v1435
        %v1496 = vadd.f32 %v1372, %v1436
        %v1497 = vadd.f32 %v1373, %v1437
        %v1498 = vadd.f32 %v1374, %v1438
        %v1499 = vadd.f32 %v1375, %v1439
        %v1500 = vadd.f32 %v1376, %v1440
        %v1501 = vadd.f32 %v1377, %v1441
        %v1502 = vadd.f32 %v1378, %v1442
        %v1503 = vadd.f32 %v1379, %v1443
        %v1504 = vadd.f32 %v1380, %v1444
        %v1505 = vadd.f32 %v1381, %v1445
        %v1506 = vadd.f32 %v1382, %v1446
        %v1507 = vadd.f32 %v1383, %v1447
        %v1508 = vadd.f32 %v1384, %v1448
        %v1509 = vadd.f32 %v1385, %v1449
        %v1510 = vadd.f32 %v1386, %v1450
        %v1511 = vadd.f32 %v1387, %v1451
        %v1512 = vadd.f32 %v1388, %v1452
        %v1513 = vlaneseq
        %v1514 = vshrl.u32 %v1513, 7
        %v1515 = vsub.s32 2, %v1514
        %v1516 = vrot.slane %v760, %v1515
        %v1517 = vmul.f32 %v698, %v1516
        %v1518 = vmul.f32 %v699, %v1516
        %v1519 = vmul.f32 %v700, %v1516
        %v1520 = vmul.f32 %v701, %v1516
        %v1521 = vmul.f32 %v702, %v1516
        %v1522 = vmul.f32 %v703, %v1516
        %v1523 = vmul.f32 %v704, %v1516
        %v1524 = vmul.f32 %v705, %v1516
        %v1525 = vmul.f32 %v706, %v1516
        %v1526 = vmul.f32 %v707, %v1516
        %v1527 = vmul.f32 %v708, %v1516
        %v1528 = vmul.f32 %v709, %v1516
        %v1529 = vmul.f32 %v710, %v1516
        %v1530 = vmul.f32 %v711, %v1516
        %v1531 = vmul.f32 %v712, %v1516
        %v1532 = vmul.f32 %v713, %v1516
        %v1533 = vmul.f32 %v714, %v1516
        %v1534 = vmul.f32 %v715, %v1516
        %v1535 = vmul.f32 %v716, %v1516
        %v1536 = vmul.f32 %v717, %v1516
        %v1537 = vmul.f32 %v718, %v1516
        %v1538 = vmul.f32 %v719, %v1516
        %v1539 = vmul.f32 %v720, %v1516
        %v1540 = vmul.f32 %v721, %v1516
        %v1541 = vmul.f32 %v722, %v1516
        %v1542 = vmul.f32 %v723, %v1516
        %v1543 = vmul.f32 %v724, %v1516
        %v1544 = vmul.f32 %v725, %v1516
        %v1545 = vmul.f32 %v726, %v1516
        %v1546 = vmul.f32 %v727, %v1516
        %v1547 = vmul.f32 %v728, %v1516
        %v1548 = vmul.f32 %v729, %v1516
        %v1549 = vmul.f32 %v730, %v1516
        %v1550 = vmul.f32 %v731, %v1516
        %v1551 = vmul.f32 %v732, %v1516
        %v1552 = vmul.f32 %v733, %v1516
        %v1553 = vmul.f32 %v734, %v1516
        %v1554 = vmul.f32 %v735, %v1516
        %v1555 = vmul.f32 %v736, %v1516
        %v1556 = vmul.f32 %v737, %v1516
        %v1557 = vmul.f32 %v738, %v1516
        %v1558 = vmul.f32 %v739, %v1516
        %v1559 = vmul.f32 %v740, %v1516
        %v1560 = vmul.f32 %v741, %v1516
        %v1561 = vmul.f32 %v742, %v1516
        %v1562 = vmul.f32 %v743, %v1516
        %v1563 = vmul.f32 %v744, %v1516
        %v1564 = vmul.f32 %v745, %v1516
        %v1565 = vmul.f32 %v746, %v1516
        %v1566 = vmul.f32 %v747, %v1516
        %v1567 = vmul.f32 %v748, %v1516
        %v1568 = vmul.f32 %v749, %v1516
        %v1569 = vmul.f32 %v750, %v1516
        %v1570 = vmul.f32 %v751, %v1516
        %v1571 = vmul.f32 %v752, %v1516
        %v1572 = vmul.f32 %v753, %v1516
        %v1573 = vmul.f32 %v754, %v1516
        %v1574 = vmul.f32 %v755, %v1516
        %v1575 = vmul.f32 %v756, %v1516
        %v1576 = vmul.f32 %v757, %v1516
        %v1577 = vadd.f32 %v1453, %v1517
        %v1578 = vadd.f32 %v1454, %v1518
        %v1579 = vadd.f32 %v1455, %v1519
        %v1580 = vadd.f32 %v1456, %v1520
        %v1581 = vadd.f32 %v1457, %v1521
        %v1582 = vadd.f32 %v1458, %v1522
        %v1583 = vadd.f32 %v1459, %v1523
        %v1584 = vadd.f32 %v1460, %v1524
        %v1585 = vadd.f32 %v1461, %v1525
        %v1586 = vadd.f32 %v1462, %v1526
        %v1587 = vadd.f32 %v1463, %v1527
        %v1588 = vadd.f32 %v1464, %v1528
        %v1589 = vadd.f32 %v1465, %v1529
        %v1590 = vadd.f32 %v1466, %v1530
        %v1591 = vadd.f32 %v1467, %v1531
        %v1592 = vadd.f32 %v1468, %v1532
        %v1593 = vadd.f32 %v1469, %v1533
        %v1594 = vadd.f32 %v1470, %v1534
        %v1595 = vadd.f32 %v1471, %v1535
        %v1596 = vadd.f32 %v1472, %v1536
        %v1597 = vadd.f32 %v1473, %v1537
        %v1598 = vadd.f32 %v1474, %v1538
        %v1599 = vadd.f32 %v1475, %v1539
        %v1600 = vadd.f32 %v1476, %v1540
        %v1601 = vadd.f32 %v1477, %v1541
        %v1602 = vadd.f32 %v1478, %v1542
        %v1603 = vadd.f32 %v1479, %v1543
        %v1604 = vadd.f32 %v1480, %v1544
        %v1605 = vadd.f32 %v1481, %v1545
        %v1606 = vadd.f32 %v1482, %v1546
        %v1607 = vadd.f32 %v1483, %v1547
        %v1608 = vadd.f32 %v1484, %v1548
        %v1609 = vadd.f32 %v1485, %v1549
        %v1610 = vadd.f32 %v1486, %v1550
        %v1611 = vadd.f32 %v1487, %v1551
        %v1612 = vadd.f32 %v1488, %v1552
        %v1613 = vadd.f32 %v1489, %v1553
        %v1614 = vadd.f32 %v1490, %v1554
        %v1615 = vadd.f32 %v1491, %v1555
        %v1616 = vadd.f32 %v1492, %v1556
        %v1617 = vadd.f32 %v1493, %v1557
        %v1618 = vadd.f32 %v1494, %v1558
        %v1619 = vadd.f32 %v1495, %v1559
        %v1620 = vadd.f32 %v1496, %v1560
        %v1621 = vadd.f32 %v1497, %v1561
        %v1622 = vadd.f32 %v1498, %v1562
        %v1623 = vadd.f32 %v1499, %v1563
        %v1624 = vadd.f32 %v1500, %v1564
        %v1625 = vadd.f32 %v1501, %v1565
        %v1626 = vadd.f32 %v1502, %v1566
        %v1627 = vadd.f32 %v1503, %v1567
        %v1628 = vadd.f32 %v1504, %v1568
        %v1629 = vadd.f32 %v1505, %v1569
        %v1630 = vadd.f32 %v1506, %v1570
        %v1631 = vadd.f32 %v1507, %v1571
        %v1632 = vadd.f32 %v1508, %v1572
        %v1633 = vadd.f32 %v1509, %v1573
        %v1634 = vadd.f32 %v1510, %v1574
        %v1635 = vadd.f32 %v1511, %v1575
        %v1636 = vadd.f32 %v1512, %v1576
        %vm1697 = vcmask 1046528
        %v1698 = vrot.slane %v1265, 1
        %v1699 = vrot.slane %v1266, 1
        %v1700 = vsel %vm1697, %v1698, %v1699
        %v1701 = vrot.slane %v1267, 1
        %v1702 = vsel %vm1697, %v1699, %v1701
        %v1703 = vrot.slane %v1268, 1
        %v1704 = vsel %vm1697, %v1701, %v1703
        %v1705 = vrot.slane %v1269, 1
        %v1706 = vsel %vm1697, %v1703, %v1705
        %v1707 = vrot.slane %v1270, 1
        %v1708 = vrot.slane %v1271, 1
        %v1709 = vsel %vm1697, %v1707, %v1708
        %v1710 = vrot.slane %v1272, 1
        %v1711 = vsel %vm1697, %v1708, %v1710
        %v1712 = vrot.slane %v1273, 1
        %v1713 = vsel %vm1697, %v1710, %v1712
        %v1714 = vrot.slane %v1274, 1
        %v1715 = vsel %vm1697, %v1712, %v1714
        %v1716 = vrot.slane %v1275, 1
        %v1717 = vrot.slane %v1276, 1
        %v1718 = vsel %vm1697, %v1716, %v1717
        %v1719 = vrot.slane %v1277, 1
        %v1720 = vsel %vm1697, %v1717, %v1719
        %v1721 = vrot.slane %v1278, 1
        %v1722 = vsel %vm1697, %v1719, %v1721
        %v1723 = vrot.slane %v1279, 1
        %v1724 = vsel %vm1697, %v1721, %v1723
        %v1725 = vrot.slane %v1280, 1
        %v1726 = vrot.slane %v1281, 1
        %v1727 = vsel %vm1697, %v1725, %v1726
        %v1728 = vrot.slane %v1282, 1
        %v1729 = vsel %vm1697, %v1726, %v1728
        %v1730 = vrot.slane %v1283, 1
        %v1731 = vsel %vm1697, %v1728, %v1730
        %v1732 = vrot.slane %v1284, 1
        %v1733 = vsel %vm1697, %v1730, %v1732
        %v1734 = vrot.slane %v1285, 1
        %v1735 = vrot.slane %v1286, 1
        %v1736 = vsel %vm1697, %v1734, %v1735
        %v1737 = vrot.slane %v1287, 1
        %v1738 = vsel %vm1697, %v1735, %v1737
        %v1739 = vrot.slane %v1288, 1
        %v1740 = vsel %vm1697, %v1737, %v1739
        %v1741 = vrot.slane %v1289, 1
        %v1742 = vsel %vm1697, %v1739, %v1741
        %v1743 = vrot.slane %v1290, 1
        %v1744 = vrot.slane %v1291, 1
        %v1745 = vsel %vm1697, %v1743, %v1744
        %v1746 = vrot.slane %v1292, 1
        %v1747 = vsel %vm1697, %v1744, %v1746
        %v1748 = vrot.slane %v1293, 1
        %v1749 = vsel %vm1697, %v1746, %v1748
        %v1750 = vrot.slane %v1294, 1
        %v1751 = vsel %vm1697, %v1748, %v1750
        %v1752 = vrot.slane %v1295, 1
        %v1753 = vrot.slane %v1296, 1
        %v1754 = vsel %vm1697, %v1752, %v1753
        %v1755 = vrot.slane %v1297, 1
        %v1756 = vsel %vm1697, %v1753, %v1755
        %v1757 = vrot.slane %v1298, 1
        %v1758 = vsel %vm1697, %v1755, %v1757
        %v1759 = vrot.slane %v1299, 1
        %v1760 = vsel %vm1697, %v1757, %v1759
        %v1761 = vrot.slane %v1300, 1
        %v1762 = vrot.slane %v1301, 1
        %v1763 = vsel %vm1697, %v1761, %v1762
        %v1764 = vrot.slane %v1302, 1
        %v1765 = vsel %vm1697, %v1762, %v1764
        %v1766 = vrot.slane %v1303, 1
        %v1767 = vsel %vm1697, %v1764, %v1766
        %v1768 = vrot.slane %v1304, 1
        %v1769 = vsel %vm1697, %v1766, %v1768
        %v1770 = vrot.slane %v1305, 1
        %v1771 = vrot.slane %v1306, 1
        %v1772 = vsel %vm1697, %v1770, %v1771
        %v1773 = vrot.slane %v1307, 1
        %v1774 = vsel %vm1697, %v1771, %v1773
        %v1775 = vrot.slane %v1308, 1
        %v1776 = vsel %vm1697, %v1773, %v1775
        %v1777 = vrot.slane %v1309, 1
        %v1778 = vsel %vm1697, %v1775, %v1777
        %v1779 = vrot.slane %v1310, 1
        %v1780 = vrot.slane %v1311, 1
        %v1781 = vsel %vm1697, %v1779, %v1780
        %v1782 = vrot.slane %v1312, 1
        %v1783 = vsel %vm1697, %v1780, %v1782
        %v1784 = vrot.slane %v1313, 1
        %v1785 = vsel %vm1697, %v1782, %v1784
        %v1786 = vrot.slane %v1314, 1
        %v1787 = vsel %vm1697, %v1784, %v1786
        %v1788 = vrot.slane %v1315, 1
        %v1789 = vrot.slane %v1316, 1
        %v1790 = vsel %vm1697, %v1788, %v1789
        %v1791 = vrot.slane %v1317, 1
        %v1792 = vsel %vm1697, %v1789, %v1791
        %v1793 = vrot.slane %v1318, 1
        %v1794 = vsel %vm1697, %v1791, %v1793
        %v1795 = vrot.slane %v1319, 1
        %v1796 = vsel %vm1697, %v1793, %v1795
        %v1797 = vrot.slane %v1320, 1
        %v1798 = vrot.slane %v1321, 1
        %v1799 = vsel %vm1697, %v1797, %v1798
        %v1800 = vrot.slane %v1322, 1
        %v1801 = vsel %vm1697, %v1798, %v1800
        %v1802 = vrot.slane %v1323, 1
        %v1803 = vsel %vm1697, %v1800, %v1802
        %v1804 = vrot.slane %v1324, 1
        %v1805 = vsel %vm1697, %v1802, %v1804
        %v1854 = vadd.f32 %v965, %v1700
        %v1855 = vadd.f32 %v966, %v1702
        %v1856 = vadd.f32 %v967, %v1704
        %v1857 = vadd.f32 %v968, %v1706
        %v1858 = vadd.f32 %v969, %v1709
        %v1859 = vadd.f32 %v970, %v1711
        %v1860 = vadd.f32 %v971, %v1713
        %v1861 = vadd.f32 %v972, %v1715
        %v1862 = vadd.f32 %v973, %v1718
        %v1863 = vadd.f32 %v974, %v1720
        %v1864 = vadd.f32 %v975, %v1722
        %v1865 = vadd.f32 %v976, %v1724
        %v1866 = vadd.f32 %v977, %v1727
        %v1867 = vadd.f32 %v978, %v1729
        %v1868 = vadd.f32 %v979, %v1731
        %v1869 = vadd.f32 %v980, %v1733
        %v1870 = vadd.f32 %v981, %v1736
        %v1871 = vadd.f32 %v982, %v1738
        %v1872 = vadd.f32 %v983, %v1740
        %v1873 = vadd.f32 %v984, %v1742
        %v1874 = vadd.f32 %v985, %v1745
        %v1875 = vadd.f32 %v986, %v1747
        %v1876 = vadd.f32 %v987, %v1749
        %v1877 = vadd.f32 %v988, %v1751
        %v1878 = vadd.f32 %v989, %v1754
        %v1879 = vadd.f32 %v990, %v1756
        %v1880 = vadd.f32 %v991, %v1758
        %v1881 = vadd.f32 %v992, %v1760
        %v1882 = vadd.f32 %v993, %v1763
        %v1883 = vadd.f32 %v994, %v1765
        %v1884 = vadd.f32 %v995, %v1767
        %v1885 = vadd.f32 %v996, %v1769
        %v1886 = vadd.f32 %v997, %v1772
        %v1887 = vadd.f32 %v998, %v1774
        %v1888 = vadd.f32 %v999, %v1776
        %v1889 = vadd.f32 %v1000, %v1778
        %v1890 = vadd.f32 %v1001, %v1781
        %v1891 = vadd.f32 %v1002, %v1783
        %v1892 = vadd.f32 %v1003, %v1785
        %v1893 = vadd.f32 %v1004, %v1787
        %v1894 = vadd.f32 %v1005, %v1790
        %v1895 = vadd.f32 %v1006, %v1792
        %v1896 = vadd.f32 %v1007, %v1794
        %v1897 = vadd.f32 %v1008, %v1796
        %v1898 = vadd.f32 %v1009, %v1799
        %v1899 = vadd.f32 %v1010, %v1801
        %v1900 = vadd.f32 %v1011, %v1803
        %v1901 = vadd.f32 %v1012, %v1805
        %vm1962 = vcmask 1045504
        %v1963 = vrot.slane %v1577, 2
        %v1964 = vrot.slane %v1578, 2
        %v1965 = vsel %vm1962, %v1963, %v1964
        %v1966 = vrot.slane %v1579, 2
        %v1967 = vsel %vm1962, %v1964, %v1966
        %v1968 = vrot.slane %v1580, 2
        %v1969 = vsel %vm1962, %v1966, %v1968
        %v1970 = vrot.slane %v1581, 2
        %v1971 = vsel %vm1962, %v1968, %v1970
        %v1972 = vrot.slane %v1582, 2
        %v1973 = vrot.slane %v1583, 2
        %v1974 = vsel %vm1962, %v1972, %v1973
        %v1975 = vrot.slane %v1584, 2
        %v1976 = vsel %vm1962, %v1973, %v1975
        %v1977 = vrot.slane %v1585, 2
        %v1978 = vsel %vm1962, %v1975, %v1977
        %v1979 = vrot.slane %v1586, 2
        %v1980 = vsel %vm1962, %v1977, %v1979
        %v1981 = vrot.slane %v1587, 2
        %v1982 = vrot.slane %v1588, 2
        %v1983 = vsel %vm1962, %v1981, %v1982
        %v1984 = vrot.slane %v1589, 2
        %v1985 = vsel %vm1962, %v1982, %v1984
        %v1986 = vrot.slane %v1590, 2
        %v1987 = vsel %vm1962, %v1984, %v1986
        %v1988 = vrot.slane %v1591, 2
        %v1989 = vsel %vm1962, %v1986, %v1988
        %v1990 = vrot.slane %v1592, 2
        %v1991 = vrot.slane %v1593, 2
        %v1992 = vsel %vm1962, %v1990, %v1991
        %v1993 = vrot.slane %v1594, 2
        %v1994 = vsel %vm1962, %v1991, %v1993
        %v1995 = vrot.slane %v1595, 2
        %v1996 = vsel %vm1962, %v1993, %v1995
        %v1997 = vrot.slane %v1596, 2
        %v1998 = vsel %vm1962, %v1995, %v1997
        %v1999 = vrot.slane %v1597, 2
        %v2000 = vrot.slane %v1598, 2
        %v2001 = vsel %vm1962, %v1999, %v2000
        %v2002 = vrot.slane %v1599, 2
        %v2003 = vsel %vm1962, %v2000, %v2002
        %v2004 = vrot.slane %v1600, 2
        %v2005 = vsel %vm1962, %v2002, %v2004
        %v2006 = vrot.slane %v1601, 2
        %v2007 = vsel %vm1962, %v2004, %v2006
        %v2008 = vrot.slane %v1602, 2
        %v2009 = vrot.slane %v1603, 2
        %v2010 = vsel %vm1962, %v2008, %v2009
        %v2011 = vrot.slane %v1604, 2
        %v2012 = vsel %vm1962, %v2009, %v2011
        %v2013 = vrot.slane %v1605, 2
        %v2014 = vsel %vm1962, %v2011, %v2013
        %v2015 = vrot.slane %v1606, 2
        %v2016 = vsel %vm1962, %v2013, %v2015
        %v2017 = vrot.slane %v1607, 2
        %v2018 = vrot.slane %v1608, 2
        %v2019 = vsel %vm1962, %v2017, %v2018
        %v2020 = vrot.slane %v1609, 2
        %v2021 = vsel %vm1962, %v2018, %v2020
        %v2022 = vrot.slane %v1610, 2
        %v2023 = vsel %vm1962, %v2020, %v2022
        %v2024 = vrot.slane %v1611, 2
        %v2025 = vsel %vm1962, %v2022, %v2024
        %v2026 = vrot.slane %v1612, 2
        %v2027 = vrot.slane %v1613, 2
        %v2028 = vsel %vm1962, %v2026, %v2027
        %v2029 = vrot.slane %v1614, 2
        %v2030 = vsel %vm1962, %v2027, %v2029
        %v2031 = vrot.slane %v1615, 2
        %v2032 = vsel %vm1962, %v2029, %v2031
        %v2033 = vrot.slane %v1616, 2
        %v2034 = vsel %vm1962, %v2031, %v2033
        %v2035 = vrot.slane %v1617, 2
        %v2036 = vrot.slane %v1618, 2
        %v2037 = vsel %vm1962, %v2035, %v2036
        %v2038 = vrot.slane %v1619, 2
        %v2039 = vsel %vm1962, %v2036, %v2038
        %v2040 = vrot.slane %v1620, 2
        %v2041 = vsel %vm1962, %v2038, %v2040
        %v2042 = vrot.slane %v1621, 2
        %v2043 = vsel %vm1962, %v2040, %v2042
        %v2044 = vrot.slane %v1622, 2
        %v2045 = vrot.slane %v1623, 2
        %v2046 = vsel %vm1962, %v2044, %v2045
        %v2047 = vrot.slane %v1624, 2
        %v2048 = vsel %vm1962, %v2045, %v2047
        %v2049 = vrot.slane %v1625, 2
        %v2050 = vsel %vm1962, %v2047, %v2049
        %v2051 = vrot.slane %v1626, 2
        %v2052 = vsel %vm1962, %v2049, %v2051
        %v2053 = vrot.slane %v1627, 2
        %v2054 = vrot.slane %v1628, 2
        %v2055 = vsel %vm1962, %v2053, %v2054
        %v2056 = vrot.slane %v1629, 2
        %v2057 = vsel %vm1962, %v2054, %v2056
        %v2058 = vrot.slane %v1630, 2
        %v2059 = vsel %vm1962, %v2056, %v2058
        %v2060 = vrot.slane %v1631, 2
        %v2061 = vsel %vm1962, %v2058, %v2060
        %v2062 = vrot.slane %v1632, 2
        %v2063 = vrot.slane %v1633, 2
        %v2064 = vsel %vm1962, %v2062, %v2063
        %v2065 = vrot.slane %v1634, 2
        %v2066 = vsel %vm1962, %v2063, %v2065
        %v2067 = vrot.slane %v1635, 2
        %v2068 = vsel %vm1962, %v2065, %v2067
        %v2069 = vrot.slane %v1636, 2
        %v2070 = vsel %vm1962, %v2067, %v2069
        %v2119 = vadd.f32 %v1854, %v1965
        %v2120 = vadd.f32 %v1855, %v1967
        %v2121 = vadd.f32 %v1856, %v1969
        %v2122 = vadd.f32 %v1857, %v1971
        %v2123 = vadd.f32 %v1858, %v1974
        %v2124 = vadd.f32 %v1859, %v1976
        %v2125 = vadd.f32 %v1860, %v1978
        %v2126 = vadd.f32 %v1861, %v1980
        %v2127 = vadd.f32 %v1862, %v1983
        %v2128 = vadd.f32 %v1863, %v1985
        %v2129 = vadd.f32 %v1864, %v1987
        %v2130 = vadd.f32 %v1865, %v1989
        %v2131 = vadd.f32 %v1866, %v1992
        %v2132 = vadd.f32 %v1867, %v1994
        %v2133 = vadd.f32 %v1868, %v1996
        %v2134 = vadd.f32 %v1869, %v1998
        %v2135 = vadd.f32 %v1870, %v2001
        %v2136 = vadd.f32 %v1871, %v2003
        %v2137 = vadd.f32 %v1872, %v2005
        %v2138 = vadd.f32 %v1873, %v2007
        %v2139 = vadd.f32 %v1874, %v2010
        %v2140 = vadd.f32 %v1875, %v2012
        %v2141 = vadd.f32 %v1876, %v2014
        %v2142 = vadd.f32 %v1877, %v2016
        %v2143 = vadd.f32 %v1878, %v2019
        %v2144 = vadd.f32 %v1879, %v2021
        %v2145 = vadd.f32 %v1880, %v2023
        %v2146 = vadd.f32 %v1881, %v2025
        %v2147 = vadd.f32 %v1882, %v2028
        %v2148 = vadd.f32 %v1883, %v2030
        %v2149 = vadd.f32 %v1884, %v2032
        %v2150 = vadd.f32 %v1885, %v2034
        %v2151 = vadd.f32 %v1886, %v2037
        %v2152 = vadd.f32 %v1887, %v2039
        %v2153 = vadd.f32 %v1888, %v2041
        %v2154 = vadd.f32 %v1889, %v2043
        %v2155 = vadd.f32 %v1890, %v2046
        %v2156 = vadd.f32 %v1891, %v2048
        %v2157 = vadd.f32 %v1892, %v2050
        %v2158 = vadd.f32 %v1893, %v2052
        %v2159 = vadd.f32 %v1894, %v2055
        %v2160 = vadd.f32 %v1895, %v2057
        %v2161 = vadd.f32 %v1896, %v2059
        %v2162 = vadd.f32 %v1897, %v2061
        %v2163 = vadd.f32 %v1898, %v2064
        %v2164 = vadd.f32 %v1899, %v2066
        %v2165 = vadd.f32 %v1900, %v2068
        %v2166 = vadd.f32 %v1901, %v2070
        %v2167 = vld [vmem:[%s4] sm:$0x1]
        %v2169 = vlaneseq
        %v2170 = vshrl.u32 %v2169, 7
        %v2171 = vsub.s32 0, %v2170
        %v2172 = vrot.slane %v2167, %v2171
        %v2174 = vadd.f32 %v2119, %v2172
        %v2175 = vadd.f32 %v2120, %v2172
        %v2176 = vadd.f32 %v2121, %v2172
        %v2177 = vadd.f32 %v2122, %v2172
        %v2178 = vadd.f32 %v2123, %v2172
        %v2179 = vadd.f32 %v2124, %v2172
        %v2180 = vadd.f32 %v2125, %v2172
        %v2181 = vadd.f32 %v2126, %v2172
        %v2182 = vadd.f32 %v2127, %v2172
        %v2183 = vadd.f32 %v2128, %v2172
        %v2184 = vadd.f32 %v2129, %v2172
        %v2185 = vadd.f32 %v2130, %v2172
        %v2186 = vadd.f32 %v2131, %v2172
        %v2187 = vadd.f32 %v2132, %v2172
        %v2188 = vadd.f32 %v2133, %v2172
        %v2189 = vadd.f32 %v2134, %v2172
        %v2190 = vadd.f32 %v2135, %v2172
        %v2191 = vadd.f32 %v2136, %v2172
        %v2192 = vadd.f32 %v2137, %v2172
        %v2193 = vadd.f32 %v2138, %v2172
        %v2194 = vadd.f32 %v2139, %v2172
        %v2195 = vadd.f32 %v2140, %v2172
        %v2196 = vadd.f32 %v2141, %v2172
        %v2197 = vadd.f32 %v2142, %v2172
        %v2198 = vadd.f32 %v2143, %v2172
        %v2199 = vadd.f32 %v2144, %v2172
        %v2200 = vadd.f32 %v2145, %v2172
        %v2201 = vadd.f32 %v2146, %v2172
        %v2202 = vadd.f32 %v2147, %v2172
        %v2203 = vadd.f32 %v2148, %v2172
        %v2204 = vadd.f32 %v2149, %v2172
        %v2205 = vadd.f32 %v2150, %v2172
        %v2206 = vadd.f32 %v2151, %v2172
        %v2207 = vadd.f32 %v2152, %v2172
        %v2208 = vadd.f32 %v2153, %v2172
        %v2209 = vadd.f32 %v2154, %v2172
        %v2210 = vadd.f32 %v2155, %v2172
        %v2211 = vadd.f32 %v2156, %v2172
        %v2212 = vadd.f32 %v2157, %v2172
        %v2213 = vadd.f32 %v2158, %v2172
        %v2214 = vadd.f32 %v2159, %v2172
        %v2215 = vadd.f32 %v2160, %v2172
        %v2216 = vadd.f32 %v2161, %v2172
        %v2217 = vadd.f32 %v2162, %v2172
        %v2218 = vadd.f32 %v2163, %v2172
        %v2219 = vadd.f32 %v2164, %v2172
        %v2220 = vadd.f32 %v2165, %v2172
        %v2221 = vadd.f32 %v2166, %v2172
        %v2222 = vld [vmem:[#allocation9] sm:$0xf]
        %v2223 = vld [vmem:[#allocation9 + $0x4] sm:$0xf]
        %v2224 = vld [vmem:[#allocation9 + $0x8] sm:$0xf]
        %v2225 = vld [vmem:[#allocation9 + $0xc] sm:$0xf]
        %v2226 = vld [vmem:[#allocation9 + $0x10] sm:$0xf]
        %v2227 = vld [vmem:[#allocation9 + $0x14] sm:$0xf]
        %v2228 = vld [vmem:[#allocation9 + $0x18] sm:$0xf]
        %v2229 = vld [vmem:[#allocation9 + $0x1c] sm:$0xf]
        %v2230 = vld [vmem:[#allocation9 + $0x20] sm:$0xf]
        %v2231 = vld [vmem:[#allocation9 + $0x24] sm:$0xf]
        %v2232 = vld [vmem:[#allocation9 + $0x28] sm:$0xf]
        %v2233 = vld [vmem:[#allocation9 + $0x2c] sm:$0xf]
        %v2234 = vld [vmem:[#allocation9 + $0x30] sm:$0xf]
        %v2235 = vld [vmem:[#allocation9 + $0x34] sm:$0xf]
        %v2236 = vld [vmem:[#allocation9 + $0x38] sm:$0xf]
        %v2237 = vld [vmem:[#allocation9 + $0x3c] sm:$0xf]
        %v2238 = vld [vmem:[#allocation10] sm:$0x1]
        %v2239 = vpack.c.bf16 %v2175, %v2174
        %v2240 = vpack.c.bf16 %v2177, %v2176
        %v2241 = vpack.c.bf16 %v2179, %v2178
        %v2242 = vpack.c.bf16 %v2181, %v2180
        %v2243 = vpack.c.bf16 %v2183, %v2182
        %v2244 = vpack.c.bf16 %v2185, %v2184
        %v2245 = vpack.c.bf16 %v2187, %v2186
        %v2246 = vpack.c.bf16 %v2189, %v2188
        %v2247 = vpack.c.bf16 %v2191, %v2190
        %v2248 = vpack.c.bf16 %v2193, %v2192
        %v2249 = vpack.c.bf16 %v2195, %v2194
        %v2250 = vpack.c.bf16 %v2197, %v2196
        %v2251 = vpack.c.bf16 %v2199, %v2198
        %v2252 = vpack.c.bf16 %v2201, %v2200
        %v2253 = vpack.c.bf16 %v2203, %v2202
        %v2254 = vpack.c.bf16 %v2205, %v2204
        %v2255 = vpack.c.bf16 %v2207, %v2206
        %v2256 = vpack.c.bf16 %v2209, %v2208
        %v2257 = vpack.c.bf16 %v2211, %v2210
        %v2258 = vpack.c.bf16 %v2213, %v2212
        %v2259 = vpack.c.bf16 %v2215, %v2214
        %v2260 = vpack.c.bf16 %v2217, %v2216
        %v2261 = vpack.c.bf16 %v2219, %v2218
        %v2262 = vpack.c.bf16 %v2221, %v2220
        %v2279 = vunpack.c.l.b16 %v2222
        %v2280 = vunpack.c.l.b16 %v2223
        %v2281 = vunpack.c.l.b16 %v2224
        %v2282 = vunpack.c.l.b16 %v2225
        %v2283 = vunpack.c.l.b16 %v2226
        %v2284 = vunpack.c.l.b16 %v2227
        %v2285 = vunpack.c.l.b16 %v2228
        %v2286 = vunpack.c.l.b16 %v2229
        %v2287 = vunpack.c.l.b16 %v2230
        %v2288 = vunpack.c.l.b16 %v2231
        %v2289 = vunpack.c.l.b16 %v2232
        %v2290 = vunpack.c.l.b16 %v2233
        %v2291 = vunpack.c.l.b16 %v2234
        %v2292 = vunpack.c.l.b16 %v2235
        %v2293 = vunpack.c.l.b16 %v2236
        %v2294 = vunpack.c.l.b16 %v2237
        %v2295 = vpack.c.b16 %v2280, %v2279
        %v2296 = vpack.c.b16 %v2282, %v2281
        %v2297 = vpack.c.b16 %v2284, %v2283
        %v2298 = vpack.c.b16 %v2286, %v2285
        %v2299 = vpack.c.b16 %v2288, %v2287
        %v2300 = vpack.c.b16 %v2290, %v2289
        %v2301 = vpack.c.b16 %v2292, %v2291
        %v2302 = vpack.c.b16 %v2294, %v2293
        %2311 = vmatprep.subr.bf16.mxu0 0
        %2312 = vmatpush1.bf16.msra.mxu0 %v2295
        %2313 = vmatprep.subr.bf16.mxu0 0
        %2314 = vmatpush1.bf16.msra.mxu0 %v2296
        %2315 = vmatprep.subr.bf16.mxu0 0
        %2316 = vmatpush1.bf16.msra.mxu0 %v2297
        %2317 = vmatprep.subr.bf16.mxu0 0
        %2318 = vmatpush1.bf16.msra.mxu0 %v2298
        %2319 = vmatprep.subr.bf16.mxu0 0
        %2320 = vmatpush1.bf16.msra.mxu0 %v2299
        %2321 = vmatprep.subr.bf16.mxu0 0
        %2322 = vmatpush1.bf16.msra.mxu0 %v2300
        %2323 = vmatprep.subr.bf16.mxu0 0
        %2324 = vmatpush1.bf16.msra.mxu0 %v2301
        %2325 = vmatprep.subr.bf16.mxu0 0
        %2326 = vmatpush1.bf16.msra.mxu0 %v2302
        %2327 = vmatprep.subr.bf16.mxu0 0
        %2328 = vmatpush1.bf16.msra.mxu0 0
        %2329 = vmatprep.subr.bf16.mxu0 0
        %2330 = vmatpush1.bf16.msra.mxu0 0
        %2331 = vmatprep.subr.bf16.mxu0 0
        %2332 = vmatpush1.bf16.msra.mxu0 0
        %2333 = vmatprep.subr.bf16.mxu0 0
        %2334 = vmatpush1.bf16.msra.mxu0 0
        %2335 = vmatprep.subr.bf16.mxu0 0
        %2336 = vmatpush1.bf16.msra.mxu0 0
        %2337 = vmatprep.subr.bf16.mxu0 0
        %2338 = vmatpush1.bf16.msra.mxu0 0
        %2339 = vmatprep.subr.bf16.mxu0 0
        %2340 = vmatpush1.bf16.msra.mxu0 0
        %2341 = vmatprep.subr.bf16.mxu0 0
        %2342 = vmatpush1.bf16.msra.mxu0 0
        %2343 = vmatprep.mubr.bf16.mxu0 0
        %2344 = vmatmul.mubr.bf16.gmra.mrb[0].mxu0 %v2239
        %v2345 = vpop.f32.mrb[0].mxu0
        %v2346 = vadd.f32 0.0, %v2345
        %v2347 = vpop.f32.mrb[0].mxu0
        %v2348 = vpop.f32.mrb[0].mxu0
        %v2349 = vadd.f32 0.0, %v2348
        %v2350 = vpop.f32.mrb[0].mxu0
        %2351 = vmatprep.mubr.bf16.mxu0 0
        %2352 = vmatmul.mubr.bf16.gmra.mrb[0].mxu0 %v2240
        %v2353 = vpop.f32.mrb[0].mxu0
        %v2354 = vadd.f32 0.0, %v2353
        %v2355 = vpop.f32.mrb[0].mxu0
        %v2356 = vpop.f32.mrb[0].mxu0
        %v2357 = vadd.f32 0.0, %v2356
        %v2358 = vpop.f32.mrb[0].mxu0
        %2359 = vmatprep.mubr.bf16.mxu0 0
        %2360 = vmatmul.mubr.bf16.gmra.mrb[0].mxu0 %v2241
        %v2361 = vpop.f32.mrb[0].mxu0
        %v2362 = vadd.f32 0.0, %v2361
        %v2363 = vpop.f32.mrb[0].mxu0
        %v2364 = vpop.f32.mrb[0].mxu0
        %v2365 = vadd.f32 0.0, %v2364
        %v2366 = vpop.f32.mrb[0].mxu0
        %2367 = vmatprep.mubr.bf16.mxu0 0
        %2368 = vmatmul.mubr.bf16.gmra.mrb[0].mxu0 %v2242
        %v2369 = vpop.f32.mrb[0].mxu0
        %v2370 = vadd.f32 0.0, %v2369
        %v2371 = vpop.f32.mrb[0].mxu0
        %v2372 = vpop.f32.mrb[0].mxu0
        %v2373 = vadd.f32 0.0, %v2372
        %v2374 = vpop.f32.mrb[0].mxu0
        %2375 = vmatprep.mubr.bf16.mxu0 0
        %2376 = vmatmul.mubr.bf16.gmra.mrb[0].mxu0 %v2243
        %v2377 = vpop.f32.mrb[0].mxu0
        %v2378 = vadd.f32 0.0, %v2377
        %v2379 = vpop.f32.mrb[0].mxu0
        %v2380 = vpop.f32.mrb[0].mxu0
        %v2381 = vadd.f32 0.0, %v2380
        %v2382 = vpop.f32.mrb[0].mxu0
        %2383 = vmatprep.mubr.bf16.mxu0 0
        %2384 = vmatmul.mubr.bf16.gmra.mrb[0].mxu0 %v2244
        %v2385 = vpop.f32.mrb[0].mxu0
        %v2386 = vadd.f32 0.0, %v2385
        %v2387 = vpop.f32.mrb[0].mxu0
        %v2388 = vpop.f32.mrb[0].mxu0
        %v2389 = vadd.f32 0.0, %v2388
        %v2390 = vpop.f32.mrb[0].mxu0
        %2391 = vmatprep.mubr.bf16.mxu0 0
        %2392 = vmatmul.mubr.bf16.gmra.mrb[0].mxu0 %v2245
        %v2393 = vpop.f32.mrb[0].mxu0
        %v2394 = vadd.f32 0.0, %v2393
        %v2395 = vpop.f32.mrb[0].mxu0
        %v2396 = vpop.f32.mrb[0].mxu0
        %v2397 = vadd.f32 0.0, %v2396
        %v2398 = vpop.f32.mrb[0].mxu0
        %2399 = vmatprep.mubr.bf16.mxu0 0
        %2400 = vmatmul.mubr.bf16.gmra.mrb[0].mxu0 %v2246
        %v2401 = vpop.f32.mrb[0].mxu0
        %v2402 = vadd.f32 0.0, %v2401
        %v2403 = vpop.f32.mrb[0].mxu0
        %v2404 = vpop.f32.mrb[0].mxu0
        %v2405 = vadd.f32 0.0, %v2404
        %v2406 = vpop.f32.mrb[0].mxu0
        %2407 = vmatprep.mubr.bf16.mxu0 0
        %2408 = vmatmul.mubr.bf16.gmra.mrb[0].mxu0 %v2247
        %v2409 = vpop.f32.mrb[0].mxu0
        %v2410 = vadd.f32 0.0, %v2409
        %v2411 = vpop.f32.mrb[0].mxu0
        %v2412 = vpop.f32.mrb[0].mxu0
        %v2413 = vadd.f32 0.0, %v2412
        %v2414 = vpop.f32.mrb[0].mxu0
        %2415 = vmatprep.mubr.bf16.mxu0 0
        %2416 = vmatmul.mubr.bf16.gmra.mrb[0].mxu0 %v2248
        %v2417 = vpop.f32.mrb[0].mxu0
        %v2418 = vadd.f32 0.0, %v2417
        %v2419 = vpop.f32.mrb[0].mxu0
        %v2420 = vpop.f32.mrb[0].mxu0
        %v2421 = vadd.f32 0.0, %v2420
        %v2422 = vpop.f32.mrb[0].mxu0
        %2423 = vmatprep.mubr.bf16.mxu0 0
        %2424 = vmatmul.mubr.bf16.gmra.mrb[0].mxu0 %v2249
        %v2425 = vpop.f32.mrb[0].mxu0
        %v2426 = vadd.f32 0.0, %v2425
        %v2427 = vpop.f32.mrb[0].mxu0
        %v2428 = vpop.f32.mrb[0].mxu0
        %v2429 = vadd.f32 0.0, %v2428
        %v2430 = vpop.f32.mrb[0].mxu0
        %2431 = vmatprep.mubr.bf16.mxu0 0
        %2432 = vmatmul.mubr.bf16.gmra.mrb[0].mxu0 %v2250
        %v2433 = vpop.f32.mrb[0].mxu0
        %v2434 = vadd.f32 0.0, %v2433
        %v2435 = vpop.f32.mrb[0].mxu0
        %v2436 = vpop.f32.mrb[0].mxu0
        %v2437 = vadd.f32 0.0, %v2436
        %v2438 = vpop.f32.mrb[0].mxu0
        %2439 = vmatprep.mubr.bf16.mxu0 0
        %2440 = vmatmul.mubr.bf16.gmra.mrb[0].mxu0 %v2251
        %v2441 = vpop.f32.mrb[0].mxu0
        %v2442 = vadd.f32 0.0, %v2441
        %v2443 = vpop.f32.mrb[0].mxu0
        %v2444 = vpop.f32.mrb[0].mxu0
        %v2445 = vadd.f32 0.0, %v2444
        %v2446 = vpop.f32.mrb[0].mxu0
        %2447 = vmatprep.mubr.bf16.mxu0 0
        %2448 = vmatmul.mubr.bf16.gmra.mrb[0].mxu0 %v2252
        %v2449 = vpop.f32.mrb[0].mxu0
        %v2450 = vadd.f32 0.0, %v2449
        %v2451 = vpop.f32.mrb[0].mxu0
        %v2452 = vpop.f32.mrb[0].mxu0
        %v2453 = vadd.f32 0.0, %v2452
        %v2454 = vpop.f32.mrb[0].mxu0
        %2455 = vmatprep.mubr.bf16.mxu0 0
        %2456 = vmatmul.mubr.bf16.gmra.mrb[0].mxu0 %v2253
        %v2457 = vpop.f32.mrb[0].mxu0
        %v2458 = vadd.f32 0.0, %v2457
        %v2459 = vpop.f32.mrb[0].mxu0
        %v2460 = vpop.f32.mrb[0].mxu0
        %v2461 = vadd.f32 0.0, %v2460
        %v2462 = vpop.f32.mrb[0].mxu0
        %2463 = vmatprep.mubr.bf16.mxu0 0
        %2464 = vmatmul.mubr.bf16.gmra.mrb[0].mxu0 %v2254
        %v2465 = vpop.f32.mrb[0].mxu0
        %v2466 = vadd.f32 0.0, %v2465
        %v2467 = vpop.f32.mrb[0].mxu0
        %v2468 = vpop.f32.mrb[0].mxu0
        %v2469 = vadd.f32 0.0, %v2468
        %v2470 = vpop.f32.mrb[0].mxu0
        %2471 = vmatprep.mubr.bf16.mxu0 0
        %2472 = vmatmul.mubr.bf16.gmra.mrb[0].mxu0 %v2255
        %v2473 = vpop.f32.mrb[0].mxu0
        %v2474 = vadd.f32 0.0, %v2473
        %v2475 = vpop.f32.mrb[0].mxu0
        %v2476 = vpop.f32.mrb[0].mxu0
        %v2477 = vadd.f32 0.0, %v2476
        %v2478 = vpop.f32.mrb[0].mxu0
        %2479 = vmatprep.mubr.bf16.mxu0 0
        %2480 = vmatmul.mubr.bf16.gmra.mrb[0].mxu0 %v2256
        %v2481 = vpop.f32.mrb[0].mxu0
        %v2482 = vadd.f32 0.0, %v2481
        %v2483 = vpop.f32.mrb[0].mxu0
        %v2484 = vpop.f32.mrb[0].mxu0
        %v2485 = vadd.f32 0.0, %v2484
        %v2486 = vpop.f32.mrb[0].mxu0
        %2487 = vmatprep.mubr.bf16.mxu0 0
        %2488 = vmatmul.mubr.bf16.gmra.mrb[0].mxu0 %v2257
        %v2489 = vpop.f32.mrb[0].mxu0
        %v2490 = vadd.f32 0.0, %v2489
        %v2491 = vpop.f32.mrb[0].mxu0
        %v2492 = vpop.f32.mrb[0].mxu0
        %v2493 = vadd.f32 0.0, %v2492
        %v2494 = vpop.f32.mrb[0].mxu0
        %2495 = vmatprep.mubr.bf16.mxu0 0
        %2496 = vmatmul.mubr.bf16.gmra.mrb[0].mxu0 %v2258
        %v2497 = vpop.f32.mrb[0].mxu0
        %v2498 = vadd.f32 0.0, %v2497
        %v2499 = vpop.f32.mrb[0].mxu0
        %v2500 = vpop.f32.mrb[0].mxu0
        %v2501 = vadd.f32 0.0, %v2500
        %v2502 = vpop.f32.mrb[0].mxu0
        %2503 = vmatprep.mubr.bf16.mxu0 0
        %2504 = vmatmul.mubr.bf16.gmra.mrb[0].mxu0 %v2259
        %v2505 = vpop.f32.mrb[0].mxu0
        %v2506 = vadd.f32 0.0, %v2505
        %v2507 = vpop.f32.mrb[0].mxu0
        %v2508 = vpop.f32.mrb[0].mxu0
        %v2509 = vadd.f32 0.0, %v2508
        %v2510 = vpop.f32.mrb[0].mxu0
        %2511 = vmatprep.mubr.bf16.mxu0 0
        %2512 = vmatmul.mubr.bf16.gmra.mrb[0].mxu0 %v2260
        %v2513 = vpop.f32.mrb[0].mxu0
        %v2514 = vadd.f32 0.0, %v2513
        %v2515 = vpop.f32.mrb[0].mxu0
        %v2516 = vpop.f32.mrb[0].mxu0
        %v2517 = vadd.f32 0.0, %v2516
        %v2518 = vpop.f32.mrb[0].mxu0
        %2519 = vmatprep.mubr.bf16.mxu0 0
        %2520 = vmatmul.mubr.bf16.gmra.mrb[0].mxu0 %v2261
        %v2521 = vpop.f32.mrb[0].mxu0
        %v2522 = vadd.f32 0.0, %v2521
        %v2523 = vpop.f32.mrb[0].mxu0
        %v2524 = vpop.f32.mrb[0].mxu0
        %v2525 = vadd.f32 0.0, %v2524
        %v2526 = vpop.f32.mrb[0].mxu0
        %2527 = vmatprep.mubr.bf16.mxu0 0
        %2528 = vmatmul.mubr.bf16.gmra.mrb[0].mxu0 %v2262
        %v2529 = vpop.f32.mrb[0].mxu0
        %v2530 = vadd.f32 0.0, %v2529
        %v2531 = vpop.f32.mrb[0].mxu0
        %v2532 = vpop.f32.mrb[0].mxu0
        %v2533 = vadd.f32 0.0, %v2532
        %v2534 = vpop.f32.mrb[0].mxu0
        %2535 = vdwg.mxu0
        %v2537 = vlaneseq
        %v2538 = vshrl.u32 %v2537, 7
        %v2539 = vsub.s32 0, %v2538
        %v2540 = vrot.slane %v2238, %v2539
        %v2542 = vadd.f32 %v2346, %v2540
        %v2543 = vadd.f32 %v2349, %v2540
        %v2544 = vadd.f32 %v2354, %v2540
        %v2545 = vadd.f32 %v2357, %v2540
        %v2546 = vadd.f32 %v2362, %v2540
        %v2547 = vadd.f32 %v2365, %v2540
        %v2548 = vadd.f32 %v2370, %v2540
        %v2549 = vadd.f32 %v2373, %v2540
        %v2550 = vadd.f32 %v2378, %v2540
        %v2551 = vadd.f32 %v2381, %v2540
        %v2552 = vadd.f32 %v2386, %v2540
        %v2553 = vadd.f32 %v2389, %v2540
        %v2554 = vadd.f32 %v2394, %v2540
        %v2555 = vadd.f32 %v2397, %v2540
        %v2556 = vadd.f32 %v2402, %v2540
        %v2557 = vadd.f32 %v2405, %v2540
        %v2558 = vadd.f32 %v2410, %v2540
        %v2559 = vadd.f32 %v2413, %v2540
        %v2560 = vadd.f32 %v2418, %v2540
        %v2561 = vadd.f32 %v2421, %v2540
        %v2562 = vadd.f32 %v2426, %v2540
        %v2563 = vadd.f32 %v2429, %v2540
        %v2564 = vadd.f32 %v2434, %v2540
        %v2565 = vadd.f32 %v2437, %v2540
        %v2566 = vadd.f32 %v2442, %v2540
        %v2567 = vadd.f32 %v2445, %v2540
        %v2568 = vadd.f32 %v2450, %v2540
        %v2569 = vadd.f32 %v2453, %v2540
        %v2570 = vadd.f32 %v2458, %v2540
        %v2571 = vadd.f32 %v2461, %v2540
        %v2572 = vadd.f32 %v2466, %v2540
        %v2573 = vadd.f32 %v2469, %v2540
        %v2574 = vadd.f32 %v2474, %v2540
        %v2575 = vadd.f32 %v2477, %v2540
        %v2576 = vadd.f32 %v2482, %v2540
        %v2577 = vadd.f32 %v2485, %v2540
        %v2578 = vadd.f32 %v2490, %v2540
        %v2579 = vadd.f32 %v2493, %v2540
        %v2580 = vadd.f32 %v2498, %v2540
        %v2581 = vadd.f32 %v2501, %v2540
        %v2582 = vadd.f32 %v2506, %v2540
        %v2583 = vadd.f32 %v2509, %v2540
        %v2584 = vadd.f32 %v2514, %v2540
        %v2585 = vadd.f32 %v2517, %v2540
        %v2586 = vadd.f32 %v2522, %v2540
        %v2587 = vadd.f32 %v2525, %v2540
        %v2588 = vadd.f32 %v2530, %v2540
        %v2589 = vadd.f32 %v2533, %v2540
        %s2590 = ssub.s32 %s549, 2
        %v2591 = vstv %s2590
        %v2592 = vadd.s32 %v2591, 1
        %v2593 = vadd.s32 %v2591, 2
        %v2594 = vadd.s32 %v2591, 3
        %v2595 = vadd.s32 %v2591, 4
        %v2596 = vadd.s32 %v2591, 5
        %v2597 = vadd.s32 %v2591, 6
        %v2598 = vadd.s32 %v2591, 7
        %v2599 = vadd.s32 %v2591, 8
        %v2600 = vadd.s32 %v2591, 9
        %v2601 = vadd.s32 %v2591, 10
        %v2602 = vadd.s32 %v2591, 11
        %v2603 = vlaneseq
        %v2604 = vshrl.u32 %v2603, 7
        %v2605 = vadd.s32 %v2604, 8
        %v2606 = vadd.s32 %v2604, 16
        %v2607 = vadd.s32 %v2604, 24
        %vm2608 = vcmp.ge.s32.totalorder %v2591, 0
        %vm2609 = vcmp.ge.s32.totalorder %v2592, 0
        %vm2610 = vcmp.ge.s32.totalorder %v2593, 0
        %vm2611 = vcmp.ge.s32.totalorder %v2594, 0
        %vm2612 = vcmp.ge.s32.totalorder %v2595, 0
        %vm2613 = vcmp.ge.s32.totalorder %v2596, 0
        %vm2614 = vcmp.ge.s32.totalorder %v2597, 0
        %vm2615 = vcmp.ge.s32.totalorder %v2598, 0
        %vm2616 = vcmp.ge.s32.totalorder %v2599, 0
        %vm2617 = vcmp.ge.s32.totalorder %v2600, 0
        %vm2618 = vcmp.ge.s32.totalorder %v2601, 0
        %vm2619 = vcmp.ge.s32.totalorder %v2602, 0
        %vm2620 = vcmp.lt.s32.totalorder %v2591, 16
        %vm2621 = vcmp.lt.s32.totalorder %v2592, 16
        %vm2622 = vcmp.lt.s32.totalorder %v2593, 16
        %vm2623 = vcmp.lt.s32.totalorder %v2594, 16
        %vm2624 = vcmp.lt.s32.totalorder %v2595, 16
        %vm2625 = vcmp.lt.s32.totalorder %v2596, 16
        %vm2626 = vcmp.lt.s32.totalorder %v2597, 16
        %vm2627 = vcmp.lt.s32.totalorder %v2598, 16
        %vm2628 = vcmp.lt.s32.totalorder %v2599, 16
        %vm2629 = vcmp.lt.s32.totalorder %v2600, 16
        %vm2630 = vcmp.lt.s32.totalorder %v2601, 16
        %vm2631 = vcmp.lt.s32.totalorder %v2602, 16
        %vm2632 = vmand %vm2608, %vm2620
        %vm2633 = vmand %vm2609, %vm2621
        %vm2634 = vmand %vm2610, %vm2622
        %vm2635 = vmand %vm2611, %vm2623
        %vm2636 = vmand %vm2612, %vm2624
        %vm2637 = vmand %vm2613, %vm2625
        %vm2638 = vmand %vm2614, %vm2626
        %vm2639 = vmand %vm2615, %vm2627
        %vm2640 = vmand %vm2616, %vm2628
        %vm2641 = vmand %vm2617, %vm2629
        %vm2642 = vmand %vm2618, %vm2630
        %vm2643 = vmand %vm2619, %vm2631
        %vm2644 = vcmp.ge.s32.totalorder %v2604, 2
        %vm2645 = vcmp.ge.s32.totalorder %v2605, 2
        %vm2646 = vcmp.ge.s32.totalorder %v2606, 2
        %vm2647 = vcmp.ge.s32.totalorder %v2607, 2
        %vm2648 = vmand %vm2632, %vm2644
        %vm2649 = vmand %vm2632, %vm2645
        %vm2650 = vmand %vm2632, %vm2646
        %vm2651 = vmand %vm2632, %vm2647
        %vm2652 = vmand %vm2633, %vm2644
        %vm2653 = vmand %vm2633, %vm2645
        %vm2654 = vmand %vm2633, %vm2646
        %vm2655 = vmand %vm2633, %vm2647
        %vm2656 = vmand %vm2634, %vm2644
        %vm2657 = vmand %vm2634, %vm2645
        %vm2658 = vmand %vm2634, %vm2646
        %vm2659 = vmand %vm2634, %vm2647
        %vm2660 = vmand %vm2635, %vm2644
        %vm2661 = vmand %vm2635, %vm2645
        %vm2662 = vmand %vm2635, %vm2646
        %vm2663 = vmand %vm2635, %vm2647
        %vm2664 = vmand %vm2636, %vm2644
        %vm2665 = vmand %vm2636, %vm2645
        %vm2666 = vmand %vm2636, %vm2646
        %vm2667 = vmand %vm2636, %vm2647
        %vm2668 = vmand %vm2637, %vm2644
        %vm2669 = vmand %vm2637, %vm2645
        %vm2670 = vmand %vm2637, %vm2646
        %vm2671 = vmand %vm2637, %vm2647
        %vm2672 = vmand %vm2638, %vm2644
        %vm2673 = vmand %vm2638, %vm2645
        %vm2674 = vmand %vm2638, %vm2646
        %vm2675 = vmand %vm2638, %vm2647
        %vm2676 = vmand %vm2639, %vm2644
        %vm2677 = vmand %vm2639, %vm2645
        %vm2678 = vmand %vm2639, %vm2646
        %vm2679 = vmand %vm2639, %vm2647
        %vm2680 = vmand %vm2640, %vm2644
        %vm2681 = vmand %vm2640, %vm2645
        %vm2682 = vmand %vm2640, %vm2646
        %vm2683 = vmand %vm2640, %vm2647
        %vm2684 = vmand %vm2641, %vm2644
        %vm2685 = vmand %vm2641, %vm2645
        %vm2686 = vmand %vm2641, %vm2646
        %vm2687 = vmand %vm2641, %vm2647
        %vm2688 = vmand %vm2642, %vm2644
        %vm2689 = vmand %vm2642, %vm2645
        %vm2690 = vmand %vm2642, %vm2646
        %vm2691 = vmand %vm2642, %vm2647
        %vm2692 = vmand %vm2643, %vm2644
        %vm2693 = vmand %vm2643, %vm2645
        %vm2694 = vmand %vm2643, %vm2646
        %vm2695 = vmand %vm2643, %vm2647
        %vm2696 = vcmp.lt.s32.totalorder %v2604, 18
        %vm2697 = vcmp.lt.s32.totalorder %v2605, 18
        %vm2698 = vcmp.lt.s32.totalorder %v2606, 18
        %vm2699 = vcmp.lt.s32.totalorder %v2607, 18
        %vm2700 = vmand %vm2648, %vm2696
        %vm2701 = vmand %vm2649, %vm2697
        %vm2702 = vmand %vm2650, %vm2698
        %vm2703 = vmand %vm2651, %vm2699
        %vm2704 = vmand %vm2652, %vm2696
        %vm2705 = vmand %vm2653, %vm2697
        %vm2706 = vmand %vm2654, %vm2698
        %vm2707 = vmand %vm2655, %vm2699
        %vm2708 = vmand %vm2656, %vm2696
        %vm2709 = vmand %vm2657, %vm2697
        %vm2710 = vmand %vm2658, %vm2698
        %vm2711 = vmand %vm2659, %vm2699
        %vm2712 = vmand %vm2660, %vm2696
        %vm2713 = vmand %vm2661, %vm2697
        %vm2714 = vmand %vm2662, %vm2698
        %vm2715 = vmand %vm2663, %vm2699
        %vm2716 = vmand %vm2664, %vm2696
        %vm2717 = vmand %vm2665, %vm2697
        %vm2718 = vmand %vm2666, %vm2698
        %vm2719 = vmand %vm2667, %vm2699
        %vm2720 = vmand %vm2668, %vm2696
        %vm2721 = vmand %vm2669, %vm2697
        %vm2722 = vmand %vm2670, %vm2698
        %vm2723 = vmand %vm2671, %vm2699
        %vm2724 = vmand %vm2672, %vm2696
        %vm2725 = vmand %vm2673, %vm2697
        %vm2726 = vmand %vm2674, %vm2698
        %vm2727 = vmand %vm2675, %vm2699
        %vm2728 = vmand %vm2676, %vm2696
        %vm2729 = vmand %vm2677, %vm2697
        %vm2730 = vmand %vm2678, %vm2698
        %vm2731 = vmand %vm2679, %vm2699
        %vm2732 = vmand %vm2680, %vm2696
        %vm2733 = vmand %vm2681, %vm2697
        %vm2734 = vmand %vm2682, %vm2698
        %vm2735 = vmand %vm2683, %vm2699
        %vm2736 = vmand %vm2684, %vm2696
        %vm2737 = vmand %vm2685, %vm2697
        %vm2738 = vmand %vm2686, %vm2698
        %vm2739 = vmand %vm2687, %vm2699
        %vm2740 = vmand %vm2688, %vm2696
        %vm2741 = vmand %vm2689, %vm2697
        %vm2742 = vmand %vm2690, %vm2698
        %vm2743 = vmand %vm2691, %vm2699
        %vm2744 = vmand %vm2692, %vm2696
        %vm2745 = vmand %vm2693, %vm2697
        %vm2746 = vmand %vm2694, %vm2698
        %vm2747 = vmand %vm2695, %vm2699
        %vm2748 = vcmp.gt.f32.partialorder %v2542, 0.0
        %vm2749 = vcmp.gt.f32.partialorder %v2543, 0.0
        %vm2750 = vcmp.gt.f32.partialorder %v2544, 0.0
        %vm2751 = vcmp.gt.f32.partialorder %v2545, 0.0
        %vm2752 = vcmp.gt.f32.partialorder %v2546, 0.0
        %vm2753 = vcmp.gt.f32.partialorder %v2547, 0.0
        %vm2754 = vcmp.gt.f32.partialorder %v2548, 0.0
        %vm2755 = vcmp.gt.f32.partialorder %v2549, 0.0
        %vm2756 = vcmp.gt.f32.partialorder %v2550, 0.0
        %vm2757 = vcmp.gt.f32.partialorder %v2551, 0.0
        %vm2758 = vcmp.gt.f32.partialorder %v2552, 0.0
        %vm2759 = vcmp.gt.f32.partialorder %v2553, 0.0
        %vm2760 = vcmp.gt.f32.partialorder %v2554, 0.0
        %vm2761 = vcmp.gt.f32.partialorder %v2555, 0.0
        %vm2762 = vcmp.gt.f32.partialorder %v2556, 0.0
        %vm2763 = vcmp.gt.f32.partialorder %v2557, 0.0
        %vm2764 = vcmp.gt.f32.partialorder %v2558, 0.0
        %vm2765 = vcmp.gt.f32.partialorder %v2559, 0.0
        %vm2766 = vcmp.gt.f32.partialorder %v2560, 0.0
        %vm2767 = vcmp.gt.f32.partialorder %v2561, 0.0
        %vm2768 = vcmp.gt.f32.partialorder %v2562, 0.0
        %vm2769 = vcmp.gt.f32.partialorder %v2563, 0.0
        %vm2770 = vcmp.gt.f32.partialorder %v2564, 0.0
        %vm2771 = vcmp.gt.f32.partialorder %v2565, 0.0
        %vm2772 = vcmp.gt.f32.partialorder %v2566, 0.0
        %vm2773 = vcmp.gt.f32.partialorder %v2567, 0.0
        %vm2774 = vcmp.gt.f32.partialorder %v2568, 0.0
        %vm2775 = vcmp.gt.f32.partialorder %v2569, 0.0
        %vm2776 = vcmp.gt.f32.partialorder %v2570, 0.0
        %vm2777 = vcmp.gt.f32.partialorder %v2571, 0.0
        %vm2778 = vcmp.gt.f32.partialorder %v2572, 0.0
        %vm2779 = vcmp.gt.f32.partialorder %v2573, 0.0
        %vm2780 = vcmp.gt.f32.partialorder %v2574, 0.0
        %vm2781 = vcmp.gt.f32.partialorder %v2575, 0.0
        %vm2782 = vcmp.gt.f32.partialorder %v2576, 0.0
        %vm2783 = vcmp.gt.f32.partialorder %v2577, 0.0
        %vm2784 = vcmp.gt.f32.partialorder %v2578, 0.0
        %vm2785 = vcmp.gt.f32.partialorder %v2579, 0.0
        %vm2786 = vcmp.gt.f32.partialorder %v2580, 0.0
        %vm2787 = vcmp.gt.f32.partialorder %v2581, 0.0
        %vm2788 = vcmp.gt.f32.partialorder %v2582, 0.0
        %vm2789 = vcmp.gt.f32.partialorder %v2583, 0.0
        %vm2790 = vcmp.gt.f32.partialorder %v2584, 0.0
        %vm2791 = vcmp.gt.f32.partialorder %v2585, 0.0
        %vm2792 = vcmp.gt.f32.partialorder %v2586, 0.0
        %vm2793 = vcmp.gt.f32.partialorder %v2587, 0.0
        %vm2794 = vcmp.gt.f32.partialorder %v2588, 0.0
        %vm2795 = vcmp.gt.f32.partialorder %v2589, 0.0
        %v2796 = vsel %vm2700, 1, 0
        %v2797 = vsel %vm2701, 1, 0
        %v2798 = vsel %vm2702, 1, 0
        %v2799 = vsel %vm2703, 1, 0
        %v2800 = vsel %vm2704, 1, 0
        %v2801 = vsel %vm2705, 1, 0
        %v2802 = vsel %vm2706, 1, 0
        %v2803 = vsel %vm2707, 1, 0
        %v2804 = vsel %vm2708, 1, 0
        %v2805 = vsel %vm2709, 1, 0
        %v2806 = vsel %vm2710, 1, 0
        %v2807 = vsel %vm2711, 1, 0
        %v2808 = vsel %vm2712, 1, 0
        %v2809 = vsel %vm2713, 1, 0
        %v2810 = vsel %vm2714, 1, 0
        %v2811 = vsel %vm2715, 1, 0
        %v2812 = vsel %vm2716, 1, 0
        %v2813 = vsel %vm2717, 1, 0
        %v2814 = vsel %vm2718, 1, 0
        %v2815 = vsel %vm2719, 1, 0
        %v2816 = vsel %vm2720, 1, 0
        %v2817 = vsel %vm2721, 1, 0
        %v2818 = vsel %vm2722, 1, 0
        %v2819 = vsel %vm2723, 1, 0
        %v2820 = vsel %vm2724, 1, 0
        %v2821 = vsel %vm2725, 1, 0
        %v2822 = vsel %vm2726, 1, 0
        %v2823 = vsel %vm2727, 1, 0
        %v2824 = vsel %vm2728, 1, 0
        %v2825 = vsel %vm2729, 1, 0
        %v2826 = vsel %vm2730, 1, 0
        %v2827 = vsel %vm2731, 1, 0
        %v2828 = vsel %vm2732, 1, 0
        %v2829 = vsel %vm2733, 1, 0
        %v2830 = vsel %vm2734, 1, 0
        %v2831 = vsel %vm2735, 1, 0
        %v2832 = vsel %vm2736, 1, 0
        %v2833 = vsel %vm2737, 1, 0
        %v2834 = vsel %vm2738, 1, 0
        %v2835 = vsel %vm2739, 1, 0
        %v2836 = vsel %vm2740, 1, 0
        %v2837 = vsel %vm2741, 1, 0
        %v2838 = vsel %vm2742, 1, 0
        %v2839 = vsel %vm2743, 1, 0
        %v2840 = vsel %vm2744, 1, 0
        %v2841 = vsel %vm2745, 1, 0
        %v2842 = vsel %vm2746, 1, 0
        %v2843 = vsel %vm2747, 1, 0
        %vm2844 = vcmp.eq.s32.totalorder %v2796, 1
        %vm2845 = vcmp.eq.s32.totalorder %v2797, 1
        %vm2846 = vcmp.eq.s32.totalorder %v2798, 1
        %vm2847 = vcmp.eq.s32.totalorder %v2799, 1
        %vm2848 = vcmp.eq.s32.totalorder %v2800, 1
        %vm2849 = vcmp.eq.s32.totalorder %v2801, 1
        %vm2850 = vcmp.eq.s32.totalorder %v2802, 1
        %vm2851 = vcmp.eq.s32.totalorder %v2803, 1
        %vm2852 = vcmp.eq.s32.totalorder %v2804, 1
        %vm2853 = vcmp.eq.s32.totalorder %v2805, 1
        %vm2854 = vcmp.eq.s32.totalorder %v2806, 1
        %vm2855 = vcmp.eq.s32.totalorder %v2807, 1
        %vm2856 = vcmp.eq.s32.totalorder %v2808, 1
        %vm2857 = vcmp.eq.s32.totalorder %v2809, 1
        %vm2858 = vcmp.eq.s32.totalorder %v2810, 1
        %vm2859 = vcmp.eq.s32.totalorder %v2811, 1
        %vm2860 = vcmp.eq.s32.totalorder %v2812, 1
        %vm2861 = vcmp.eq.s32.totalorder %v2813, 1
        %vm2862 = vcmp.eq.s32.totalorder %v2814, 1
        %vm2863 = vcmp.eq.s32.totalorder %v2815, 1
        %vm2864 = vcmp.eq.s32.totalorder %v2816, 1
        %vm2865 = vcmp.eq.s32.totalorder %v2817, 1
        %vm2866 = vcmp.eq.s32.totalorder %v2818, 1
        %vm2867 = vcmp.eq.s32.totalorder %v2819, 1
        %vm2868 = vcmp.eq.s32.totalorder %v2820, 1
        %vm2869 = vcmp.eq.s32.totalorder %v2821, 1
        %vm2870 = vcmp.eq.s32.totalorder %v2822, 1
        %vm2871 = vcmp.eq.s32.totalorder %v2823, 1
        %vm2872 = vcmp.eq.s32.totalorder %v2824, 1
        %vm2873 = vcmp.eq.s32.totalorder %v2825, 1
        %vm2874 = vcmp.eq.s32.totalorder %v2826, 1
        %vm2875 = vcmp.eq.s32.totalorder %v2827, 1
        %vm2876 = vcmp.eq.s32.totalorder %v2828, 1
        %vm2877 = vcmp.eq.s32.totalorder %v2829, 1
        %vm2878 = vcmp.eq.s32.totalorder %v2830, 1
        %vm2879 = vcmp.eq.s32.totalorder %v2831, 1
        %vm2880 = vcmp.eq.s32.totalorder %v2832, 1
        %vm2881 = vcmp.eq.s32.totalorder %v2833, 1
        %vm2882 = vcmp.eq.s32.totalorder %v2834, 1
        %vm2883 = vcmp.eq.s32.totalorder %v2835, 1
        %vm2884 = vcmp.eq.s32.totalorder %v2836, 1
        %vm2885 = vcmp.eq.s32.totalorder %v2837, 1
        %vm2886 = vcmp.eq.s32.totalorder %v2838, 1
        %vm2887 = vcmp.eq.s32.totalorder %v2839, 1
        %vm2888 = vcmp.eq.s32.totalorder %v2840, 1
        %vm2889 = vcmp.eq.s32.totalorder %v2841, 1
        %vm2890 = vcmp.eq.s32.totalorder %v2842, 1
        %vm2891 = vcmp.eq.s32.totalorder %v2843, 1
        %vm2892 = vmand %vm2844, %vm2748
        %vm2893 = vmand %vm2845, %vm2749
        %vm2894 = vmand %vm2846, %vm2750
        %vm2895 = vmand %vm2847, %vm2751
        %vm2896 = vmand %vm2848, %vm2752
        %vm2897 = vmand %vm2849, %vm2753
        %vm2898 = vmand %vm2850, %vm2754
        %vm2899 = vmand %vm2851, %vm2755
        %vm2900 = vmand %vm2852, %vm2756
        %vm2901 = vmand %vm2853, %vm2757
        %vm2902 = vmand %vm2854, %vm2758
        %vm2903 = vmand %vm2855, %vm2759
        %vm2904 = vmand %vm2856, %vm2760
        %vm2905 = vmand %vm2857, %vm2761
        %vm2906 = vmand %vm2858, %vm2762
        %vm2907 = vmand %vm2859, %vm2763
        %vm2908 = vmand %vm2860, %vm2764
        %vm2909 = vmand %vm2861, %vm2765
        %vm2910 = vmand %vm2862, %vm2766
        %vm2911 = vmand %vm2863, %vm2767
        %vm2912 = vmand %vm2864, %vm2768
        %vm2913 = vmand %vm2865, %vm2769
        %vm2914 = vmand %vm2866, %vm2770
        %vm2915 = vmand %vm2867, %vm2771
        %vm2916 = vmand %vm2868, %vm2772
        %vm2917 = vmand %vm2869, %vm2773
        %vm2918 = vmand %vm2870, %vm2774
        %vm2919 = vmand %vm2871, %vm2775
        %vm2920 = vmand %vm2872, %vm2776
        %vm2921 = vmand %vm2873, %vm2777
        %vm2922 = vmand %vm2874, %vm2778
        %vm2923 = vmand %vm2875, %vm2779
        %vm2924 = vmand %vm2876, %vm2780
        %vm2925 = vmand %vm2877, %vm2781
        %vm2926 = vmand %vm2878, %vm2782
        %vm2927 = vmand %vm2879, %vm2783
        %vm2928 = vmand %vm2880, %vm2784
        %vm2929 = vmand %vm2881, %vm2785
        %vm2930 = vmand %vm2882, %vm2786
        %vm2931 = vmand %vm2883, %vm2787
        %vm2932 = vmand %vm2884, %vm2788
        %vm2933 = vmand %vm2885, %vm2789
        %vm2934 = vmand %vm2886, %vm2790
        %vm2935 = vmand %vm2887, %vm2791
        %vm2936 = vmand %vm2888, %vm2792
        %vm2937 = vmand %vm2889, %vm2793
        %vm2938 = vmand %vm2890, %vm2794
        %vm2939 = vmand %vm2891, %vm2795
        %v2940 = vsel %vm2892, %v2542, 0.0
        %v2941 = vsel %vm2893, %v2543, 0.0
        %v2942 = vsel %vm2894, %v2544, 0.0
        %v2943 = vsel %vm2895, %v2545, 0.0
        %v2944 = vsel %vm2896, %v2546, 0.0
        %v2945 = vsel %vm2897, %v2547, 0.0
        %v2946 = vsel %vm2898, %v2548, 0.0
        %v2947 = vsel %vm2899, %v2549, 0.0
        %v2948 = vsel %vm2900, %v2550, 0.0
        %v2949 = vsel %vm2901, %v2551, 0.0
        %v2950 = vsel %vm2902, %v2552, 0.0
        %v2951 = vsel %vm2903, %v2553, 0.0
        %v2952 = vsel %vm2904, %v2554, 0.0
        %v2953 = vsel %vm2905, %v2555, 0.0
        %v2954 = vsel %vm2906, %v2556, 0.0
        %v2955 = vsel %vm2907, %v2557, 0.0
        %v2956 = vsel %vm2908, %v2558, 0.0
        %v2957 = vsel %vm2909, %v2559, 0.0
        %v2958 = vsel %vm2910, %v2560, 0.0
        %v2959 = vsel %vm2911, %v2561, 0.0
        %v2960 = vsel %vm2912, %v2562, 0.0
        %v2961 = vsel %vm2913, %v2563, 0.0
        %v2962 = vsel %vm2914, %v2564, 0.0
        %v2963 = vsel %vm2915, %v2565, 0.0
        %v2964 = vsel %vm2916, %v2566, 0.0
        %v2965 = vsel %vm2917, %v2567, 0.0
        %v2966 = vsel %vm2918, %v2568, 0.0
        %v2967 = vsel %vm2919, %v2569, 0.0
        %v2968 = vsel %vm2920, %v2570, 0.0
        %v2969 = vsel %vm2921, %v2571, 0.0
        %v2970 = vsel %vm2922, %v2572, 0.0
        %v2971 = vsel %vm2923, %v2573, 0.0
        %v2972 = vsel %vm2924, %v2574, 0.0
        %v2973 = vsel %vm2925, %v2575, 0.0
        %v2974 = vsel %vm2926, %v2576, 0.0
        %v2975 = vsel %vm2927, %v2577, 0.0
        %v2976 = vsel %vm2928, %v2578, 0.0
        %v2977 = vsel %vm2929, %v2579, 0.0
        %v2978 = vsel %vm2930, %v2580, 0.0
        %v2979 = vsel %vm2931, %v2581, 0.0
        %v2980 = vsel %vm2932, %v2582, 0.0
        %v2981 = vsel %vm2933, %v2583, 0.0
        %v2982 = vsel %vm2934, %v2584, 0.0
        %v2983 = vsel %vm2935, %v2585, 0.0
        %v2984 = vsel %vm2936, %v2586, 0.0
        %v2985 = vsel %vm2937, %v2587, 0.0
        %v2986 = vsel %vm2938, %v2588, 0.0
        %v2987 = vsel %vm2939, %v2589, 0.0
        %v2988 = vld [vmem:[%s7] sm:$0x7]
        %v2989 = vld [vmem:[%s7 + $0x4] sm:$0x7]
        %v2990 = vld [vmem:[%s7 + $0x8] sm:$0x7]
        %v2991 = vlaneseq
        %v2992 = vshrl.u32 %v2991, 7
        %v2993 = vsub.s32 0, %v2992
        %v2994 = vrot.slane %v2988, %v2993
        %v2995 = vmul.f32 %v2940, %v2994
        %v2996 = vmul.f32 %v2941, %v2994
        %v2997 = vmul.f32 %v2942, %v2994
        %v2998 = vmul.f32 %v2944, %v2994
        %v2999 = vmul.f32 %v2945, %v2994
        %v3000 = vmul.f32 %v2946, %v2994
        %v3001 = vmul.f32 %v2948, %v2994
        %v3002 = vmul.f32 %v2949, %v2994
        %v3003 = vmul.f32 %v2950, %v2994
        %v3004 = vmul.f32 %v2952, %v2994
        %v3005 = vmul.f32 %v2953, %v2994
        %v3006 = vmul.f32 %v2954, %v2994
        %v3007 = vmul.f32 %v2956, %v2994
        %v3008 = vmul.f32 %v2957, %v2994
        %v3009 = vmul.f32 %v2958, %v2994
        %v3010 = vmul.f32 %v2960, %v2994
        %v3011 = vmul.f32 %v2961, %v2994
        %v3012 = vmul.f32 %v2962, %v2994
        %v3013 = vmul.f32 %v2964, %v2994
        %v3014 = vmul.f32 %v2965, %v2994
        %v3015 = vmul.f32 %v2966, %v2994
        %v3016 = vmul.f32 %v2968, %v2994
        %v3017 = vmul.f32 %v2969, %v2994
        %v3018 = vmul.f32 %v2970, %v2994
        %v3019 = vmul.f32 %v2972, %v2994
        %v3020 = vmul.f32 %v2973, %v2994
        %v3021 = vmul.f32 %v2974, %v2994
        %v3022 = vmul.f32 %v2976, %v2994
        %v3023 = vmul.f32 %v2977, %v2994
        %v3024 = vmul.f32 %v2978, %v2994
        %v3025 = vlaneseq
        %v3026 = vshrl.u32 %v3025, 7
        %v3027 = vsub.s32 0, %v3026
        %v3028 = vrot.slane %v2989, %v3027
        %v3029 = vmul.f32 %v2944, %v3028
        %v3030 = vmul.f32 %v2945, %v3028
        %v3031 = vmul.f32 %v2946, %v3028
        %v3032 = vmul.f32 %v2948, %v3028
        %v3033 = vmul.f32 %v2949, %v3028
        %v3034 = vmul.f32 %v2950, %v3028
        %v3035 = vmul.f32 %v2952, %v3028
        %v3036 = vmul.f32 %v2953, %v3028
        %v3037 = vmul.f32 %v2954, %v3028
        %v3038 = vmul.f32 %v2956, %v3028
        %v3039 = vmul.f32 %v2957, %v3028
        %v3040 = vmul.f32 %v2958, %v3028
        %v3041 = vmul.f32 %v2960, %v3028
        %v3042 = vmul.f32 %v2961, %v3028
        %v3043 = vmul.f32 %v2962, %v3028
        %v3044 = vmul.f32 %v2964, %v3028
        %v3045 = vmul.f32 %v2965, %v3028
        %v3046 = vmul.f32 %v2966, %v3028
        %v3047 = vmul.f32 %v2968, %v3028
        %v3048 = vmul.f32 %v2969, %v3028
        %v3049 = vmul.f32 %v2970, %v3028
        %v3050 = vmul.f32 %v2972, %v3028
        %v3051 = vmul.f32 %v2973, %v3028
        %v3052 = vmul.f32 %v2974, %v3028
        %v3053 = vmul.f32 %v2976, %v3028
        %v3054 = vmul.f32 %v2977, %v3028
        %v3055 = vmul.f32 %v2978, %v3028
        %v3056 = vmul.f32 %v2980, %v3028
        %v3057 = vmul.f32 %v2981, %v3028
        %v3058 = vmul.f32 %v2982, %v3028
        %v3059 = vadd.f32 %v2995, %v3029
        %v3060 = vadd.f32 %v2996, %v3030
        %v3061 = vadd.f32 %v2997, %v3031
        %v3062 = vadd.f32 %v2998, %v3032
        %v3063 = vadd.f32 %v2999, %v3033
        %v3064 = vadd.f32 %v3000, %v3034
        %v3065 = vadd.f32 %v3001, %v3035
        %v3066 = vadd.f32 %v3002, %v3036
        %v3067 = vadd.f32 %v3003, %v3037
        %v3068 = vadd.f32 %v3004, %v3038
        %v3069 = vadd.f32 %v3005, %v3039
        %v3070 = vadd.f32 %v3006, %v3040
        %v3071 = vadd.f32 %v3007, %v3041
        %v3072 = vadd.f32 %v3008, %v3042
        %v3073 = vadd.f32 %v3009, %v3043
        %v3074 = vadd.f32 %v3010, %v3044
        %v3075 = vadd.f32 %v3011, %v3045
        %v3076 = vadd.f32 %v3012, %v3046
        %v3077 = vadd.f32 %v3013, %v3047
        %v3078 = vadd.f32 %v3014, %v3048
        %v3079 = vadd.f32 %v3015, %v3049
        %v3080 = vadd.f32 %v3016, %v3050
        %v3081 = vadd.f32 %v3017, %v3051
        %v3082 = vadd.f32 %v3018, %v3052
        %v3083 = vadd.f32 %v3019, %v3053
        %v3084 = vadd.f32 %v3020, %v3054
        %v3085 = vadd.f32 %v3021, %v3055
        %v3086 = vadd.f32 %v3022, %v3056
        %v3087 = vadd.f32 %v3023, %v3057
        %v3088 = vadd.f32 %v3024, %v3058
        %v3089 = vlaneseq
        %v3090 = vshrl.u32 %v3089, 7
        %v3091 = vsub.s32 0, %v3090
        %v3092 = vrot.slane %v2990, %v3091
        %v3093 = vmul.f32 %v2948, %v3092
        %v3094 = vmul.f32 %v2949, %v3092
        %v3095 = vmul.f32 %v2950, %v3092
        %v3096 = vmul.f32 %v2952, %v3092
        %v3097 = vmul.f32 %v2953, %v3092
        %v3098 = vmul.f32 %v2954, %v3092
        %v3099 = vmul.f32 %v2956, %v3092
        %v3100 = vmul.f32 %v2957, %v3092
        %v3101 = vmul.f32 %v2958, %v3092
        %v3102 = vmul.f32 %v2960, %v3092
        %v3103 = vmul.f32 %v2961, %v3092
        %v3104 = vmul.f32 %v2962, %v3092
        %v3105 = vmul.f32 %v2964, %v3092
        %v3106 = vmul.f32 %v2965, %v3092
        %v3107 = vmul.f32 %v2966, %v3092
        %v3108 = vmul.f32 %v2968, %v3092
        %v3109 = vmul.f32 %v2969, %v3092
        %v3110 = vmul.f32 %v2970, %v3092
        %v3111 = vmul.f32 %v2972, %v3092
        %v3112 = vmul.f32 %v2973, %v3092
        %v3113 = vmul.f32 %v2974, %v3092
        %v3114 = vmul.f32 %v2976, %v3092
        %v3115 = vmul.f32 %v2977, %v3092
        %v3116 = vmul.f32 %v2978, %v3092
        %v3117 = vmul.f32 %v2980, %v3092
        %v3118 = vmul.f32 %v2981, %v3092
        %v3119 = vmul.f32 %v2982, %v3092
        %v3120 = vmul.f32 %v2984, %v3092
        %v3121 = vmul.f32 %v2985, %v3092
        %v3122 = vmul.f32 %v2986, %v3092
        %v3123 = vadd.f32 %v3059, %v3093
        %v3124 = vadd.f32 %v3060, %v3094
        %v3125 = vadd.f32 %v3061, %v3095
        %v3126 = vadd.f32 %v3062, %v3096
        %v3127 = vadd.f32 %v3063, %v3097
        %v3128 = vadd.f32 %v3064, %v3098
        %v3129 = vadd.f32 %v3065, %v3099
        %v3130 = vadd.f32 %v3066, %v3100
        %v3131 = vadd.f32 %v3067, %v3101
        %v3132 = vadd.f32 %v3068, %v3102
        %v3133 = vadd.f32 %v3069, %v3103
        %v3134 = vadd.f32 %v3070, %v3104
        %v3135 = vadd.f32 %v3071, %v3105
        %v3136 = vadd.f32 %v3072, %v3106
        %v3137 = vadd.f32 %v3073, %v3107
        %v3138 = vadd.f32 %v3074, %v3108
        %v3139 = vadd.f32 %v3075, %v3109
        %v3140 = vadd.f32 %v3076, %v3110
        %v3141 = vadd.f32 %v3077, %v3111
        %v3142 = vadd.f32 %v3078, %v3112
        %v3143 = vadd.f32 %v3079, %v3113
        %v3144 = vadd.f32 %v3080, %v3114
        %v3145 = vadd.f32 %v3081, %v3115
        %v3146 = vadd.f32 %v3082, %v3116
        %v3147 = vadd.f32 %v3083, %v3117
        %v3148 = vadd.f32 %v3084, %v3118
        %v3149 = vadd.f32 %v3085, %v3119
        %v3150 = vadd.f32 %v3086, %v3120
        %v3151 = vadd.f32 %v3087, %v3121
        %v3152 = vadd.f32 %v3088, %v3122
        %v3153 = vlaneseq
        %v3154 = vshrl.u32 %v3153, 7
        %v3155 = vsub.s32 1, %v3154
        %v3156 = vrot.slane %v2988, %v3155
        %v3157 = vmul.f32 %v2940, %v3156
        %v3158 = vmul.f32 %v2941, %v3156
        %v3159 = vmul.f32 %v2942, %v3156
        %v3160 = vmul.f32 %v2943, %v3156
        %v3161 = vmul.f32 %v2944, %v3156
        %v3162 = vmul.f32 %v2945, %v3156
        %v3163 = vmul.f32 %v2946, %v3156
        %v3164 = vmul.f32 %v2947, %v3156
        %v3165 = vmul.f32 %v2948, %v3156
        %v3166 = vmul.f32 %v2949, %v3156
        %v3167 = vmul.f32 %v2950, %v3156
        %v3168 = vmul.f32 %v2951, %v3156
        %v3169 = vmul.f32 %v2952, %v3156
        %v3170 = vmul.f32 %v2953, %v3156
        %v3171 = vmul.f32 %v2954, %v3156
        %v3172 = vmul.f32 %v2955, %v3156
        %v3173 = vmul.f32 %v2956, %v3156
        %v3174 = vmul.f32 %v2957, %v3156
        %v3175 = vmul.f32 %v2958, %v3156
        %v3176 = vmul.f32 %v2959, %v3156
        %v3177 = vmul.f32 %v2960, %v3156
        %v3178 = vmul.f32 %v2961, %v3156
        %v3179 = vmul.f32 %v2962, %v3156
        %v3180 = vmul.f32 %v2963, %v3156
        %v3181 = vmul.f32 %v2964, %v3156
        %v3182 = vmul.f32 %v2965, %v3156
        %v3183 = vmul.f32 %v2966, %v3156
        %v3184 = vmul.f32 %v2967, %v3156
        %v3185 = vmul.f32 %v2968, %v3156
        %v3186 = vmul.f32 %v2969, %v3156
        %v3187 = vmul.f32 %v2970, %v3156
        %v3188 = vmul.f32 %v2971, %v3156
        %v3189 = vmul.f32 %v2972, %v3156
        %v3190 = vmul.f32 %v2973, %v3156
        %v3191 = vmul.f32 %v2974, %v3156
        %v3192 = vmul.f32 %v2975, %v3156
        %v3193 = vmul.f32 %v2976, %v3156
        %v3194 = vmul.f32 %v2977, %v3156
        %v3195 = vmul.f32 %v2978, %v3156
        %v3196 = vmul.f32 %v2979, %v3156
        %v3197 = vlaneseq
        %v3198 = vshrl.u32 %v3197, 7
        %v3199 = vsub.s32 1, %v3198
        %v3200 = vrot.slane %v2989, %v3199
        %v3201 = vmul.f32 %v2944, %v3200
        %v3202 = vmul.f32 %v2945, %v3200
        %v3203 = vmul.f32 %v2946, %v3200
        %v3204 = vmul.f32 %v2947, %v3200
        %v3205 = vmul.f32 %v2948, %v3200
        %v3206 = vmul.f32 %v2949, %v3200
        %v3207 = vmul.f32 %v2950, %v3200
        %v3208 = vmul.f32 %v2951, %v3200
        %v3209 = vmul.f32 %v2952, %v3200
        %v3210 = vmul.f32 %v2953, %v3200
        %v3211 = vmul.f32 %v2954, %v3200
        %v3212 = vmul.f32 %v2955, %v3200
        %v3213 = vmul.f32 %v2956, %v3200
        %v3214 = vmul.f32 %v2957, %v3200
        %v3215 = vmul.f32 %v2958, %v3200
        %v3216 = vmul.f32 %v2959, %v3200
        %v3217 = vmul.f32 %v2960, %v3200
        %v3218 = vmul.f32 %v2961, %v3200
        %v3219 = vmul.f32 %v2962, %v3200
        %v3220 = vmul.f32 %v2963, %v3200
        %v3221 = vmul.f32 %v2964, %v3200
        %v3222 = vmul.f32 %v2965, %v3200
        %v3223 = vmul.f32 %v2966, %v3200
        %v3224 = vmul.f32 %v2967, %v3200
        %v3225 = vmul.f32 %v2968, %v3200
        %v3226 = vmul.f32 %v2969, %v3200
        %v3227 = vmul.f32 %v2970, %v3200
        %v3228 = vmul.f32 %v2971, %v3200
        %v3229 = vmul.f32 %v2972, %v3200
        %v3230 = vmul.f32 %v2973, %v3200
        %v3231 = vmul.f32 %v2974, %v3200
        %v3232 = vmul.f32 %v2975, %v3200
        %v3233 = vmul.f32 %v2976, %v3200
        %v3234 = vmul.f32 %v2977, %v3200
        %v3235 = vmul.f32 %v2978, %v3200
        %v3236 = vmul.f32 %v2979, %v3200
        %v3237 = vmul.f32 %v2980, %v3200
        %v3238 = vmul.f32 %v2981, %v3200
        %v3239 = vmul.f32 %v2982, %v3200
        %v3240 = vmul.f32 %v2983, %v3200
        %v3241 = vadd.f32 %v3157, %v3201
        %v3242 = vadd.f32 %v3158, %v3202
        %v3243 = vadd.f32 %v3159, %v3203
        %v3244 = vadd.f32 %v3160, %v3204
        %v3245 = vadd.f32 %v3161, %v3205
        %v3246 = vadd.f32 %v3162, %v3206
        %v3247 = vadd.f32 %v3163, %v3207
        %v3248 = vadd.f32 %v3164, %v3208
        %v3249 = vadd.f32 %v3165, %v3209
        %v3250 = vadd.f32 %v3166, %v3210
        %v3251 = vadd.f32 %v3167, %v3211
        %v3252 = vadd.f32 %v3168, %v3212
        %v3253 = vadd.f32 %v3169, %v3213
        %v3254 = vadd.f32 %v3170, %v3214
        %v3255 = vadd.f32 %v3171, %v3215
        %v3256 = vadd.f32 %v3172, %v3216
        %v3257 = vadd.f32 %v3173, %v3217
        %v3258 = vadd.f32 %v3174, %v3218
        %v3259 = vadd.f32 %v3175, %v3219
        %v3260 = vadd.f32 %v3176, %v3220
        %v3261 = vadd.f32 %v3177, %v3221
        %v3262 = vadd.f32 %v3178, %v3222
        %v3263 = vadd.f32 %v3179, %v3223
        %v3264 = vadd.f32 %v3180, %v3224
        %v3265 = vadd.f32 %v3181, %v3225
        %v3266 = vadd.f32 %v3182, %v3226
        %v3267 = vadd.f32 %v3183, %v3227
        %v3268 = vadd.f32 %v3184, %v3228
        %v3269 = vadd.f32 %v3185, %v3229
        %v3270 = vadd.f32 %v3186, %v3230
        %v3271 = vadd.f32 %v3187, %v3231
        %v3272 = vadd.f32 %v3188, %v3232
        %v3273 = vadd.f32 %v3189, %v3233
        %v3274 = vadd.f32 %v3190, %v3234
        %v3275 = vadd.f32 %v3191, %v3235
        %v3276 = vadd.f32 %v3192, %v3236
        %v3277 = vadd.f32 %v3193, %v3237
        %v3278 = vadd.f32 %v3194, %v3238
        %v3279 = vadd.f32 %v3195, %v3239
        %v3280 = vadd.f32 %v3196, %v3240
        %v3281 = vlaneseq
        %v3282 = vshrl.u32 %v3281, 7
        %v3283 = vsub.s32 1, %v3282
        %v3284 = vrot.slane %v2990, %v3283
        %v3285 = vmul.f32 %v2948, %v3284
        %v3286 = vmul.f32 %v2949, %v3284
        %v3287 = vmul.f32 %v2950, %v3284
        %v3288 = vmul.f32 %v2951, %v3284
        %v3289 = vmul.f32 %v2952, %v3284
        %v3290 = vmul.f32 %v2953, %v3284
        %v3291 = vmul.f32 %v2954, %v3284
        %v3292 = vmul.f32 %v2955, %v3284
        %v3293 = vmul.f32 %v2956, %v3284
        %v3294 = vmul.f32 %v2957, %v3284
        %v3295 = vmul.f32 %v2958, %v3284
        %v3296 = vmul.f32 %v2959, %v3284
        %v3297 = vmul.f32 %v2960, %v3284
        %v3298 = vmul.f32 %v2961, %v3284
        %v3299 = vmul.f32 %v2962, %v3284
        %v3300 = vmul.f32 %v2963, %v3284
        %v3301 = vmul.f32 %v2964, %v3284
        %v3302 = vmul.f32 %v2965, %v3284
        %v3303 = vmul.f32 %v2966, %v3284
        %v3304 = vmul.f32 %v2967, %v3284
        %v3305 = vmul.f32 %v2968, %v3284
        %v3306 = vmul.f32 %v2969, %v3284
        %v3307 = vmul.f32 %v2970, %v3284
        %v3308 = vmul.f32 %v2971, %v3284
        %v3309 = vmul.f32 %v2972, %v3284
        %v3310 = vmul.f32 %v2973, %v3284
        %v3311 = vmul.f32 %v2974, %v3284
        %v3312 = vmul.f32 %v2975, %v3284
        %v3313 = vmul.f32 %v2976, %v3284
        %v3314 = vmul.f32 %v2977, %v3284
        %v3315 = vmul.f32 %v2978, %v3284
        %v3316 = vmul.f32 %v2979, %v3284
        %v3317 = vmul.f32 %v2980, %v3284
        %v3318 = vmul.f32 %v2981, %v3284
        %v3319 = vmul.f32 %v2982, %v3284
        %v3320 = vmul.f32 %v2983, %v3284
        %v3321 = vmul.f32 %v2984, %v3284
        %v3322 = vmul.f32 %v2985, %v3284
        %v3323 = vmul.f32 %v2986, %v3284
        %v3324 = vmul.f32 %v2987, %v3284
        %v3325 = vadd.f32 %v3241, %v3285
        %v3326 = vadd.f32 %v3242, %v3286
        %v3327 = vadd.f32 %v3243, %v3287
        %v3328 = vadd.f32 %v3244, %v3288
        %v3329 = vadd.f32 %v3245, %v3289
        %v3330 = vadd.f32 %v3246, %v3290
        %v3331 = vadd.f32 %v3247, %v3291
        %v3332 = vadd.f32 %v3248, %v3292
        %v3333 = vadd.f32 %v3249, %v3293
        %v3334 = vadd.f32 %v3250, %v3294
        %v3335 = vadd.f32 %v3251, %v3295
        %v3336 = vadd.f32 %v3252, %v3296
        %v3337 = vadd.f32 %v3253, %v3297
        %v3338 = vadd.f32 %v3254, %v3298
        %v3339 = vadd.f32 %v3255, %v3299
        %v3340 = vadd.f32 %v3256, %v3300
        %v3341 = vadd.f32 %v3257, %v3301
        %v3342 = vadd.f32 %v3258, %v3302
        %v3343 = vadd.f32 %v3259, %v3303
        %v3344 = vadd.f32 %v3260, %v3304
        %v3345 = vadd.f32 %v3261, %v3305
        %v3346 = vadd.f32 %v3262, %v3306
        %v3347 = vadd.f32 %v3263, %v3307
        %v3348 = vadd.f32 %v3264, %v3308
        %v3349 = vadd.f32 %v3265, %v3309
        %v3350 = vadd.f32 %v3266, %v3310
        %v3351 = vadd.f32 %v3267, %v3311
        %v3352 = vadd.f32 %v3268, %v3312
        %v3353 = vadd.f32 %v3269, %v3313
        %v3354 = vadd.f32 %v3270, %v3314
        %v3355 = vadd.f32 %v3271, %v3315
        %v3356 = vadd.f32 %v3272, %v3316
        %v3357 = vadd.f32 %v3273, %v3317
        %v3358 = vadd.f32 %v3274, %v3318
        %v3359 = vadd.f32 %v3275, %v3319
        %v3360 = vadd.f32 %v3276, %v3320
        %v3361 = vadd.f32 %v3277, %v3321
        %v3362 = vadd.f32 %v3278, %v3322
        %v3363 = vadd.f32 %v3279, %v3323
        %v3364 = vadd.f32 %v3280, %v3324
        %v3365 = vlaneseq
        %v3366 = vshrl.u32 %v3365, 7
        %v3367 = vsub.s32 2, %v3366
        %v3368 = vrot.slane %v2988, %v3367
        %v3369 = vmul.f32 %v2940, %v3368
        %v3370 = vmul.f32 %v2941, %v3368
        %v3371 = vmul.f32 %v2942, %v3368
        %v3372 = vmul.f32 %v2943, %v3368
        %v3373 = vmul.f32 %v2944, %v3368
        %v3374 = vmul.f32 %v2945, %v3368
        %v3375 = vmul.f32 %v2946, %v3368
        %v3376 = vmul.f32 %v2947, %v3368
        %v3377 = vmul.f32 %v2948, %v3368
        %v3378 = vmul.f32 %v2949, %v3368
        %v3379 = vmul.f32 %v2950, %v3368
        %v3380 = vmul.f32 %v2951, %v3368
        %v3381 = vmul.f32 %v2952, %v3368
        %v3382 = vmul.f32 %v2953, %v3368
        %v3383 = vmul.f32 %v2954, %v3368
        %v3384 = vmul.f32 %v2955, %v3368
        %v3385 = vmul.f32 %v2956, %v3368
        %v3386 = vmul.f32 %v2957, %v3368
        %v3387 = vmul.f32 %v2958, %v3368
        %v3388 = vmul.f32 %v2959, %v3368
        %v3389 = vmul.f32 %v2960, %v3368
        %v3390 = vmul.f32 %v2961, %v3368
        %v3391 = vmul.f32 %v2962, %v3368
        %v3392 = vmul.f32 %v2963, %v3368
        %v3393 = vmul.f32 %v2964, %v3368
        %v3394 = vmul.f32 %v2965, %v3368
        %v3395 = vmul.f32 %v2966, %v3368
        %v3396 = vmul.f32 %v2967, %v3368
        %v3397 = vmul.f32 %v2968, %v3368
        %v3398 = vmul.f32 %v2969, %v3368
        %v3399 = vmul.f32 %v2970, %v3368
        %v3400 = vmul.f32 %v2971, %v3368
        %v3401 = vmul.f32 %v2972, %v3368
        %v3402 = vmul.f32 %v2973, %v3368
        %v3403 = vmul.f32 %v2974, %v3368
        %v3404 = vmul.f32 %v2975, %v3368
        %v3405 = vmul.f32 %v2976, %v3368
        %v3406 = vmul.f32 %v2977, %v3368
        %v3407 = vmul.f32 %v2978, %v3368
        %v3408 = vmul.f32 %v2979, %v3368
        %v3409 = vlaneseq
        %v3410 = vshrl.u32 %v3409, 7
        %v3411 = vsub.s32 2, %v3410
        %v3412 = vrot.slane %v2989, %v3411
        %v3413 = vmul.f32 %v2944, %v3412
        %v3414 = vmul.f32 %v2945, %v3412
        %v3415 = vmul.f32 %v2946, %v3412
        %v3416 = vmul.f32 %v2947, %v3412
        %v3417 = vmul.f32 %v2948, %v3412
        %v3418 = vmul.f32 %v2949, %v3412
        %v3419 = vmul.f32 %v2950, %v3412
        %v3420 = vmul.f32 %v2951, %v3412
        %v3421 = vmul.f32 %v2952, %v3412
        %v3422 = vmul.f32 %v2953, %v3412
        %v3423 = vmul.f32 %v2954, %v3412
        %v3424 = vmul.f32 %v2955, %v3412
        %v3425 = vmul.f32 %v2956, %v3412
        %v3426 = vmul.f32 %v2957, %v3412
        %v3427 = vmul.f32 %v2958, %v3412
        %v3428 = vmul.f32 %v2959, %v3412
        %v3429 = vmul.f32 %v2960, %v3412
        %v3430 = vmul.f32 %v2961, %v3412
        %v3431 = vmul.f32 %v2962, %v3412
        %v3432 = vmul.f32 %v2963, %v3412
        %v3433 = vmul.f32 %v2964, %v3412
        %v3434 = vmul.f32 %v2965, %v3412
        %v3435 = vmul.f32 %v2966, %v3412
        %v3436 = vmul.f32 %v2967, %v3412
        %v3437 = vmul.f32 %v2968, %v3412
        %v3438 = vmul.f32 %v2969, %v3412
        %v3439 = vmul.f32 %v2970, %v3412
        %v3440 = vmul.f32 %v2971, %v3412
        %v3441 = vmul.f32 %v2972, %v3412
        %v3442 = vmul.f32 %v2973, %v3412
        %v3443 = vmul.f32 %v2974, %v3412
        %v3444 = vmul.f32 %v2975, %v3412
        %v3445 = vmul.f32 %v2976, %v3412
        %v3446 = vmul.f32 %v2977, %v3412
        %v3447 = vmul.f32 %v2978, %v3412
        %v3448 = vmul.f32 %v2979, %v3412
        %v3449 = vmul.f32 %v2980, %v3412
        %v3450 = vmul.f32 %v2981, %v3412
        %v3451 = vmul.f32 %v2982, %v3412
        %v3452 = vmul.f32 %v2983, %v3412
        %v3453 = vadd.f32 %v3369, %v3413
        %v3454 = vadd.f32 %v3370, %v3414
        %v3455 = vadd.f32 %v3371, %v3415
        %v3456 = vadd.f32 %v3372, %v3416
        %v3457 = vadd.f32 %v3373, %v3417
        %v3458 = vadd.f32 %v3374, %v3418
        %v3459 = vadd.f32 %v3375, %v3419
        %v3460 = vadd.f32 %v3376, %v3420
        %v3461 = vadd.f32 %v3377, %v3421
        %v3462 = vadd.f32 %v3378, %v3422
        %v3463 = vadd.f32 %v3379, %v3423
        %v3464 = vadd.f32 %v3380, %v3424
        %v3465 = vadd.f32 %v3381, %v3425
        %v3466 = vadd.f32 %v3382, %v3426
        %v3467 = vadd.f32 %v3383, %v3427
        %v3468 = vadd.f32 %v3384, %v3428
        %v3469 = vadd.f32 %v3385, %v3429
        %v3470 = vadd.f32 %v3386, %v3430
        %v3471 = vadd.f32 %v3387, %v3431
        %v3472 = vadd.f32 %v3388, %v3432
        %v3473 = vadd.f32 %v3389, %v3433
        %v3474 = vadd.f32 %v3390, %v3434
        %v3475 = vadd.f32 %v3391, %v3435
        %v3476 = vadd.f32 %v3392, %v3436
        %v3477 = vadd.f32 %v3393, %v3437
        %v3478 = vadd.f32 %v3394, %v3438
        %v3479 = vadd.f32 %v3395, %v3439
        %v3480 = vadd.f32 %v3396, %v3440
        %v3481 = vadd.f32 %v3397, %v3441
        %v3482 = vadd.f32 %v3398, %v3442
        %v3483 = vadd.f32 %v3399, %v3443
        %v3484 = vadd.f32 %v3400, %v3444
        %v3485 = vadd.f32 %v3401, %v3445
        %v3486 = vadd.f32 %v3402, %v3446
        %v3487 = vadd.f32 %v3403, %v3447
        %v3488 = vadd.f32 %v3404, %v3448
        %v3489 = vadd.f32 %v3405, %v3449
        %v3490 = vadd.f32 %v3406, %v3450
        %v3491 = vadd.f32 %v3407, %v3451
        %v3492 = vadd.f32 %v3408, %v3452
        %v3493 = vlaneseq
        %v3494 = vshrl.u32 %v3493, 7
        %v3495 = vsub.s32 2, %v3494
        %v3496 = vrot.slane %v2990, %v3495
        %v3497 = vmul.f32 %v2948, %v3496
        %v3498 = vmul.f32 %v2949, %v3496
        %v3499 = vmul.f32 %v2950, %v3496
        %v3500 = vmul.f32 %v2951, %v3496
        %v3501 = vmul.f32 %v2952, %v3496
        %v3502 = vmul.f32 %v2953, %v3496
        %v3503 = vmul.f32 %v2954, %v3496
        %v3504 = vmul.f32 %v2955, %v3496
        %v3505 = vmul.f32 %v2956, %v3496
        %v3506 = vmul.f32 %v2957, %v3496
        %v3507 = vmul.f32 %v2958, %v3496
        %v3508 = vmul.f32 %v2959, %v3496
        %v3509 = vmul.f32 %v2960, %v3496
        %v3510 = vmul.f32 %v2961, %v3496
        %v3511 = vmul.f32 %v2962, %v3496
        %v3512 = vmul.f32 %v2963, %v3496
        %v3513 = vmul.f32 %v2964, %v3496
        %v3514 = vmul.f32 %v2965, %v3496
        %v3515 = vmul.f32 %v2966, %v3496
        %v3516 = vmul.f32 %v2967, %v3496
        %v3517 = vmul.f32 %v2968, %v3496
        %v3518 = vmul.f32 %v2969, %v3496
        %v3519 = vmul.f32 %v2970, %v3496
        %v3520 = vmul.f32 %v2971, %v3496
        %v3521 = vmul.f32 %v2972, %v3496
        %v3522 = vmul.f32 %v2973, %v3496
        %v3523 = vmul.f32 %v2974, %v3496
        %v3524 = vmul.f32 %v2975, %v3496
        %v3525 = vmul.f32 %v2976, %v3496
        %v3526 = vmul.f32 %v2977, %v3496
        %v3527 = vmul.f32 %v2978, %v3496
        %v3528 = vmul.f32 %v2979, %v3496
        %v3529 = vmul.f32 %v2980, %v3496
        %v3530 = vmul.f32 %v2981, %v3496
        %v3531 = vmul.f32 %v2982, %v3496
        %v3532 = vmul.f32 %v2983, %v3496
        %v3533 = vmul.f32 %v2984, %v3496
        %v3534 = vmul.f32 %v2985, %v3496
        %v3535 = vmul.f32 %v2986, %v3496
        %v3536 = vmul.f32 %v2987, %v3496
        %v3537 = vadd.f32 %v3453, %v3497
        %v3538 = vadd.f32 %v3454, %v3498
        %v3539 = vadd.f32 %v3455, %v3499
        %v3540 = vadd.f32 %v3456, %v3500
        %v3541 = vadd.f32 %v3457, %v3501
        %v3542 = vadd.f32 %v3458, %v3502
        %v3543 = vadd.f32 %v3459, %v3503
        %v3544 = vadd.f32 %v3460, %v3504
        %v3545 = vadd.f32 %v3461, %v3505
        %v3546 = vadd.f32 %v3462, %v3506
        %v3547 = vadd.f32 %v3463, %v3507
        %v3548 = vadd.f32 %v3464, %v3508
        %v3549 = vadd.f32 %v3465, %v3509
        %v3550 = vadd.f32 %v3466, %v3510
        %v3551 = vadd.f32 %v3467, %v3511
        %v3552 = vadd.f32 %v3468, %v3512
        %v3553 = vadd.f32 %v3469, %v3513
        %v3554 = vadd.f32 %v3470, %v3514
        %v3555 = vadd.f32 %v3471, %v3515
        %v3556 = vadd.f32 %v3472, %v3516
        %v3557 = vadd.f32 %v3473, %v3517
        %v3558 = vadd.f32 %v3474, %v3518
        %v3559 = vadd.f32 %v3475, %v3519
        %v3560 = vadd.f32 %v3476, %v3520
        %v3561 = vadd.f32 %v3477, %v3521
        %v3562 = vadd.f32 %v3478, %v3522
        %v3563 = vadd.f32 %v3479, %v3523
        %v3564 = vadd.f32 %v3480, %v3524
        %v3565 = vadd.f32 %v3481, %v3525
        %v3566 = vadd.f32 %v3482, %v3526
        %v3567 = vadd.f32 %v3483, %v3527
        %v3568 = vadd.f32 %v3484, %v3528
        %v3569 = vadd.f32 %v3485, %v3529
        %v3570 = vadd.f32 %v3486, %v3530
        %v3571 = vadd.f32 %v3487, %v3531
        %v3572 = vadd.f32 %v3488, %v3532
        %v3573 = vadd.f32 %v3489, %v3533
        %v3574 = vadd.f32 %v3490, %v3534
        %v3575 = vadd.f32 %v3491, %v3535
        %v3576 = vadd.f32 %v3492, %v3536
        %v3617 = vrot.slane %v3325, 1
        %v3618 = vrot.slane %v3326, 1
        %v3619 = vsel %vm1697, %v3617, %v3618
        %v3620 = vrot.slane %v3327, 1
        %v3621 = vsel %vm1697, %v3618, %v3620
        %v3622 = vrot.slane %v3328, 1
        %v3623 = vsel %vm1697, %v3620, %v3622
        %v3624 = vrot.slane %v3329, 1
        %v3625 = vrot.slane %v3330, 1
        %v3626 = vsel %vm1697, %v3624, %v3625
        %v3627 = vrot.slane %v3331, 1
        %v3628 = vsel %vm1697, %v3625, %v3627
        %v3629 = vrot.slane %v3332, 1
        %v3630 = vsel %vm1697, %v3627, %v3629
        %v3631 = vrot.slane %v3333, 1
        %v3632 = vrot.slane %v3334, 1
        %v3633 = vsel %vm1697, %v3631, %v3632
        %v3634 = vrot.slane %v3335, 1
        %v3635 = vsel %vm1697, %v3632, %v3634
        %v3636 = vrot.slane %v3336, 1
        %v3637 = vsel %vm1697, %v3634, %v3636
        %v3638 = vrot.slane %v3337, 1
        %v3639 = vrot.slane %v3338, 1
        %v3640 = vsel %vm1697, %v3638, %v3639
        %v3641 = vrot.slane %v3339, 1
        %v3642 = vsel %vm1697, %v3639, %v3641
        %v3643 = vrot.slane %v3340, 1
        %v3644 = vsel %vm1697, %v3641, %v3643
        %v3645 = vrot.slane %v3341, 1
        %v3646 = vrot.slane %v3342, 1
        %v3647 = vsel %vm1697, %v3645, %v3646
        %v3648 = vrot.slane %v3343, 1
        %v3649 = vsel %vm1697, %v3646, %v3648
        %v3650 = vrot.slane %v3344, 1
        %v3651 = vsel %vm1697, %v3648, %v3650
        %v3652 = vrot.slane %v3345, 1
        %v3653 = vrot.slane %v3346, 1
        %v3654 = vsel %vm1697, %v3652, %v3653
        %v3655 = vrot.slane %v3347, 1
        %v3656 = vsel %vm1697, %v3653, %v3655
        %v3657 = vrot.slane %v3348, 1
        %v3658 = vsel %vm1697, %v3655, %v3657
        %v3659 = vrot.slane %v3349, 1
        %v3660 = vrot.slane %v3350, 1
        %v3661 = vsel %vm1697, %v3659, %v3660
        %v3662 = vrot.slane %v3351, 1
        %v3663 = vsel %vm1697, %v3660, %v3662
        %v3664 = vrot.slane %v3352, 1
        %v3665 = vsel %vm1697, %v3662, %v3664
        %v3666 = vrot.slane %v3353, 1
        %v3667 = vrot.slane %v3354, 1
        %v3668 = vsel %vm1697, %v3666, %v3667
        %v3669 = vrot.slane %v3355, 1
        %v3670 = vsel %vm1697, %v3667, %v3669
        %v3671 = vrot.slane %v3356, 1
        %v3672 = vsel %vm1697, %v3669, %v3671
        %v3673 = vrot.slane %v3357, 1
        %v3674 = vrot.slane %v3358, 1
        %v3675 = vsel %vm1697, %v3673, %v3674
        %v3676 = vrot.slane %v3359, 1
        %v3677 = vsel %vm1697, %v3674, %v3676
        %v3678 = vrot.slane %v3360, 1
        %v3679 = vsel %vm1697, %v3676, %v3678
        %v3680 = vrot.slane %v3361, 1
        %v3681 = vrot.slane %v3362, 1
        %v3682 = vsel %vm1697, %v3680, %v3681
        %v3683 = vrot.slane %v3363, 1
        %v3684 = vsel %vm1697, %v3681, %v3683
        %v3685 = vrot.slane %v3364, 1
        %v3686 = vsel %vm1697, %v3683, %v3685
        %v3717 = vadd.f32 %v3123, %v3619
        %v3718 = vadd.f32 %v3124, %v3621
        %v3719 = vadd.f32 %v3125, %v3623
        %v3720 = vadd.f32 %v3126, %v3626
        %v3721 = vadd.f32 %v3127, %v3628
        %v3722 = vadd.f32 %v3128, %v3630
        %v3723 = vadd.f32 %v3129, %v3633
        %v3724 = vadd.f32 %v3130, %v3635
        %v3725 = vadd.f32 %v3131, %v3637
        %v3726 = vadd.f32 %v3132, %v3640
        %v3727 = vadd.f32 %v3133, %v3642
        %v3728 = vadd.f32 %v3134, %v3644
        %v3729 = vadd.f32 %v3135, %v3647
        %v3730 = vadd.f32 %v3136, %v3649
        %v3731 = vadd.f32 %v3137, %v3651
        %v3732 = vadd.f32 %v3138, %v3654
        %v3733 = vadd.f32 %v3139, %v3656
        %v3734 = vadd.f32 %v3140, %v3658
        %v3735 = vadd.f32 %v3141, %v3661
        %v3736 = vadd.f32 %v3142, %v3663
        %v3737 = vadd.f32 %v3143, %v3665
        %v3738 = vadd.f32 %v3144, %v3668
        %v3739 = vadd.f32 %v3145, %v3670
        %v3740 = vadd.f32 %v3146, %v3672
        %v3741 = vadd.f32 %v3147, %v3675
        %v3742 = vadd.f32 %v3148, %v3677
        %v3743 = vadd.f32 %v3149, %v3679
        %v3744 = vadd.f32 %v3150, %v3682
        %v3745 = vadd.f32 %v3151, %v3684
        %v3746 = vadd.f32 %v3152, %v3686
        %v3787 = vrot.slane %v3537, 2
        %v3788 = vrot.slane %v3538, 2
        %v3789 = vsel %vm1962, %v3787, %v3788
        %v3790 = vrot.slane %v3539, 2
        %v3791 = vsel %vm1962, %v3788, %v3790
        %v3792 = vrot.slane %v3540, 2
        %v3793 = vsel %vm1962, %v3790, %v3792
        %v3794 = vrot.slane %v3541, 2
        %v3795 = vrot.slane %v3542, 2
        %v3796 = vsel %vm1962, %v3794, %v3795
        %v3797 = vrot.slane %v3543, 2
        %v3798 = vsel %vm1962, %v3795, %v3797
        %v3799 = vrot.slane %v3544, 2
        %v3800 = vsel %vm1962, %v3797, %v3799
        %v3801 = vrot.slane %v3545, 2
        %v3802 = vrot.slane %v3546, 2
        %v3803 = vsel %vm1962, %v3801, %v3802
        %v3804 = vrot.slane %v3547, 2
        %v3805 = vsel %vm1962, %v3802, %v3804
        %v3806 = vrot.slane %v3548, 2
        %v3807 = vsel %vm1962, %v3804, %v3806
        %v3808 = vrot.slane %v3549, 2
        %v3809 = vrot.slane %v3550, 2
        %v3810 = vsel %vm1962, %v3808, %v3809
        %v3811 = vrot.slane %v3551, 2
        %v3812 = vsel %vm1962, %v3809, %v3811
        %v3813 = vrot.slane %v3552, 2
        %v3814 = vsel %vm1962, %v3811, %v3813
        %v3815 = vrot.slane %v3553, 2
        %v3816 = vrot.slane %v3554, 2
        %v3817 = vsel %vm1962, %v3815, %v3816
        %v3818 = vrot.slane %v3555, 2
        %v3819 = vsel %vm1962, %v3816, %v3818
        %v3820 = vrot.slane %v3556, 2
        %v3821 = vsel %vm1962, %v3818, %v3820
        %v3822 = vrot.slane %v3557, 2
        %v3823 = vrot.slane %v3558, 2
        %v3824 = vsel %vm1962, %v3822, %v3823
        %v3825 = vrot.slane %v3559, 2
        %v3826 = vsel %vm1962, %v3823, %v3825
        %v3827 = vrot.slane %v3560, 2
        %v3828 = vsel %vm1962, %v3825, %v3827
        %v3829 = vrot.slane %v3561, 2
        %v3830 = vrot.slane %v3562, 2
        %v3831 = vsel %vm1962, %v3829, %v3830
        %v3832 = vrot.slane %v3563, 2
        %v3833 = vsel %vm1962, %v3830, %v3832
        %v3834 = vrot.slane %v3564, 2
        %v3835 = vsel %vm1962, %v3832, %v3834
        %v3836 = vrot.slane %v3565, 2
        %v3837 = vrot.slane %v3566, 2
        %v3838 = vsel %vm1962, %v3836, %v3837
        %v3839 = vrot.slane %v3567, 2
        %v3840 = vsel %vm1962, %v3837, %v3839
        %v3841 = vrot.slane %v3568, 2
        %v3842 = vsel %vm1962, %v3839, %v3841
        %v3843 = vrot.slane %v3569, 2
        %v3844 = vrot.slane %v3570, 2
        %v3845 = vsel %vm1962, %v3843, %v3844
        %v3846 = vrot.slane %v3571, 2
        %v3847 = vsel %vm1962, %v3844, %v3846
        %v3848 = vrot.slane %v3572, 2
        %v3849 = vsel %vm1962, %v3846, %v3848
        %v3850 = vrot.slane %v3573, 2
        %v3851 = vrot.slane %v3574, 2
        %v3852 = vsel %vm1962, %v3850, %v3851
        %v3853 = vrot.slane %v3575, 2
        %v3854 = vsel %vm1962, %v3851, %v3853
        %v3855 = vrot.slane %v3576, 2
        %v3856 = vsel %vm1962, %v3853, %v3855
        %v3887 = vadd.f32 %v3717, %v3789
        %v3888 = vadd.f32 %v3718, %v3791
        %v3889 = vadd.f32 %v3719, %v3793
        %v3890 = vadd.f32 %v3720, %v3796
        %v3891 = vadd.f32 %v3721, %v3798
        %v3892 = vadd.f32 %v3722, %v3800
        %v3893 = vadd.f32 %v3723, %v3803
        %v3894 = vadd.f32 %v3724, %v3805
        %v3895 = vadd.f32 %v3725, %v3807
        %v3896 = vadd.f32 %v3726, %v3810
        %v3897 = vadd.f32 %v3727, %v3812
        %v3898 = vadd.f32 %v3728, %v3814
        %v3899 = vadd.f32 %v3729, %v3817
        %v3900 = vadd.f32 %v3730, %v3819
        %v3901 = vadd.f32 %v3731, %v3821
        %v3902 = vadd.f32 %v3732, %v3824
        %v3903 = vadd.f32 %v3733, %v3826
        %v3904 = vadd.f32 %v3734, %v3828
        %v3905 = vadd.f32 %v3735, %v3831
        %v3906 = vadd.f32 %v3736, %v3833
        %v3907 = vadd.f32 %v3737, %v3835
        %v3908 = vadd.f32 %v3738, %v3838
        %v3909 = vadd.f32 %v3739, %v3840
        %v3910 = vadd.f32 %v3740, %v3842
        %v3911 = vadd.f32 %v3741, %v3845
        %v3912 = vadd.f32 %v3742, %v3847
        %v3913 = vadd.f32 %v3743, %v3849
        %v3914 = vadd.f32 %v3744, %v3852
        %v3915 = vadd.f32 %v3745, %v3854
        %v3916 = vadd.f32 %v3746, %v3856
        %v3917 = vld [vmem:[%s8] sm:$0x1]
        %v3919 = vlaneseq
        %v3920 = vshrl.u32 %v3919, 7
        %v3921 = vsub.s32 0, %v3920
        %v3922 = vrot.slane %v3917, %v3921
        %v3924 = vadd.f32 %v3887, %v3922
        %v3925 = vadd.f32 %v3888, %v3922
        %v3926 = vadd.f32 %v3889, %v3922
        %v3927 = vadd.f32 %v3890, %v3922
        %v3928 = vadd.f32 %v3891, %v3922
        %v3929 = vadd.f32 %v3892, %v3922
        %v3930 = vadd.f32 %v3893, %v3922
        %v3931 = vadd.f32 %v3894, %v3922
        %v3932 = vadd.f32 %v3895, %v3922
        %v3933 = vadd.f32 %v3896, %v3922
        %v3934 = vadd.f32 %v3897, %v3922
        %v3935 = vadd.f32 %v3898, %v3922
        %v3936 = vadd.f32 %v3899, %v3922
        %v3937 = vadd.f32 %v3900, %v3922
        %v3938 = vadd.f32 %v3901, %v3922
        %v3939 = vadd.f32 %v3902, %v3922
        %v3940 = vadd.f32 %v3903, %v3922
        %v3941 = vadd.f32 %v3904, %v3922
        %v3942 = vadd.f32 %v3905, %v3922
        %v3943 = vadd.f32 %v3906, %v3922
        %v3944 = vadd.f32 %v3907, %v3922
        %v3945 = vadd.f32 %v3908, %v3922
        %v3946 = vadd.f32 %v3909, %v3922
        %v3947 = vadd.f32 %v3910, %v3922
        %v3948 = vadd.f32 %v3911, %v3922
        %v3949 = vadd.f32 %v3912, %v3922
        %v3950 = vadd.f32 %v3913, %v3922
        %v3951 = vadd.f32 %v3914, %v3922
        %v3952 = vadd.f32 %v3915, %v3922
        %v3953 = vadd.f32 %v3916, %v3922
        %v3954 = vld [vmem:[#allocation12] sm:$0xf]
        %v3955 = vld [vmem:[#allocation12 + $0x4] sm:$0xf]
        %v3956 = vld [vmem:[#allocation12 + $0x8] sm:$0xf]
        %v3957 = vld [vmem:[#allocation12 + $0xc] sm:$0xf]
        %v3958 = vld [vmem:[#allocation12 + $0x10] sm:$0xf]
        %v3959 = vld [vmem:[#allocation12 + $0x14] sm:$0xf]
        %v3960 = vld [vmem:[#allocation12 + $0x18] sm:$0xf]
        %v3961 = vld [vmem:[#allocation12 + $0x1c] sm:$0xf]
        %v3962 = vld [vmem:[#allocation12 + $0x20] sm:$0xf]
        %v3963 = vld [vmem:[#allocation12 + $0x24] sm:$0xf]
        %v3964 = vld [vmem:[#allocation12 + $0x28] sm:$0xf]
        %v3965 = vld [vmem:[#allocation12 + $0x2c] sm:$0xf]
        %v3966 = vld [vmem:[#allocation12 + $0x30] sm:$0xf]
        %v3967 = vld [vmem:[#allocation12 + $0x34] sm:$0xf]
        %v3968 = vld [vmem:[#allocation12 + $0x38] sm:$0xf]
        %v3969 = vld [vmem:[#allocation12 + $0x3c] sm:$0xf]
        %v3970 = vld [vmem:[%s10] sm:$0x1]
        %v3971 = vpack.c.bf16 %v3925, %v3924
        %v3972 = vpack.c.bf16 %v3927, %v3926
        %v3973 = vpack.c.bf16 %v3929, %v3928
        %v3974 = vpack.c.bf16 %v3931, %v3930
        %v3975 = vpack.c.bf16 %v3933, %v3932
        %v3976 = vpack.c.bf16 %v3935, %v3934
        %v3977 = vpack.c.bf16 %v3937, %v3936
        %v3978 = vpack.c.bf16 %v3939, %v3938
        %v3979 = vpack.c.bf16 %v3941, %v3940
        %v3980 = vpack.c.bf16 %v3943, %v3942
        %v3981 = vpack.c.bf16 %v3945, %v3944
        %v3982 = vpack.c.bf16 %v3947, %v3946
        %v3983 = vpack.c.bf16 %v3949, %v3948
        %v3984 = vpack.c.bf16 %v3951, %v3950
        %v3985 = vpack.c.bf16 %v3953, %v3952
        %v4002 = vunpack.c.l.b16 %v3954
        %v4003 = vunpack.c.l.b16 %v3955
        %v4004 = vunpack.c.l.b16 %v3956
        %v4005 = vunpack.c.l.b16 %v3957
        %v4006 = vunpack.c.l.b16 %v3958
        %v4007 = vunpack.c.l.b16 %v3959
        %v4008 = vunpack.c.l.b16 %v3960
        %v4009 = vunpack.c.l.b16 %v3961
        %v4010 = vunpack.c.l.b16 %v3962
        %v4011 = vunpack.c.l.b16 %v3963
        %v4012 = vunpack.c.l.b16 %v3964
        %v4013 = vunpack.c.l.b16 %v3965
        %v4014 = vunpack.c.l.b16 %v3966
        %v4015 = vunpack.c.l.b16 %v3967
        %v4016 = vunpack.c.l.b16 %v3968
        %v4017 = vunpack.c.l.b16 %v3969
        %v4018 = vpack.c.b16 %v4003, %v4002
        %v4019 = vpack.c.b16 %v4005, %v4004
        %v4020 = vpack.c.b16 %v4007, %v4006
        %v4021 = vpack.c.b16 %v4009, %v4008
        %v4022 = vpack.c.b16 %v4011, %v4010
        %v4023 = vpack.c.b16 %v4013, %v4012
        %v4024 = vpack.c.b16 %v4015, %v4014
        %v4025 = vpack.c.b16 %v4017, %v4016
        %4034 = vmatprep.subr.bf16.mxu0 0
        %4035 = vmatpush1.bf16.msra.mxu0 %v4018
        %4036 = vmatprep.subr.bf16.mxu0 0
        %4037 = vmatpush1.bf16.msra.mxu0 %v4019
        %4038 = vmatprep.subr.bf16.mxu0 0
        %4039 = vmatpush1.bf16.msra.mxu0 %v4020
        %4040 = vmatprep.subr.bf16.mxu0 0
        %4041 = vmatpush1.bf16.msra.mxu0 %v4021
        %4042 = vmatprep.subr.bf16.mxu0 0
        %4043 = vmatpush1.bf16.msra.mxu0 %v4022
        %4044 = vmatprep.subr.bf16.mxu0 0
        %4045 = vmatpush1.bf16.msra.mxu0 %v4023
        %4046 = vmatprep.subr.bf16.mxu0 0
        %4047 = vmatpush1.bf16.msra.mxu0 %v4024
        %4048 = vmatprep.subr.bf16.mxu0 0
        %4049 = vmatpush1.bf16.msra.mxu0 %v4025
        %4050 = vmatprep.subr.bf16.mxu0 0
        %4051 = vmatpush1.bf16.msra.mxu0 0
        %4052 = vmatprep.subr.bf16.mxu0 0
        %4053 = vmatpush1.bf16.msra.mxu0 0
        %4054 = vmatprep.subr.bf16.mxu0 0
        %4055 = vmatpush1.bf16.msra.mxu0 0
        %4056 = vmatprep.subr.bf16.mxu0 0
        %4057 = vmatpush1.bf16.msra.mxu0 0
        %4058 = vmatprep.subr.bf16.mxu0 0
        %4059 = vmatpush1.bf16.msra.mxu0 0
        %4060 = vmatprep.subr.bf16.mxu0 0
        %4061 = vmatpush1.bf16.msra.mxu0 0
        %4062 = vmatprep.subr.bf16.mxu0 0
        %4063 = vmatpush1.bf16.msra.mxu0 0
        %4064 = vmatprep.subr.bf16.mxu0 0
        %4065 = vmatpush1.bf16.msra.mxu0 0
        %4066 = vmatprep.mubr.bf16.mxu0 0
        %4067 = vmatmul.mubr.bf16.gmra.mrb[0].mxu0 %v3971
        %v4068 = vpop.f32.mrb[0].mxu0
        %v4069 = vadd.f32 0.0, %v4068
        %v4070 = vpop.f32.mrb[0].mxu0
        %v4071 = vpop.f32.mrb[0].mxu0
        %v4072 = vadd.f32 0.0, %v4071
        %v4073 = vpop.f32.mrb[0].mxu0
        %4074 = vmatprep.mubr.bf16.mxu0 0
        %4075 = vmatmul.mubr.bf16.gmra.mrb[0].mxu0 %v3972
        %v4076 = vpop.f32.mrb[0].mxu0
        %v4077 = vadd.f32 0.0, %v4076
        %v4078 = vpop.f32.mrb[0].mxu0
        %v4079 = vpop.f32.mrb[0].mxu0
        %v4080 = vadd.f32 0.0, %v4079
        %v4081 = vpop.f32.mrb[0].mxu0
        %4082 = vmatprep.mubr.bf16.mxu0 0
        %4083 = vmatmul.mubr.bf16.gmra.mrb[0].mxu0 %v3973
        %v4084 = vpop.f32.mrb[0].mxu0
        %v4085 = vadd.f32 0.0, %v4084
        %v4086 = vpop.f32.mrb[0].mxu0
        %v4087 = vpop.f32.mrb[0].mxu0
        %v4088 = vadd.f32 0.0, %v4087
        %v4089 = vpop.f32.mrb[0].mxu0
        %4090 = vmatprep.mubr.bf16.mxu0 0
        %4091 = vmatmul.mubr.bf16.gmra.mrb[0].mxu0 %v3974
        %v4092 = vpop.f32.mrb[0].mxu0
        %v4093 = vadd.f32 0.0, %v4092
        %v4094 = vpop.f32.mrb[0].mxu0
        %v4095 = vpop.f32.mrb[0].mxu0
        %v4096 = vadd.f32 0.0, %v4095
        %v4097 = vpop.f32.mrb[0].mxu0
        %4098 = vmatprep.mubr.bf16.mxu0 0
        %4099 = vmatmul.mubr.bf16.gmra.mrb[0].mxu0 %v3975
        %v4100 = vpop.f32.mrb[0].mxu0
        %v4101 = vadd.f32 0.0, %v4100
        %v4102 = vpop.f32.mrb[0].mxu0
        %v4103 = vpop.f32.mrb[0].mxu0
        %v4104 = vadd.f32 0.0, %v4103
        %v4105 = vpop.f32.mrb[0].mxu0
        %4106 = vmatprep.mubr.bf16.mxu0 0
        %4107 = vmatmul.mubr.bf16.gmra.mrb[0].mxu0 %v3976
        %v4108 = vpop.f32.mrb[0].mxu0
        %v4109 = vadd.f32 0.0, %v4108
        %v4110 = vpop.f32.mrb[0].mxu0
        %v4111 = vpop.f32.mrb[0].mxu0
        %v4112 = vadd.f32 0.0, %v4111
        %v4113 = vpop.f32.mrb[0].mxu0
        %4114 = vmatprep.mubr.bf16.mxu0 0
        %4115 = vmatmul.mubr.bf16.gmra.mrb[0].mxu0 %v3977
        %v4116 = vpop.f32.mrb[0].mxu0
        %v4117 = vadd.f32 0.0, %v4116
        %v4118 = vpop.f32.mrb[0].mxu0
        %v4119 = vpop.f32.mrb[0].mxu0
        %v4120 = vadd.f32 0.0, %v4119
        %v4121 = vpop.f32.mrb[0].mxu0
        %4122 = vmatprep.mubr.bf16.mxu0 0
        %4123 = vmatmul.mubr.bf16.gmra.mrb[0].mxu0 %v3978
        %v4124 = vpop.f32.mrb[0].mxu0
        %v4125 = vadd.f32 0.0, %v4124
        %v4126 = vpop.f32.mrb[0].mxu0
        %v4127 = vpop.f32.mrb[0].mxu0
        %v4128 = vadd.f32 0.0, %v4127
        %v4129 = vpop.f32.mrb[0].mxu0
        %4130 = vmatprep.mubr.bf16.mxu0 0
        %4131 = vmatmul.mubr.bf16.gmra.mrb[0].mxu0 %v3979
        %v4132 = vpop.f32.mrb[0].mxu0
        %v4133 = vadd.f32 0.0, %v4132
        %v4134 = vpop.f32.mrb[0].mxu0
        %v4135 = vpop.f32.mrb[0].mxu0
        %v4136 = vadd.f32 0.0, %v4135
        %v4137 = vpop.f32.mrb[0].mxu0
        %4138 = vmatprep.mubr.bf16.mxu0 0
        %4139 = vmatmul.mubr.bf16.gmra.mrb[0].mxu0 %v3980
        %v4140 = vpop.f32.mrb[0].mxu0
        %v4141 = vadd.f32 0.0, %v4140
        %v4142 = vpop.f32.mrb[0].mxu0
        %v4143 = vpop.f32.mrb[0].mxu0
        %v4144 = vadd.f32 0.0, %v4143
        %v4145 = vpop.f32.mrb[0].mxu0
        %4146 = vmatprep.mubr.bf16.mxu0 0
        %4147 = vmatmul.mubr.bf16.gmra.mrb[0].mxu0 %v3981
        %v4148 = vpop.f32.mrb[0].mxu0
        %v4149 = vadd.f32 0.0, %v4148
        %v4150 = vpop.f32.mrb[0].mxu0
        %v4151 = vpop.f32.mrb[0].mxu0
        %v4152 = vadd.f32 0.0, %v4151
        %v4153 = vpop.f32.mrb[0].mxu0
        %4154 = vmatprep.mubr.bf16.mxu0 0
        %4155 = vmatmul.mubr.bf16.gmra.mrb[0].mxu0 %v3982
        %v4156 = vpop.f32.mrb[0].mxu0
        %v4157 = vadd.f32 0.0, %v4156
        %v4158 = vpop.f32.mrb[0].mxu0
        %v4159 = vpop.f32.mrb[0].mxu0
        %v4160 = vadd.f32 0.0, %v4159
        %v4161 = vpop.f32.mrb[0].mxu0
        %4162 = vmatprep.mubr.bf16.mxu0 0
        %4163 = vmatmul.mubr.bf16.gmra.mrb[0].mxu0 %v3983
        %v4164 = vpop.f32.mrb[0].mxu0
        %v4165 = vadd.f32 0.0, %v4164
        %v4166 = vpop.f32.mrb[0].mxu0
        %v4167 = vpop.f32.mrb[0].mxu0
        %v4168 = vadd.f32 0.0, %v4167
        %v4169 = vpop.f32.mrb[0].mxu0
        %4170 = vmatprep.mubr.bf16.mxu0 0
        %4171 = vmatmul.mubr.bf16.gmra.mrb[0].mxu0 %v3984
        %v4172 = vpop.f32.mrb[0].mxu0
        %v4173 = vadd.f32 0.0, %v4172
        %v4174 = vpop.f32.mrb[0].mxu0
        %v4175 = vpop.f32.mrb[0].mxu0
        %v4176 = vadd.f32 0.0, %v4175
        %v4177 = vpop.f32.mrb[0].mxu0
        %4178 = vmatprep.mubr.bf16.mxu0 0
        %4179 = vmatmul.mubr.bf16.gmra.mrb[0].mxu0 %v3985
        %v4180 = vpop.f32.mrb[0].mxu0
        %v4181 = vadd.f32 0.0, %v4180
        %v4182 = vpop.f32.mrb[0].mxu0
        %v4183 = vpop.f32.mrb[0].mxu0
        %v4184 = vadd.f32 0.0, %v4183
        %v4185 = vpop.f32.mrb[0].mxu0
        %4186 = vdwg.mxu0
        %v4188 = vlaneseq
        %v4189 = vshrl.u32 %v4188, 7
        %v4190 = vsub.s32 0, %v4189
        %v4191 = vrot.slane %v3970, %v4190
        %v4193 = vadd.f32 %v4069, %v4191
        %v4194 = vadd.f32 %v4072, %v4191
        %v4195 = vadd.f32 %v4077, %v4191
        %v4196 = vadd.f32 %v4080, %v4191
        %v4197 = vadd.f32 %v4085, %v4191
        %v4198 = vadd.f32 %v4088, %v4191
        %v4199 = vadd.f32 %v4093, %v4191
        %v4200 = vadd.f32 %v4096, %v4191
        %v4201 = vadd.f32 %v4101, %v4191
        %v4202 = vadd.f32 %v4104, %v4191
        %v4203 = vadd.f32 %v4109, %v4191
        %v4204 = vadd.f32 %v4112, %v4191
        %v4205 = vadd.f32 %v4117, %v4191
        %v4206 = vadd.f32 %v4120, %v4191
        %v4207 = vadd.f32 %v4125, %v4191
        %v4208 = vadd.f32 %v4128, %v4191
        %v4209 = vadd.f32 %v4133, %v4191
        %v4210 = vadd.f32 %v4136, %v4191
        %v4211 = vadd.f32 %v4141, %v4191
        %v4212 = vadd.f32 %v4144, %v4191
        %v4213 = vadd.f32 %v4149, %v4191
        %v4214 = vadd.f32 %v4152, %v4191
        %v4215 = vadd.f32 %v4157, %v4191
        %v4216 = vadd.f32 %v4160, %v4191
        %v4217 = vadd.f32 %v4165, %v4191
        %v4218 = vadd.f32 %v4168, %v4191
        %v4219 = vadd.f32 %v4173, %v4191
        %v4220 = vadd.f32 %v4176, %v4191
        %v4221 = vadd.f32 %v4181, %v4191
        %v4222 = vadd.f32 %v4184, %v4191
        %s4223 = ssub.s32 %s549, 1
        %v4224 = vstv %s4223
        %v4225 = vadd.s32 %v4224, 1
        %v4226 = vadd.s32 %v4224, 2
        %v4227 = vadd.s32 %v4224, 3
        %v4228 = vadd.s32 %v4224, 4
        %v4229 = vadd.s32 %v4224, 5
        %v4230 = vadd.s32 %v4224, 6
        %v4231 = vadd.s32 %v4224, 7
        %v4232 = vadd.s32 %v4224, 8
        %v4233 = vadd.s32 %v4224, 9
        %vm4234 = vcmp.ge.s32.totalorder %v4224, 0
        %vm4235 = vcmp.ge.s32.totalorder %v4225, 0
        %vm4236 = vcmp.ge.s32.totalorder %v4226, 0
        %vm4237 = vcmp.ge.s32.totalorder %v4227, 0
        %vm4238 = vcmp.ge.s32.totalorder %v4228, 0
        %vm4239 = vcmp.ge.s32.totalorder %v4229, 0
        %vm4240 = vcmp.ge.s32.totalorder %v4230, 0
        %vm4241 = vcmp.ge.s32.totalorder %v4231, 0
        %vm4242 = vcmp.ge.s32.totalorder %v4232, 0
        %vm4243 = vcmp.ge.s32.totalorder %v4233, 0
        %vm4244 = vcmp.lt.s32.totalorder %v4224, 16
        %vm4245 = vcmp.lt.s32.totalorder %v4225, 16
        %vm4246 = vcmp.lt.s32.totalorder %v4226, 16
        %vm4247 = vcmp.lt.s32.totalorder %v4227, 16
        %vm4248 = vcmp.lt.s32.totalorder %v4228, 16
        %vm4249 = vcmp.lt.s32.totalorder %v4229, 16
        %vm4250 = vcmp.lt.s32.totalorder %v4230, 16
        %vm4251 = vcmp.lt.s32.totalorder %v4231, 16
        %vm4252 = vcmp.lt.s32.totalorder %v4232, 16
        %vm4253 = vcmp.lt.s32.totalorder %v4233, 16
        %vm4254 = vmand %vm4234, %vm4244
        %vm4255 = vmand %vm4235, %vm4245
        %vm4256 = vmand %vm4236, %vm4246
        %vm4257 = vmand %vm4237, %vm4247
        %vm4258 = vmand %vm4238, %vm4248
        %vm4259 = vmand %vm4239, %vm4249
        %vm4260 = vmand %vm4240, %vm4250
        %vm4261 = vmand %vm4241, %vm4251
        %vm4262 = vmand %vm4242, %vm4252
        %vm4263 = vmand %vm4243, %vm4253
        %vm4264 = vcmp.ge.s32.totalorder %v2604, 1
        %vm4265 = vcmp.ge.s32.totalorder %v2605, 1
        %vm4266 = vcmp.ge.s32.totalorder %v2606, 1
        %vm4267 = vmand %vm4254, %vm4264
        %vm4268 = vmand %vm4254, %vm4265
        %vm4269 = vmand %vm4254, %vm4266
        %vm4270 = vmand %vm4255, %vm4264
        %vm4271 = vmand %vm4255, %vm4265
        %vm4272 = vmand %vm4255, %vm4266
        %vm4273 = vmand %vm4256, %vm4264
        %vm4274 = vmand %vm4256, %vm4265
        %vm4275 = vmand %vm4256, %vm4266
        %vm4276 = vmand %vm4257, %vm4264
        %vm4277 = vmand %vm4257, %vm4265
        %vm4278 = vmand %vm4257, %vm4266
        %vm4279 = vmand %vm4258, %vm4264
        %vm4280 = vmand %vm4258, %vm4265
        %vm4281 = vmand %vm4258, %vm4266
        %vm4282 = vmand %vm4259, %vm4264
        %vm4283 = vmand %vm4259, %vm4265
        %vm4284 = vmand %vm4259, %vm4266
        %vm4285 = vmand %vm4260, %vm4264
        %vm4286 = vmand %vm4260, %vm4265
        %vm4287 = vmand %vm4260, %vm4266
        %vm4288 = vmand %vm4261, %vm4264
        %vm4289 = vmand %vm4261, %vm4265
        %vm4290 = vmand %vm4261, %vm4266
        %vm4291 = vmand %vm4262, %vm4264
        %vm4292 = vmand %vm4262, %vm4265
        %vm4293 = vmand %vm4262, %vm4266
        %vm4294 = vmand %vm4263, %vm4264
        %vm4295 = vmand %vm4263, %vm4265
        %vm4296 = vmand %vm4263, %vm4266
        %vm4297 = vcmp.lt.s32.totalorder %v2604, 17
        %vm4298 = vcmp.lt.s32.totalorder %v2605, 17
        %vm4299 = vcmp.lt.s32.totalorder %v2606, 17
        %vm4300 = vmand %vm4267, %vm4297
        %vm4301 = vmand %vm4268, %vm4298
        %vm4302 = vmand %vm4269, %vm4299
        %vm4303 = vmand %vm4270, %vm4297
        %vm4304 = vmand %vm4271, %vm4298
        %vm4305 = vmand %vm4272, %vm4299
        %vm4306 = vmand %vm4273, %vm4297
        %vm4307 = vmand %vm4274, %vm4298
        %vm4308 = vmand %vm4275, %vm4299
        %vm4309 = vmand %vm4276, %vm4297
        %vm4310 = vmand %vm4277, %vm4298
        %vm4311 = vmand %vm4278, %vm4299
        %vm4312 = vmand %vm4279, %vm4297
        %vm4313 = vmand %vm4280, %vm4298
        %vm4314 = vmand %vm4281, %vm4299
        %vm4315 = vmand %vm4282, %vm4297
        %vm4316 = vmand %vm4283, %vm4298
        %vm4317 = vmand %vm4284, %vm4299
        %vm4318 = vmand %vm4285, %vm4297
        %vm4319 = vmand %vm4286, %vm4298
        %vm4320 = vmand %vm4287, %vm4299
        %vm4321 = vmand %vm4288, %vm4297
        %vm4322 = vmand %vm4289, %vm4298
        %vm4323 = vmand %vm4290, %vm4299
        %vm4324 = vmand %vm4291, %vm4297
        %vm4325 = vmand %vm4292, %vm4298
        %vm4326 = vmand %vm4293, %vm4299
        %vm4327 = vmand %vm4294, %vm4297
        %vm4328 = vmand %vm4295, %vm4298
        %vm4329 = vmand %vm4296, %vm4299
        %vm4330 = vcmp.gt.f32.partialorder %v4193, 0.0
        %vm4331 = vcmp.gt.f32.partialorder %v4194, 0.0
        %vm4332 = vcmp.gt.f32.partialorder %v4195, 0.0
        %vm4333 = vcmp.gt.f32.partialorder %v4196, 0.0
        %vm4334 = vcmp.gt.f32.partialorder %v4197, 0.0
        %vm4335 = vcmp.gt.f32.partialorder %v4198, 0.0
        %vm4336 = vcmp.gt.f32.partialorder %v4199, 0.0
        %vm4337 = vcmp.gt.f32.partialorder %v4200, 0.0
        %vm4338 = vcmp.gt.f32.partialorder %v4201, 0.0
        %vm4339 = vcmp.gt.f32.partialorder %v4202, 0.0
        %vm4340 = vcmp.gt.f32.partialorder %v4203, 0.0
        %vm4341 = vcmp.gt.f32.partialorder %v4204, 0.0
        %vm4342 = vcmp.gt.f32.partialorder %v4205, 0.0
        %vm4343 = vcmp.gt.f32.partialorder %v4206, 0.0
        %vm4344 = vcmp.gt.f32.partialorder %v4207, 0.0
        %vm4345 = vcmp.gt.f32.partialorder %v4208, 0.0
        %vm4346 = vcmp.gt.f32.partialorder %v4209, 0.0
        %vm4347 = vcmp.gt.f32.partialorder %v4210, 0.0
        %vm4348 = vcmp.gt.f32.partialorder %v4211, 0.0
        %vm4349 = vcmp.gt.f32.partialorder %v4212, 0.0
        %vm4350 = vcmp.gt.f32.partialorder %v4213, 0.0
        %vm4351 = vcmp.gt.f32.partialorder %v4214, 0.0
        %vm4352 = vcmp.gt.f32.partialorder %v4215, 0.0
        %vm4353 = vcmp.gt.f32.partialorder %v4216, 0.0
        %vm4354 = vcmp.gt.f32.partialorder %v4217, 0.0
        %vm4355 = vcmp.gt.f32.partialorder %v4218, 0.0
        %vm4356 = vcmp.gt.f32.partialorder %v4219, 0.0
        %vm4357 = vcmp.gt.f32.partialorder %v4220, 0.0
        %vm4358 = vcmp.gt.f32.partialorder %v4221, 0.0
        %vm4359 = vcmp.gt.f32.partialorder %v4222, 0.0
        %v4360 = vsel %vm4300, 1, 0
        %v4361 = vsel %vm4301, 1, 0
        %v4362 = vsel %vm4302, 1, 0
        %v4363 = vsel %vm4303, 1, 0
        %v4364 = vsel %vm4304, 1, 0
        %v4365 = vsel %vm4305, 1, 0
        %v4366 = vsel %vm4306, 1, 0
        %v4367 = vsel %vm4307, 1, 0
        %v4368 = vsel %vm4308, 1, 0
        %v4369 = vsel %vm4309, 1, 0
        %v4370 = vsel %vm4310, 1, 0
        %v4371 = vsel %vm4311, 1, 0
        %v4372 = vsel %vm4312, 1, 0
        %v4373 = vsel %vm4313, 1, 0
        %v4374 = vsel %vm4314, 1, 0
        %v4375 = vsel %vm4315, 1, 0
        %v4376 = vsel %vm4316, 1, 0
        %v4377 = vsel %vm4317, 1, 0
        %v4378 = vsel %vm4318, 1, 0
        %v4379 = vsel %vm4319, 1, 0
        %v4380 = vsel %vm4320, 1, 0
        %v4381 = vsel %vm4321, 1, 0
        %v4382 = vsel %vm4322, 1, 0
        %v4383 = vsel %vm4323, 1, 0
        %v4384 = vsel %vm4324, 1, 0
        %v4385 = vsel %vm4325, 1, 0
        %v4386 = vsel %vm4326, 1, 0
        %v4387 = vsel %vm4327, 1, 0
        %v4388 = vsel %vm4328, 1, 0
        %v4389 = vsel %vm4329, 1, 0
        %vm4390 = vcmp.eq.s32.totalorder %v4360, 1
        %vm4391 = vcmp.eq.s32.totalorder %v4361, 1
        %vm4392 = vcmp.eq.s32.totalorder %v4362, 1
        %vm4393 = vcmp.eq.s32.totalorder %v4363, 1
        %vm4394 = vcmp.eq.s32.totalorder %v4364, 1
        %vm4395 = vcmp.eq.s32.totalorder %v4365, 1
        %vm4396 = vcmp.eq.s32.totalorder %v4366, 1
        %vm4397 = vcmp.eq.s32.totalorder %v4367, 1
        %vm4398 = vcmp.eq.s32.totalorder %v4368, 1
        %vm4399 = vcmp.eq.s32.totalorder %v4369, 1
        %vm4400 = vcmp.eq.s32.totalorder %v4370, 1
        %vm4401 = vcmp.eq.s32.totalorder %v4371, 1
        %vm4402 = vcmp.eq.s32.totalorder %v4372, 1
        %vm4403 = vcmp.eq.s32.totalorder %v4373, 1
        %vm4404 = vcmp.eq.s32.totalorder %v4374, 1
        %vm4405 = vcmp.eq.s32.totalorder %v4375, 1
        %vm4406 = vcmp.eq.s32.totalorder %v4376, 1
        %vm4407 = vcmp.eq.s32.totalorder %v4377, 1
        %vm4408 = vcmp.eq.s32.totalorder %v4378, 1
        %vm4409 = vcmp.eq.s32.totalorder %v4379, 1
        %vm4410 = vcmp.eq.s32.totalorder %v4380, 1
        %vm4411 = vcmp.eq.s32.totalorder %v4381, 1
        %vm4412 = vcmp.eq.s32.totalorder %v4382, 1
        %vm4413 = vcmp.eq.s32.totalorder %v4383, 1
        %vm4414 = vcmp.eq.s32.totalorder %v4384, 1
        %vm4415 = vcmp.eq.s32.totalorder %v4385, 1
        %vm4416 = vcmp.eq.s32.totalorder %v4386, 1
        %vm4417 = vcmp.eq.s32.totalorder %v4387, 1
        %vm4418 = vcmp.eq.s32.totalorder %v4388, 1
        %vm4419 = vcmp.eq.s32.totalorder %v4389, 1
        %vm4420 = vmand %vm4390, %vm4330
        %vm4421 = vmand %vm4391, %vm4331
        %vm4422 = vmand %vm4392, %vm4332
        %vm4423 = vmand %vm4393, %vm4333
        %vm4424 = vmand %vm4394, %vm4334
        %vm4425 = vmand %vm4395, %vm4335
        %vm4426 = vmand %vm4396, %vm4336
        %vm4427 = vmand %vm4397, %vm4337
        %vm4428 = vmand %vm4398, %vm4338
        %vm4429 = vmand %vm4399, %vm4339
        %vm4430 = vmand %vm4400, %vm4340
        %vm4431 = vmand %vm4401, %vm4341
        %vm4432 = vmand %vm4402, %vm4342
        %vm4433 = vmand %vm4403, %vm4343
        %vm4434 = vmand %vm4404, %vm4344
        %vm4435 = vmand %vm4405, %vm4345
        %vm4436 = vmand %vm4406, %vm4346
        %vm4437 = vmand %vm4407, %vm4347
        %vm4438 = vmand %vm4408, %vm4348
        %vm4439 = vmand %vm4409, %vm4349
        %vm4440 = vmand %vm4410, %vm4350
        %vm4441 = vmand %vm4411, %vm4351
        %vm4442 = vmand %vm4412, %vm4352
        %vm4443 = vmand %vm4413, %vm4353
        %vm4444 = vmand %vm4414, %vm4354
        %vm4445 = vmand %vm4415, %vm4355
        %vm4446 = vmand %vm4416, %vm4356
        %vm4447 = vmand %vm4417, %vm4357
        %vm4448 = vmand %vm4418, %vm4358
        %vm4449 = vmand %vm4419, %vm4359
        %v4450 = vsel %vm4420, %v4193, 0.0
        %v4451 = vsel %vm4421, %v4194, 0.0
        %v4452 = vsel %vm4422, %v4195, 0.0
        %v4453 = vsel %vm4423, %v4196, 0.0
        %v4454 = vsel %vm4424, %v4197, 0.0
        %v4455 = vsel %vm4425, %v4198, 0.0
        %v4456 = vsel %vm4426, %v4199, 0.0
        %v4457 = vsel %vm4427, %v4200, 0.0
        %v4458 = vsel %vm4428, %v4201, 0.0
        %v4459 = vsel %vm4429, %v4202, 0.0
        %v4460 = vsel %vm4430, %v4203, 0.0
        %v4461 = vsel %vm4431, %v4204, 0.0
        %v4462 = vsel %vm4432, %v4205, 0.0
        %v4463 = vsel %vm4433, %v4206, 0.0
        %v4464 = vsel %vm4434, %v4207, 0.0
        %v4465 = vsel %vm4435, %v4208, 0.0
        %v4466 = vsel %vm4436, %v4209, 0.0
        %v4467 = vsel %vm4437, %v4210, 0.0
        %v4468 = vsel %vm4438, %v4211, 0.0
        %v4469 = vsel %vm4439, %v4212, 0.0
        %v4470 = vsel %vm4440, %v4213, 0.0
        %v4471 = vsel %vm4441, %v4214, 0.0
        %v4472 = vsel %vm4442, %v4215, 0.0
        %v4473 = vsel %vm4443, %v4216, 0.0
        %v4474 = vsel %vm4444, %v4217, 0.0
        %v4475 = vsel %vm4445, %v4218, 0.0
        %v4476 = vsel %vm4446, %v4219, 0.0
        %v4477 = vsel %vm4447, %v4220, 0.0
        %v4478 = vsel %vm4448, %v4221, 0.0
        %v4479 = vsel %vm4449, %v4222, 0.0
        %v4480 = vld [vmem:[%s11] sm:$0x7]
        %v4481 = vld [vmem:[%s11 + $0x4] sm:$0x7]
        %v4482 = vld [vmem:[%s11 + $0x8] sm:$0x7]
        %v4483 = vlaneseq
        %v4484 = vshrl.u32 %v4483, 7
        %v4485 = vsub.s32 0, %v4484
        %v4486 = vrot.slane %v4480, %v4485
        %v4487 = vmul.f32 %v4450, %v4486
        %v4488 = vmul.f32 %v4451, %v4486
        %v4489 = vmul.f32 %v4453, %v4486
        %v4490 = vmul.f32 %v4454, %v4486
        %v4491 = vmul.f32 %v4456, %v4486
        %v4492 = vmul.f32 %v4457, %v4486
        %v4493 = vmul.f32 %v4459, %v4486
        %v4494 = vmul.f32 %v4460, %v4486
        %v4495 = vmul.f32 %v4462, %v4486
        %v4496 = vmul.f32 %v4463, %v4486
        %v4497 = vmul.f32 %v4465, %v4486
        %v4498 = vmul.f32 %v4466, %v4486
        %v4499 = vmul.f32 %v4468, %v4486
        %v4500 = vmul.f32 %v4469, %v4486
        %v4501 = vmul.f32 %v4471, %v4486
        %v4502 = vmul.f32 %v4472, %v4486
        %v4503 = vlaneseq
        %v4504 = vshrl.u32 %v4503, 7
        %v4505 = vsub.s32 0, %v4504
        %v4506 = vrot.slane %v4481, %v4505
        %v4507 = vmul.f32 %v4453, %v4506
        %v4508 = vmul.f32 %v4454, %v4506
        %v4509 = vmul.f32 %v4456, %v4506
        %v4510 = vmul.f32 %v4457, %v4506
        %v4511 = vmul.f32 %v4459, %v4506
        %v4512 = vmul.f32 %v4460, %v4506
        %v4513 = vmul.f32 %v4462, %v4506
        %v4514 = vmul.f32 %v4463, %v4506
        %v4515 = vmul.f32 %v4465, %v4506
        %v4516 = vmul.f32 %v4466, %v4506
        %v4517 = vmul.f32 %v4468, %v4506
        %v4518 = vmul.f32 %v4469, %v4506
        %v4519 = vmul.f32 %v4471, %v4506
        %v4520 = vmul.f32 %v4472, %v4506
        %v4521 = vmul.f32 %v4474, %v4506
        %v4522 = vmul.f32 %v4475, %v4506
        %v4523 = vadd.f32 %v4487, %v4507
        %v4524 = vadd.f32 %v4488, %v4508
        %v4525 = vadd.f32 %v4489, %v4509
        %v4526 = vadd.f32 %v4490, %v4510
        %v4527 = vadd.f32 %v4491, %v4511
        %v4528 = vadd.f32 %v4492, %v4512
        %v4529 = vadd.f32 %v4493, %v4513
        %v4530 = vadd.f32 %v4494, %v4514
        %v4531 = vadd.f32 %v4495, %v4515
        %v4532 = vadd.f32 %v4496, %v4516
        %v4533 = vadd.f32 %v4497, %v4517
        %v4534 = vadd.f32 %v4498, %v4518
        %v4535 = vadd.f32 %v4499, %v4519
        %v4536 = vadd.f32 %v4500, %v4520
        %v4537 = vadd.f32 %v4501, %v4521
        %v4538 = vadd.f32 %v4502, %v4522
        %v4539 = vlaneseq
        %v4540 = vshrl.u32 %v4539, 7
        %v4541 = vsub.s32 0, %v4540
        %v4542 = vrot.slane %v4482, %v4541
        %v4543 = vmul.f32 %v4456, %v4542
        %v4544 = vmul.f32 %v4457, %v4542
        %v4545 = vmul.f32 %v4459, %v4542
        %v4546 = vmul.f32 %v4460, %v4542
        %v4547 = vmul.f32 %v4462, %v4542
        %v4548 = vmul.f32 %v4463, %v4542
        %v4549 = vmul.f32 %v4465, %v4542
        %v4550 = vmul.f32 %v4466, %v4542
        %v4551 = vmul.f32 %v4468, %v4542
        %v4552 = vmul.f32 %v4469, %v4542
        %v4553 = vmul.f32 %v4471, %v4542
        %v4554 = vmul.f32 %v4472, %v4542
        %v4555 = vmul.f32 %v4474, %v4542
        %v4556 = vmul.f32 %v4475, %v4542
        %v4557 = vmul.f32 %v4477, %v4542
        %v4558 = vmul.f32 %v4478, %v4542
        %v4559 = vadd.f32 %v4523, %v4543
        %v4560 = vadd.f32 %v4524, %v4544
        %v4561 = vadd.f32 %v4525, %v4545
        %v4562 = vadd.f32 %v4526, %v4546
        %v4563 = vadd.f32 %v4527, %v4547
        %v4564 = vadd.f32 %v4528, %v4548
        %v4565 = vadd.f32 %v4529, %v4549
        %v4566 = vadd.f32 %v4530, %v4550
        %v4567 = vadd.f32 %v4531, %v4551
        %v4568 = vadd.f32 %v4532, %v4552
        %v4569 = vadd.f32 %v4533, %v4553
        %v4570 = vadd.f32 %v4534, %v4554
        %v4571 = vadd.f32 %v4535, %v4555
        %v4572 = vadd.f32 %v4536, %v4556
        %v4573 = vadd.f32 %v4537, %v4557
        %v4574 = vadd.f32 %v4538, %v4558
        %v4575 = vlaneseq
        %v4576 = vshrl.u32 %v4575, 7
        %v4577 = vsub.s32 1, %v4576
        %v4578 = vrot.slane %v4480, %v4577
        %v4579 = vmul.f32 %v4450, %v4578
        %v4580 = vmul.f32 %v4451, %v4578
        %v4581 = vmul.f32 %v4452, %v4578
        %v4582 = vmul.f32 %v4453, %v4578
        %v4583 = vmul.f32 %v4454, %v4578
        %v4584 = vmul.f32 %v4455, %v4578
        %v4585 = vmul.f32 %v4456, %v4578
        %v4586 = vmul.f32 %v4457, %v4578
        %v4587 = vmul.f32 %v4458, %v4578
        %v4588 = vmul.f32 %v4459, %v4578
        %v4589 = vmul.f32 %v4460, %v4578
        %v4590 = vmul.f32 %v4461, %v4578
        %v4591 = vmul.f32 %v4462, %v4578
        %v4592 = vmul.f32 %v4463, %v4578
        %v4593 = vmul.f32 %v4464, %v4578
        %v4594 = vmul.f32 %v4465, %v4578
        %v4595 = vmul.f32 %v4466, %v4578
        %v4596 = vmul.f32 %v4467, %v4578
        %v4597 = vmul.f32 %v4468, %v4578
        %v4598 = vmul.f32 %v4469, %v4578
        %v4599 = vmul.f32 %v4470, %v4578
        %v4600 = vmul.f32 %v4471, %v4578
        %v4601 = vmul.f32 %v4472, %v4578
        %v4602 = vmul.f32 %v4473, %v4578
        %v4603 = vlaneseq
        %v4604 = vshrl.u32 %v4603, 7
        %v4605 = vsub.s32 1, %v4604
        %v4606 = vrot.slane %v4481, %v4605
        %v4607 = vmul.f32 %v4453, %v4606
        %v4608 = vmul.f32 %v4454, %v4606
        %v4609 = vmul.f32 %v4455, %v4606
        %v4610 = vmul.f32 %v4456, %v4606
        %v4611 = vmul.f32 %v4457, %v4606
        %v4612 = vmul.f32 %v4458, %v4606
        %v4613 = vmul.f32 %v4459, %v4606
        %v4614 = vmul.f32 %v4460, %v4606
        %v4615 = vmul.f32 %v4461, %v4606
        %v4616 = vmul.f32 %v4462, %v4606
        %v4617 = vmul.f32 %v4463, %v4606
        %v4618 = vmul.f32 %v4464, %v4606
        %v4619 = vmul.f32 %v4465, %v4606
        %v4620 = vmul.f32 %v4466, %v4606
        %v4621 = vmul.f32 %v4467, %v4606
        %v4622 = vmul.f32 %v4468, %v4606
        %v4623 = vmul.f32 %v4469, %v4606
        %v4624 = vmul.f32 %v4470, %v4606
        %v4625 = vmul.f32 %v4471, %v4606
        %v4626 = vmul.f32 %v4472, %v4606
        %v4627 = vmul.f32 %v4473, %v4606
        %v4628 = vmul.f32 %v4474, %v4606
        %v4629 = vmul.f32 %v4475, %v4606
        %v4630 = vmul.f32 %v4476, %v4606
        %v4631 = vadd.f32 %v4579, %v4607
        %v4632 = vadd.f32 %v4580, %v4608
        %v4633 = vadd.f32 %v4581, %v4609
        %v4634 = vadd.f32 %v4582, %v4610
        %v4635 = vadd.f32 %v4583, %v4611
        %v4636 = vadd.f32 %v4584, %v4612
        %v4637 = vadd.f32 %v4585, %v4613
        %v4638 = vadd.f32 %v4586, %v4614
        %v4639 = vadd.f32 %v4587, %v4615
        %v4640 = vadd.f32 %v4588, %v4616
        %v4641 = vadd.f32 %v4589, %v4617
        %v4642 = vadd.f32 %v4590, %v4618
        %v4643 = vadd.f32 %v4591, %v4619
        %v4644 = vadd.f32 %v4592, %v4620
        %v4645 = vadd.f32 %v4593, %v4621
        %v4646 = vadd.f32 %v4594, %v4622
        %v4647 = vadd.f32 %v4595, %v4623
        %v4648 = vadd.f32 %v4596, %v4624
        %v4649 = vadd.f32 %v4597, %v4625
        %v4650 = vadd.f32 %v4598, %v4626
        %v4651 = vadd.f32 %v4599, %v4627
        %v4652 = vadd.f32 %v4600, %v4628
        %v4653 = vadd.f32 %v4601, %v4629
        %v4654 = vadd.f32 %v4602, %v4630
        %v4655 = vlaneseq
        %v4656 = vshrl.u32 %v4655, 7
        %v4657 = vsub.s32 1, %v4656
        %v4658 = vrot.slane %v4482, %v4657
        %v4659 = vmul.f32 %v4456, %v4658
        %v4660 = vmul.f32 %v4457, %v4658
        %v4661 = vmul.f32 %v4458, %v4658
        %v4662 = vmul.f32 %v4459, %v4658
        %v4663 = vmul.f32 %v4460, %v4658
        %v4664 = vmul.f32 %v4461, %v4658
        %v4665 = vmul.f32 %v4462, %v4658
        %v4666 = vmul.f32 %v4463, %v4658
        %v4667 = vmul.f32 %v4464, %v4658
        %v4668 = vmul.f32 %v4465, %v4658
        %v4669 = vmul.f32 %v4466, %v4658
        %v4670 = vmul.f32 %v4467, %v4658
        %v4671 = vmul.f32 %v4468, %v4658
        %v4672 = vmul.f32 %v4469, %v4658
        %v4673 = vmul.f32 %v4470, %v4658
        %v4674 = vmul.f32 %v4471, %v4658
        %v4675 = vmul.f32 %v4472, %v4658
        %v4676 = vmul.f32 %v4473, %v4658
        %v4677 = vmul.f32 %v4474, %v4658
        %v4678 = vmul.f32 %v4475, %v4658
        %v4679 = vmul.f32 %v4476, %v4658
        %v4680 = vmul.f32 %v4477, %v4658
        %v4681 = vmul.f32 %v4478, %v4658
        %v4682 = vmul.f32 %v4479, %v4658
        %v4683 = vadd.f32 %v4631, %v4659
        %v4684 = vadd.f32 %v4632, %v4660
        %v4685 = vadd.f32 %v4633, %v4661
        %v4686 = vadd.f32 %v4634, %v4662
        %v4687 = vadd.f32 %v4635, %v4663
        %v4688 = vadd.f32 %v4636, %v4664
        %v4689 = vadd.f32 %v4637, %v4665
        %v4690 = vadd.f32 %v4638, %v4666
        %v4691 = vadd.f32 %v4639, %v4667
        %v4692 = vadd.f32 %v4640, %v4668
        %v4693 = vadd.f32 %v4641, %v4669
        %v4694 = vadd.f32 %v4642, %v4670
        %v4695 = vadd.f32 %v4643, %v4671
        %v4696 = vadd.f32 %v4644, %v4672
        %v4697 = vadd.f32 %v4645, %v4673
        %v4698 = vadd.f32 %v4646, %v4674
        %v4699 = vadd.f32 %v4647, %v4675
        %v4700 = vadd.f32 %v4648, %v4676
        %v4701 = vadd.f32 %v4649, %v4677
        %v4702 = vadd.f32 %v4650, %v4678
        %v4703 = vadd.f32 %v4651, %v4679
        %v4704 = vadd.f32 %v4652, %v4680
        %v4705 = vadd.f32 %v4653, %v4681
        %v4706 = vadd.f32 %v4654, %v4682
        %v4707 = vlaneseq
        %v4708 = vshrl.u32 %v4707, 7
        %v4709 = vsub.s32 2, %v4708
        %v4710 = vrot.slane %v4480, %v4709
        %v4711 = vmul.f32 %v4450, %v4710
        %v4712 = vmul.f32 %v4451, %v4710
        %v4713 = vmul.f32 %v4452, %v4710
        %v4714 = vmul.f32 %v4453, %v4710
        %v4715 = vmul.f32 %v4454, %v4710
        %v4716 = vmul.f32 %v4455, %v4710
        %v4717 = vmul.f32 %v4456, %v4710
        %v4718 = vmul.f32 %v4457, %v4710
        %v4719 = vmul.f32 %v4458, %v4710
        %v4720 = vmul.f32 %v4459, %v4710
        %v4721 = vmul.f32 %v4460, %v4710
        %v4722 = vmul.f32 %v4461, %v4710
        %v4723 = vmul.f32 %v4462, %v4710
        %v4724 = vmul.f32 %v4463, %v4710
        %v4725 = vmul.f32 %v4464, %v4710
        %v4726 = vmul.f32 %v4465, %v4710
        %v4727 = vmul.f32 %v4466, %v4710
        %v4728 = vmul.f32 %v4467, %v4710
        %v4729 = vmul.f32 %v4468, %v4710
        %v4730 = vmul.f32 %v4469, %v4710
        %v4731 = vmul.f32 %v4470, %v4710
        %v4732 = vmul.f32 %v4471, %v4710
        %v4733 = vmul.f32 %v4472, %v4710
        %v4734 = vmul.f32 %v4473, %v4710
        %v4735 = vlaneseq
        %v4736 = vshrl.u32 %v4735, 7
        %v4737 = vsub.s32 2, %v4736
        %v4738 = vrot.slane %v4481, %v4737
        %v4739 = vmul.f32 %v4453, %v4738
        %v4740 = vmul.f32 %v4454, %v4738
        %v4741 = vmul.f32 %v4455, %v4738
        %v4742 = vmul.f32 %v4456, %v4738
        %v4743 = vmul.f32 %v4457, %v4738
        %v4744 = vmul.f32 %v4458, %v4738
        %v4745 = vmul.f32 %v4459, %v4738
        %v4746 = vmul.f32 %v4460, %v4738
        %v4747 = vmul.f32 %v4461, %v4738
        %v4748 = vmul.f32 %v4462, %v4738
        %v4749 = vmul.f32 %v4463, %v4738
        %v4750 = vmul.f32 %v4464, %v4738
        %v4751 = vmul.f32 %v4465, %v4738
        %v4752 = vmul.f32 %v4466, %v4738
        %v4753 = vmul.f32 %v4467, %v4738
        %v4754 = vmul.f32 %v4468, %v4738
        %v4755 = vmul.f32 %v4469, %v4738
        %v4756 = vmul.f32 %v4470, %v4738
        %v4757 = vmul.f32 %v4471, %v4738
        %v4758 = vmul.f32 %v4472, %v4738
        %v4759 = vmul.f32 %v4473, %v4738
        %v4760 = vmul.f32 %v4474, %v4738
        %v4761 = vmul.f32 %v4475, %v4738
        %v4762 = vmul.f32 %v4476, %v4738
        %v4763 = vadd.f32 %v4711, %v4739
        %v4764 = vadd.f32 %v4712, %v4740
        %v4765 = vadd.f32 %v4713, %v4741
        %v4766 = vadd.f32 %v4714, %v4742
        %v4767 = vadd.f32 %v4715, %v4743
        %v4768 = vadd.f32 %v4716, %v4744
        %v4769 = vadd.f32 %v4717, %v4745
        %v4770 = vadd.f32 %v4718, %v4746
        %v4771 = vadd.f32 %v4719, %v4747
        %v4772 = vadd.f32 %v4720, %v4748
        %v4773 = vadd.f32 %v4721, %v4749
        %v4774 = vadd.f32 %v4722, %v4750
        %v4775 = vadd.f32 %v4723, %v4751
        %v4776 = vadd.f32 %v4724, %v4752
        %v4777 = vadd.f32 %v4725, %v4753
        %v4778 = vadd.f32 %v4726, %v4754
        %v4779 = vadd.f32 %v4727, %v4755
        %v4780 = vadd.f32 %v4728, %v4756
        %v4781 = vadd.f32 %v4729, %v4757
        %v4782 = vadd.f32 %v4730, %v4758
        %v4783 = vadd.f32 %v4731, %v4759
        %v4784 = vadd.f32 %v4732, %v4760
        %v4785 = vadd.f32 %v4733, %v4761
        %v4786 = vadd.f32 %v4734, %v4762
        %v4787 = vlaneseq
        %v4788 = vshrl.u32 %v4787, 7
        %v4789 = vsub.s32 2, %v4788
        %v4790 = vrot.slane %v4482, %v4789
        %v4791 = vmul.f32 %v4456, %v4790
        %v4792 = vmul.f32 %v4457, %v4790
        %v4793 = vmul.f32 %v4458, %v4790
        %v4794 = vmul.f32 %v4459, %v4790
        %v4795 = vmul.f32 %v4460, %v4790
        %v4796 = vmul.f32 %v4461, %v4790
        %v4797 = vmul.f32 %v4462, %v4790
        %v4798 = vmul.f32 %v4463, %v4790
        %v4799 = vmul.f32 %v4464, %v4790
        %v4800 = vmul.f32 %v4465, %v4790
        %v4801 = vmul.f32 %v4466, %v4790
        %v4802 = vmul.f32 %v4467, %v4790
        %v4803 = vmul.f32 %v4468, %v4790
        %v4804 = vmul.f32 %v4469, %v4790
        %v4805 = vmul.f32 %v4470, %v4790
        %v4806 = vmul.f32 %v4471, %v4790
        %v4807 = vmul.f32 %v4472, %v4790
        %v4808 = vmul.f32 %v4473, %v4790
        %v4809 = vmul.f32 %v4474, %v4790
        %v4810 = vmul.f32 %v4475, %v4790
        %v4811 = vmul.f32 %v4476, %v4790
        %v4812 = vmul.f32 %v4477, %v4790
        %v4813 = vmul.f32 %v4478, %v4790
        %v4814 = vmul.f32 %v4479, %v4790
        %v4815 = vadd.f32 %v4763, %v4791
        %v4816 = vadd.f32 %v4764, %v4792
        %v4817 = vadd.f32 %v4765, %v4793
        %v4818 = vadd.f32 %v4766, %v4794
        %v4819 = vadd.f32 %v4767, %v4795
        %v4820 = vadd.f32 %v4768, %v4796
        %v4821 = vadd.f32 %v4769, %v4797
        %v4822 = vadd.f32 %v4770, %v4798
        %v4823 = vadd.f32 %v4771, %v4799
        %v4824 = vadd.f32 %v4772, %v4800
        %v4825 = vadd.f32 %v4773, %v4801
        %v4826 = vadd.f32 %v4774, %v4802
        %v4827 = vadd.f32 %v4775, %v4803
        %v4828 = vadd.f32 %v4776, %v4804
        %v4829 = vadd.f32 %v4777, %v4805
        %v4830 = vadd.f32 %v4778, %v4806
        %v4831 = vadd.f32 %v4779, %v4807
        %v4832 = vadd.f32 %v4780, %v4808
        %v4833 = vadd.f32 %v4781, %v4809
        %v4834 = vadd.f32 %v4782, %v4810
        %v4835 = vadd.f32 %v4783, %v4811
        %v4836 = vadd.f32 %v4784, %v4812
        %v4837 = vadd.f32 %v4785, %v4813
        %v4838 = vadd.f32 %v4786, %v4814
        %v4863 = vrot.slane %v4683, 1
        %v4864 = vrot.slane %v4684, 1
        %v4865 = vsel %vm1697, %v4863, %v4864
        %v4866 = vrot.slane %v4685, 1
        %v4867 = vsel %vm1697, %v4864, %v4866
        %v4868 = vrot.slane %v4686, 1
        %v4869 = vrot.slane %v4687, 1
        %v4870 = vsel %vm1697, %v4868, %v4869
        %v4871 = vrot.slane %v4688, 1
        %v4872 = vsel %vm1697, %v4869, %v4871
        %v4873 = vrot.slane %v4689, 1
        %v4874 = vrot.slane %v4690, 1
        %v4875 = vsel %vm1697, %v4873, %v4874
        %v4876 = vrot.slane %v4691, 1
        %v4877 = vsel %vm1697, %v4874, %v4876
        %v4878 = vrot.slane %v4692, 1
        %v4879 = vrot.slane %v4693, 1
        %v4880 = vsel %vm1697, %v4878, %v4879
        %v4881 = vrot.slane %v4694, 1
        %v4882 = vsel %vm1697, %v4879, %v4881
        %v4883 = vrot.slane %v4695, 1
        %v4884 = vrot.slane %v4696, 1
        %v4885 = vsel %vm1697, %v4883, %v4884
        %v4886 = vrot.slane %v4697, 1
        %v4887 = vsel %vm1697, %v4884, %v4886
        %v4888 = vrot.slane %v4698, 1
        %v4889 = vrot.slane %v4699, 1
        %v4890 = vsel %vm1697, %v4888, %v4889
        %v4891 = vrot.slane %v4700, 1
        %v4892 = vsel %vm1697, %v4889, %v4891
        %v4893 = vrot.slane %v4701, 1
        %v4894 = vrot.slane %v4702, 1
        %v4895 = vsel %vm1697, %v4893, %v4894
        %v4896 = vrot.slane %v4703, 1
        %v4897 = vsel %vm1697, %v4894, %v4896
        %v4898 = vrot.slane %v4704, 1
        %v4899 = vrot.slane %v4705, 1
        %v4900 = vsel %vm1697, %v4898, %v4899
        %v4901 = vrot.slane %v4706, 1
        %v4902 = vsel %vm1697, %v4899, %v4901
        %v4919 = vadd.f32 %v4559, %v4865
        %v4920 = vadd.f32 %v4560, %v4867
        %v4921 = vadd.f32 %v4561, %v4870
        %v4922 = vadd.f32 %v4562, %v4872
        %v4923 = vadd.f32 %v4563, %v4875
        %v4924 = vadd.f32 %v4564, %v4877
        %v4925 = vadd.f32 %v4565, %v4880
        %v4926 = vadd.f32 %v4566, %v4882
        %v4927 = vadd.f32 %v4567, %v4885
        %v4928 = vadd.f32 %v4568, %v4887
        %v4929 = vadd.f32 %v4569, %v4890
        %v4930 = vadd.f32 %v4570, %v4892
        %v4931 = vadd.f32 %v4571, %v4895
        %v4932 = vadd.f32 %v4572, %v4897
        %v4933 = vadd.f32 %v4573, %v4900
        %v4934 = vadd.f32 %v4574, %v4902
        %v4959 = vrot.slane %v4815, 2
        %v4960 = vrot.slane %v4816, 2
        %v4961 = vsel %vm1962, %v4959, %v4960
        %v4962 = vrot.slane %v4817, 2
        %v4963 = vsel %vm1962, %v4960, %v4962
        %v4964 = vrot.slane %v4818, 2
        %v4965 = vrot.slane %v4819, 2
        %v4966 = vsel %vm1962, %v4964, %v4965
        %v4967 = vrot.slane %v4820, 2
        %v4968 = vsel %vm1962, %v4965, %v4967
        %v4969 = vrot.slane %v4821, 2
        %v4970 = vrot.slane %v4822, 2
        %v4971 = vsel %vm1962, %v4969, %v4970
        %v4972 = vrot.slane %v4823, 2
        %v4973 = vsel %vm1962, %v4970, %v4972
        %v4974 = vrot.slane %v4824, 2
        %v4975 = vrot.slane %v4825, 2
        %v4976 = vsel %vm1962, %v4974, %v4975
        %v4977 = vrot.slane %v4826, 2
        %v4978 = vsel %vm1962, %v4975, %v4977
        %v4979 = vrot.slane %v4827, 2
        %v4980 = vrot.slane %v4828, 2
        %v4981 = vsel %vm1962, %v4979, %v4980
        %v4982 = vrot.slane %v4829, 2
        %v4983 = vsel %vm1962, %v4980, %v4982
        %v4984 = vrot.slane %v4830, 2
        %v4985 = vrot.slane %v4831, 2
        %v4986 = vsel %vm1962, %v4984, %v4985
        %v4987 = vrot.slane %v4832, 2
        %v4988 = vsel %vm1962, %v4985, %v4987
        %v4989 = vrot.slane %v4833, 2
        %v4990 = vrot.slane %v4834, 2
        %v4991 = vsel %vm1962, %v4989, %v4990
        %v4992 = vrot.slane %v4835, 2
        %v4993 = vsel %vm1962, %v4990, %v4992
        %v4994 = vrot.slane %v4836, 2
        %v4995 = vrot.slane %v4837, 2
        %v4996 = vsel %vm1962, %v4994, %v4995
        %v4997 = vrot.slane %v4838, 2
        %v4998 = vsel %vm1962, %v4995, %v4997
        %v5015 = vadd.f32 %v4919, %v4961
        %v5016 = vadd.f32 %v4920, %v4963
        %v5017 = vadd.f32 %v4921, %v4966
        %v5018 = vadd.f32 %v4922, %v4968
        %v5019 = vadd.f32 %v4923, %v4971
        %v5020 = vadd.f32 %v4924, %v4973
        %v5021 = vadd.f32 %v4925, %v4976
        %v5022 = vadd.f32 %v4926, %v4978
        %v5023 = vadd.f32 %v4927, %v4981
        %v5024 = vadd.f32 %v4928, %v4983
        %v5025 = vadd.f32 %v4929, %v4986
        %v5026 = vadd.f32 %v4930, %v4988
        %v5027 = vadd.f32 %v4931, %v4991
        %v5028 = vadd.f32 %v4932, %v4993
        %v5029 = vadd.f32 %v4933, %v4996
        %v5030 = vadd.f32 %v4934, %v4998
        %v5031 = vld [vmem:[%s12] sm:$0x1]
        %v5033 = vlaneseq
        %v5034 = vshrl.u32 %v5033, 7
        %v5035 = vsub.s32 0, %v5034
        %v5036 = vrot.slane %v5031, %v5035
        %v5038 = vadd.f32 %v5015, %v5036
        %v5039 = vadd.f32 %v5016, %v5036
        %v5040 = vadd.f32 %v5017, %v5036
        %v5041 = vadd.f32 %v5018, %v5036
        %v5042 = vadd.f32 %v5019, %v5036
        %v5043 = vadd.f32 %v5020, %v5036
        %v5044 = vadd.f32 %v5021, %v5036
        %v5045 = vadd.f32 %v5022, %v5036
        %v5046 = vadd.f32 %v5023, %v5036
        %v5047 = vadd.f32 %v5024, %v5036
        %v5048 = vadd.f32 %v5025, %v5036
        %v5049 = vadd.f32 %v5026, %v5036
        %v5050 = vadd.f32 %v5027, %v5036
        %v5051 = vadd.f32 %v5028, %v5036
        %v5052 = vadd.f32 %v5029, %v5036
        %v5053 = vadd.f32 %v5030, %v5036
        %v5054 = vld [vmem:[#allocation13] sm:$0xf]
        %v5055 = vld [vmem:[#allocation13 + $0x4] sm:$0xf]
        %v5056 = vld [vmem:[#allocation13 + $0x8] sm:$0xf]
        %v5057 = vld [vmem:[#allocation13 + $0xc] sm:$0xf]
        %v5058 = vld [vmem:[#allocation13 + $0x10] sm:$0xf]
        %v5059 = vld [vmem:[#allocation13 + $0x14] sm:$0xf]
        %v5060 = vld [vmem:[#allocation13 + $0x18] sm:$0xf]
        %v5061 = vld [vmem:[#allocation13 + $0x1c] sm:$0xf]
        %v5062 = vld [vmem:[#allocation13 + $0x20] sm:$0xf]
        %v5063 = vld [vmem:[#allocation13 + $0x24] sm:$0xf]
        %v5064 = vld [vmem:[#allocation13 + $0x28] sm:$0xf]
        %v5065 = vld [vmem:[#allocation13 + $0x2c] sm:$0xf]
        %v5066 = vld [vmem:[#allocation13 + $0x30] sm:$0xf]
        %v5067 = vld [vmem:[#allocation13 + $0x34] sm:$0xf]
        %v5068 = vld [vmem:[#allocation13 + $0x38] sm:$0xf]
        %v5069 = vld [vmem:[#allocation13 + $0x3c] sm:$0xf]
        %v5070 = vld [vmem:[%s14] sm:$0x1]
        %v5071 = vpack.c.bf16 %v5039, %v5038
        %v5072 = vpack.c.bf16 %v5041, %v5040
        %v5073 = vpack.c.bf16 %v5043, %v5042
        %v5074 = vpack.c.bf16 %v5045, %v5044
        %v5075 = vpack.c.bf16 %v5047, %v5046
        %v5076 = vpack.c.bf16 %v5049, %v5048
        %v5077 = vpack.c.bf16 %v5051, %v5050
        %v5078 = vpack.c.bf16 %v5053, %v5052
        %v5095 = vunpack.c.l.b16 %v5054
        %v5096 = vunpack.c.l.b16 %v5055
        %v5097 = vunpack.c.l.b16 %v5056
        %v5098 = vunpack.c.l.b16 %v5057
        %v5099 = vunpack.c.l.b16 %v5058
        %v5100 = vunpack.c.l.b16 %v5059
        %v5101 = vunpack.c.l.b16 %v5060
        %v5102 = vunpack.c.l.b16 %v5061
        %v5103 = vunpack.c.l.b16 %v5062
        %v5104 = vunpack.c.l.b16 %v5063
        %v5105 = vunpack.c.l.b16 %v5064
        %v5106 = vunpack.c.l.b16 %v5065
        %v5107 = vunpack.c.l.b16 %v5066
        %v5108 = vunpack.c.l.b16 %v5067
        %v5109 = vunpack.c.l.b16 %v5068
        %v5110 = vunpack.c.l.b16 %v5069
        %v5111 = vpack.c.b16 %v5096, %v5095
        %v5112 = vpack.c.b16 %v5098, %v5097
        %v5113 = vpack.c.b16 %v5100, %v5099
        %v5114 = vpack.c.b16 %v5102, %v5101
        %v5115 = vpack.c.b16 %v5104, %v5103
        %v5116 = vpack.c.b16 %v5106, %v5105
        %v5117 = vpack.c.b16 %v5108, %v5107
        %v5118 = vpack.c.b16 %v5110, %v5109
        %5127 = vmatprep.subr.bf16.mxu0 0
        %5128 = vmatpush1.bf16.msra.mxu0 %v5111
        %5129 = vmatprep.subr.bf16.mxu0 0
        %5130 = vmatpush1.bf16.msra.mxu0 %v5112
        %5131 = vmatprep.subr.bf16.mxu0 0
        %5132 = vmatpush1.bf16.msra.mxu0 %v5113
        %5133 = vmatprep.subr.bf16.mxu0 0
        %5134 = vmatpush1.bf16.msra.mxu0 %v5114
        %5135 = vmatprep.subr.bf16.mxu0 0
        %5136 = vmatpush1.bf16.msra.mxu0 %v5115
        %5137 = vmatprep.subr.bf16.mxu0 0
        %5138 = vmatpush1.bf16.msra.mxu0 %v5116
        %5139 = vmatprep.subr.bf16.mxu0 0
        %5140 = vmatpush1.bf16.msra.mxu0 %v5117
        %5141 = vmatprep.subr.bf16.mxu0 0
        %5142 = vmatpush1.bf16.msra.mxu0 %v5118
        %5143 = vmatprep.subr.bf16.mxu0 0
        %5144 = vmatpush1.bf16.msra.mxu0 0
        %5145 = vmatprep.subr.bf16.mxu0 0
        %5146 = vmatpush1.bf16.msra.mxu0 0
        %5147 = vmatprep.subr.bf16.mxu0 0
        %5148 = vmatpush1.bf16.msra.mxu0 0
        %5149 = vmatprep.subr.bf16.mxu0 0
        %5150 = vmatpush1.bf16.msra.mxu0 0
        %5151 = vmatprep.subr.bf16.mxu0 0
        %5152 = vmatpush1.bf16.msra.mxu0 0
        %5153 = vmatprep.subr.bf16.mxu0 0
        %5154 = vmatpush1.bf16.msra.mxu0 0
        %5155 = vmatprep.subr.bf16.mxu0 0
        %5156 = vmatpush1.bf16.msra.mxu0 0
        %5157 = vmatprep.subr.bf16.mxu0 0
        %5158 = vmatpush1.bf16.msra.mxu0 0
        %5159 = vmatprep.mubr.bf16.mxu0 0
        %5160 = vmatmul.mubr.bf16.gmra.mrb[0].mxu0 %v5071
        %v5161 = vpop.f32.mrb[0].mxu0
        %v5162 = vadd.f32 0.0, %v5161
        %v5163 = vpop.f32.mrb[0].mxu0
        %v5164 = vpop.f32.mrb[0].mxu0
        %v5165 = vadd.f32 0.0, %v5164
        %v5166 = vpop.f32.mrb[0].mxu0
        %5167 = vmatprep.mubr.bf16.mxu0 0
        %5168 = vmatmul.mubr.bf16.gmra.mrb[0].mxu0 %v5072
        %v5169 = vpop.f32.mrb[0].mxu0
        %v5170 = vadd.f32 0.0, %v5169
        %v5171 = vpop.f32.mrb[0].mxu0
        %v5172 = vpop.f32.mrb[0].mxu0
        %v5173 = vadd.f32 0.0, %v5172
        %v5174 = vpop.f32.mrb[0].mxu0
        %5175 = vmatprep.mubr.bf16.mxu0 0
        %5176 = vmatmul.mubr.bf16.gmra.mrb[0].mxu0 %v5073
        %v5177 = vpop.f32.mrb[0].mxu0
        %v5178 = vadd.f32 0.0, %v5177
        %v5179 = vpop.f32.mrb[0].mxu0
        %v5180 = vpop.f32.mrb[0].mxu0
        %v5181 = vadd.f32 0.0, %v5180
        %v5182 = vpop.f32.mrb[0].mxu0
        %5183 = vmatprep.mubr.bf16.mxu0 0
        %5184 = vmatmul.mubr.bf16.gmra.mrb[0].mxu0 %v5074
        %v5185 = vpop.f32.mrb[0].mxu0
        %v5186 = vadd.f32 0.0, %v5185
        %v5187 = vpop.f32.mrb[0].mxu0
        %v5188 = vpop.f32.mrb[0].mxu0
        %v5189 = vadd.f32 0.0, %v5188
        %v5190 = vpop.f32.mrb[0].mxu0
        %5191 = vmatprep.mubr.bf16.mxu0 0
        %5192 = vmatmul.mubr.bf16.gmra.mrb[0].mxu0 %v5075
        %v5193 = vpop.f32.mrb[0].mxu0
        %v5194 = vadd.f32 0.0, %v5193
        %v5195 = vpop.f32.mrb[0].mxu0
        %v5196 = vpop.f32.mrb[0].mxu0
        %v5197 = vadd.f32 0.0, %v5196
        %v5198 = vpop.f32.mrb[0].mxu0
        %5199 = vmatprep.mubr.bf16.mxu0 0
        %5200 = vmatmul.mubr.bf16.gmra.mrb[0].mxu0 %v5076
        %v5201 = vpop.f32.mrb[0].mxu0
        %v5202 = vadd.f32 0.0, %v5201
        %v5203 = vpop.f32.mrb[0].mxu0
        %v5204 = vpop.f32.mrb[0].mxu0
        %v5205 = vadd.f32 0.0, %v5204
        %v5206 = vpop.f32.mrb[0].mxu0
        %5207 = vmatprep.mubr.bf16.mxu0 0
        %5208 = vmatmul.mubr.bf16.gmra.mrb[0].mxu0 %v5077
        %v5209 = vpop.f32.mrb[0].mxu0
        %v5210 = vadd.f32 0.0, %v5209
        %v5211 = vpop.f32.mrb[0].mxu0
        %v5212 = vpop.f32.mrb[0].mxu0
        %v5213 = vadd.f32 0.0, %v5212
        %v5214 = vpop.f32.mrb[0].mxu0
        %5215 = vmatprep.mubr.bf16.mxu0 0
        %5216 = vmatmul.mubr.bf16.gmra.mrb[0].mxu0 %v5078
        %v5217 = vpop.f32.mrb[0].mxu0
        %v5218 = vadd.f32 0.0, %v5217
        %v5219 = vpop.f32.mrb[0].mxu0
        %v5220 = vpop.f32.mrb[0].mxu0
        %v5221 = vadd.f32 0.0, %v5220
        %v5222 = vpop.f32.mrb[0].mxu0
        %5223 = vdwg.mxu0
        %v5225 = vlaneseq
        %v5226 = vshrl.u32 %v5225, 7
        %v5227 = vsub.s32 0, %v5226
        %v5228 = vrot.slane %v5070, %v5227
        %v5230 = vadd.f32 %v5162, %v5228
        %v5231 = vadd.f32 %v5165, %v5228
        %v5232 = vadd.f32 %v5170, %v5228
        %v5233 = vadd.f32 %v5173, %v5228
        %v5234 = vadd.f32 %v5178, %v5228
        %v5235 = vadd.f32 %v5181, %v5228
        %v5236 = vadd.f32 %v5186, %v5228
        %v5237 = vadd.f32 %v5189, %v5228
        %v5238 = vadd.f32 %v5194, %v5228
        %v5239 = vadd.f32 %v5197, %v5228
        %v5240 = vadd.f32 %v5202, %v5228
        %v5241 = vadd.f32 %v5205, %v5228
        %v5242 = vadd.f32 %v5210, %v5228
        %v5243 = vadd.f32 %v5213, %v5228
        %v5244 = vadd.f32 %v5218, %v5228
        %v5245 = vadd.f32 %v5221, %v5228
        %s5246 = sadd.s32 120, %s611
        %s5247 = scalar_lea.vmem [#allocation2], %s5246
        %v5248 = vld [vmem:[%s5247 + $0x3] sm:$0xff]
        %v5249 = vld [vmem:[%s5247 + $0xb] sm:$0xff]
        %v5250 = vld [vmem:[%s5247 + $0x2b] sm:$0xff]
        %v5251 = vld [vmem:[%s5247 + $0x33] sm:$0xff]
        %v5252 = vld [vmem:[%s5247 + $0x53] sm:$0xff]
        %v5253 = vld [vmem:[%s5247 + $0x5b] sm:$0xff]
        %v5254 = vld [vmem:[%s5247 + $0x7b] sm:$0xff]
        %v5255 = vld [vmem:[%s5247 + $0x83] sm:$0xff]
        %v5256 = vld [vmem:[%s5247 + $0xa3] sm:$0xff]
        %v5257 = vld [vmem:[%s5247 + $0xab] sm:$0xff]
        %v5258 = vld [vmem:[%s5247 + $0xcb] sm:$0xff]
        %v5259 = vld [vmem:[%s5247 + $0xd3] sm:$0xff]
        %v5260 = vld [vmem:[%s5247 + $0xf3] sm:$0xff]
        %v5261 = vld [vmem:[%s5247 + $0xfb] sm:$0xff]
        %v5262 = vld [vmem:[%s5247 + $0x11b] sm:$0xff]
        %v5263 = vld [vmem:[%s5247 + $0x123] sm:$0xff]
        %v5264 = vld [vmem:[#allocation4] sm:$0xf]
        %v5265 = vld [vmem:[#allocation4 + $0x4] sm:$0xf]
        %v5266 = vld [vmem:[#allocation4 + $0x8] sm:$0xf]
        %v5267 = vld [vmem:[#allocation4 + $0xc] sm:$0xf]
        %v5268 = vld [vmem:[#allocation4 + $0x10] sm:$0xf]
        %v5269 = vld [vmem:[#allocation4 + $0x14] sm:$0xf]
        %v5270 = vld [vmem:[#allocation4 + $0x18] sm:$0xf]
        %v5271 = vld [vmem:[#allocation4 + $0x1c] sm:$0xf]
        %v5272 = vld [vmem:[#allocation4 + $0x20] sm:$0xf]
        %v5273 = vld [vmem:[#allocation4 + $0x24] sm:$0xf]
        %v5274 = vld [vmem:[#allocation4 + $0x28] sm:$0xf]
        %v5275 = vld [vmem:[#allocation4 + $0x2c] sm:$0xf]
        %v5276 = vld [vmem:[#allocation4 + $0x30] sm:$0xf]
        %v5277 = vld [vmem:[#allocation4 + $0x34] sm:$0xf]
        %v5278 = vld [vmem:[#allocation4 + $0x38] sm:$0xf]
        %v5279 = vld [vmem:[#allocation4 + $0x3c] sm:$0xf]
        %v5280 = vld [vmem:[%s2] sm:$0x1]
        %v5281 = vpack.c.bf16 %v5249, %v5248
        %v5282 = vpack.c.bf16 %v5251, %v5250
        %v5283 = vpack.c.bf16 %v5253, %v5252
        %v5284 = vpack.c.bf16 %v5255, %v5254
        %v5285 = vpack.c.bf16 %v5257, %v5256
        %v5286 = vpack.c.bf16 %v5259, %v5258
        %v5287 = vpack.c.bf16 %v5261, %v5260
        %v5288 = vpack.c.bf16 %v5263, %v5262
        %v5305 = vunpack.c.l.b16 %v5264
        %v5306 = vunpack.c.l.b16 %v5265
        %v5307 = vunpack.c.l.b16 %v5266
        %v5308 = vunpack.c.l.b16 %v5267
        %v5309 = vunpack.c.l.b16 %v5268
        %v5310 = vunpack.c.l.b16 %v5269
        %v5311 = vunpack.c.l.b16 %v5270
        %v5312 = vunpack.c.l.b16 %v5271
        %v5313 = vunpack.c.l.b16 %v5272
        %v5314 = vunpack.c.l.b16 %v5273
        %v5315 = vunpack.c.l.b16 %v5274
        %v5316 = vunpack.c.l.b16 %v5275
        %v5317 = vunpack.c.l.b16 %v5276
        %v5318 = vunpack.c.l.b16 %v5277
        %v5319 = vunpack.c.l.b16 %v5278
        %v5320 = vunpack.c.l.b16 %v5279
        %v5321 = vpack.c.b16 %v5306, %v5305
        %v5322 = vpack.c.b16 %v5308, %v5307
        %v5323 = vpack.c.b16 %v5310, %v5309
        %v5324 = vpack.c.b16 %v5312, %v5311
        %v5325 = vpack.c.b16 %v5314, %v5313
        %v5326 = vpack.c.b16 %v5316, %v5315
        %v5327 = vpack.c.b16 %v5318, %v5317
        %v5328 = vpack.c.b16 %v5320, %v5319
        %5337 = vmatprep.subr.bf16.mxu0 0
        %5338 = vmatpush1.bf16.msra.mxu0 %v5321
        %5339 = vmatprep.subr.bf16.mxu0 0
        %5340 = vmatpush1.bf16.msra.mxu0 %v5322
        %5341 = vmatprep.subr.bf16.mxu0 0
        %5342 = vmatpush1.bf16.msra.mxu0 %v5323
        %5343 = vmatprep.subr.bf16.mxu0 0
        %5344 = vmatpush1.bf16.msra.mxu0 %v5324
        %5345 = vmatprep.subr.bf16.mxu0 0
        %5346 = vmatpush1.bf16.msra.mxu0 %v5325
        %5347 = vmatprep.subr.bf16.mxu0 0
        %5348 = vmatpush1.bf16.msra.mxu0 %v5326
        %5349 = vmatprep.subr.bf16.mxu0 0
        %5350 = vmatpush1.bf16.msra.mxu0 %v5327
        %5351 = vmatprep.subr.bf16.mxu0 0
        %5352 = vmatpush1.bf16.msra.mxu0 %v5328
        %5353 = vmatprep.subr.bf16.mxu0 0
        %5354 = vmatpush1.bf16.msra.mxu0 0
        %5355 = vmatprep.subr.bf16.mxu0 0
        %5356 = vmatpush1.bf16.msra.mxu0 0
        %5357 = vmatprep.subr.bf16.mxu0 0
        %5358 = vmatpush1.bf16.msra.mxu0 0
        %5359 = vmatprep.subr.bf16.mxu0 0
        %5360 = vmatpush1.bf16.msra.mxu0 0
        %5361 = vmatprep.subr.bf16.mxu0 0
        %5362 = vmatpush1.bf16.msra.mxu0 0
        %5363 = vmatprep.subr.bf16.mxu0 0
        %5364 = vmatpush1.bf16.msra.mxu0 0
        %5365 = vmatprep.subr.bf16.mxu0 0
        %5366 = vmatpush1.bf16.msra.mxu0 0
        %5367 = vmatprep.subr.bf16.mxu0 0
        %5368 = vmatpush1.bf16.msra.mxu0 0
        %5369 = vmatprep.mubr.bf16.mxu0 0
        %5370 = vmatmul.mubr.bf16.gmra.mrb[0].mxu0 %v5281
        %v5371 = vpop.f32.mrb[0].mxu0
        %v5372 = vadd.f32 0.0, %v5371
        %v5373 = vpop.f32.mrb[0].mxu0
        %v5374 = vpop.f32.mrb[0].mxu0
        %v5375 = vadd.f32 0.0, %v5374
        %v5376 = vpop.f32.mrb[0].mxu0
        %5377 = vmatprep.mubr.bf16.mxu0 0
        %5378 = vmatmul.mubr.bf16.gmra.mrb[0].mxu0 %v5282
        %v5379 = vpop.f32.mrb[0].mxu0
        %v5380 = vadd.f32 0.0, %v5379
        %v5381 = vpop.f32.mrb[0].mxu0
        %v5382 = vpop.f32.mrb[0].mxu0
        %v5383 = vadd.f32 0.0, %v5382
        %v5384 = vpop.f32.mrb[0].mxu0
        %5385 = vmatprep.mubr.bf16.mxu0 0
        %5386 = vmatmul.mubr.bf16.gmra.mrb[0].mxu0 %v5283
        %v5387 = vpop.f32.mrb[0].mxu0
        %v5388 = vadd.f32 0.0, %v5387
        %v5389 = vpop.f32.mrb[0].mxu0
        %v5390 = vpop.f32.mrb[0].mxu0
        %v5391 = vadd.f32 0.0, %v5390
        %v5392 = vpop.f32.mrb[0].mxu0
        %5393 = vmatprep.mubr.bf16.mxu0 0
        %5394 = vmatmul.mubr.bf16.gmra.mrb[0].mxu0 %v5284
        %v5395 = vpop.f32.mrb[0].mxu0
        %v5396 = vadd.f32 0.0, %v5395
        %v5397 = vpop.f32.mrb[0].mxu0
        %v5398 = vpop.f32.mrb[0].mxu0
        %v5399 = vadd.f32 0.0, %v5398
        %v5400 = vpop.f32.mrb[0].mxu0
        %5401 = vmatprep.mubr.bf16.mxu0 0
        %5402 = vmatmul.mubr.bf16.gmra.mrb[0].mxu0 %v5285
        %v5403 = vpop.f32.mrb[0].mxu0
        %v5404 = vadd.f32 0.0, %v5403
        %v5405 = vpop.f32.mrb[0].mxu0
        %v5406 = vpop.f32.mrb[0].mxu0
        %v5407 = vadd.f32 0.0, %v5406
        %v5408 = vpop.f32.mrb[0].mxu0
        %5409 = vmatprep.mubr.bf16.mxu0 0
        %5410 = vmatmul.mubr.bf16.gmra.mrb[0].mxu0 %v5286
        %v5411 = vpop.f32.mrb[0].mxu0
        %v5412 = vadd.f32 0.0, %v5411
        %v5413 = vpop.f32.mrb[0].mxu0
        %v5414 = vpop.f32.mrb[0].mxu0
        %v5415 = vadd.f32 0.0, %v5414
        %v5416 = vpop.f32.mrb[0].mxu0
        %5417 = vmatprep.mubr.bf16.mxu0 0
        %5418 = vmatmul.mubr.bf16.gmra.mrb[0].mxu0 %v5287
        %v5419 = vpop.f32.mrb[0].mxu0
        %v5420 = vadd.f32 0.0, %v5419
        %v5421 = vpop.f32.mrb[0].mxu0
        %v5422 = vpop.f32.mrb[0].mxu0
        %v5423 = vadd.f32 0.0, %v5422
        %v5424 = vpop.f32.mrb[0].mxu0
        %5425 = vmatprep.mubr.bf16.mxu0 0
        %5426 = vmatmul.mubr.bf16.gmra.mrb[0].mxu0 %v5288
        %v5427 = vpop.f32.mrb[0].mxu0
        %v5428 = vadd.f32 0.0, %v5427
        %v5429 = vpop.f32.mrb[0].mxu0
        %v5430 = vpop.f32.mrb[0].mxu0
        %v5431 = vadd.f32 0.0, %v5430
        %v5432 = vpop.f32.mrb[0].mxu0
        %5433 = vdwg.mxu0
        %v5435 = vlaneseq
        %v5436 = vshrl.u32 %v5435, 7
        %v5437 = vsub.s32 0, %v5436
        %v5438 = vrot.slane %v5280, %v5437
        %v5440 = vadd.f32 %v5372, %v5438
        %v5441 = vadd.f32 %v5375, %v5438
        %v5442 = vadd.f32 %v5380, %v5438
        %v5443 = vadd.f32 %v5383, %v5438
        %v5444 = vadd.f32 %v5388, %v5438
        %v5445 = vadd.f32 %v5391, %v5438
        %v5446 = vadd.f32 %v5396, %v5438
        %v5447 = vadd.f32 %v5399, %v5438
        %v5448 = vadd.f32 %v5404, %v5438
        %v5449 = vadd.f32 %v5407, %v5438
        %v5450 = vadd.f32 %v5412, %v5438
        %v5451 = vadd.f32 %v5415, %v5438
        %v5452 = vadd.f32 %v5420, %v5438
        %v5453 = vadd.f32 %v5423, %v5438
        %v5454 = vadd.f32 %v5428, %v5438
        %v5455 = vadd.f32 %v5431, %v5438
        %v5456 = vadd.f32 %v5230, %v5440
        %v5457 = vadd.f32 %v5231, %v5441
        %v5458 = vadd.f32 %v5232, %v5442
        %v5459 = vadd.f32 %v5233, %v5443
        %v5460 = vadd.f32 %v5234, %v5444
        %v5461 = vadd.f32 %v5235, %v5445
        %v5462 = vadd.f32 %v5236, %v5446
        %v5463 = vadd.f32 %v5237, %v5447
        %v5464 = vadd.f32 %v5238, %v5448
        %v5465 = vadd.f32 %v5239, %v5449
        %v5466 = vadd.f32 %v5240, %v5450
        %v5467 = vadd.f32 %v5241, %v5451
        %v5468 = vadd.f32 %v5242, %v5452
        %v5469 = vadd.f32 %v5243, %v5453
        %v5470 = vadd.f32 %v5244, %v5454
        %v5471 = vadd.f32 %v5245, %v5455
        %5472 = vst [vmem:[%s546] sm:$0xff] %v5456
        %5473 = vst [vmem:[%s546 + $0x8] sm:$0xff] %v5457
        %5474 = vst [vmem:[%s546 + $0x10] sm:$0xff] %v5458
        %5475 = vst [vmem:[%s546 + $0x18] sm:$0xff] %v5459
        %5476 = vst [vmem:[%s546 + $0x20] sm:$0xff] %v5460
        %5477 = vst [vmem:[%s546 + $0x28] sm:$0xff] %v5461
        %5478 = vst [vmem:[%s546 + $0x30] sm:$0xff] %v5462
        %5479 = vst [vmem:[%s546 + $0x38] sm:$0xff] %v5463
        %5480 = vst [vmem:[%s546 + $0x40] sm:$0xff] %v5464
        %5481 = vst [vmem:[%s546 + $0x48] sm:$0xff] %v5465
        %5482 = vst [vmem:[%s546 + $0x50] sm:$0xff] %v5466
        %5483 = vst [vmem:[%s546 + $0x58] sm:$0xff] %v5467
        %5484 = vst [vmem:[%s546 + $0x60] sm:$0xff] %v5468
        %5485 = vst [vmem:[%s546 + $0x68] sm:$0xff] %v5469
        %5486 = vst [vmem:[%s546 + $0x70] sm:$0xff] %v5470
        %5487 = vst [vmem:[%s546 + $0x78] sm:$0xff] %v5471
        %s5488 = sand.u32 %s349, 1
        %s5489 = scalar_lea.sflag [#allocation6], %s5488
        %s5490 = sand.u32 %s349, 1
        %s5491 = smul.addr %s5490, 128
        %s5492 = scalar_lea.vmem [#allocation15], %s5491
        // Predicated region
        $region117: #{tpu_custom_call.1} parent=75 // pred_check
          %p5493 = pneg %p359
        $region118: #{tpu_custom_call.1} parent=75 // pred_check_branch
          %5495 = sbr.rel (%p5493) target = $region120
        $region119: #{tpu_custom_call.1} parent=75 // pred_region
          %s5496 = smul.u32 8, %s38
          %s5498 = ssub.s32 2048, 2048
          %5499 = vsyncadd %s5489, %s5498
          %s5500 = smul.addr %s5496, 2
          %s5501 = smul.addr %s37, 32
          %s5502 = sadd.s32 %s5500, %s5501
          %s5503 = smul.addr %s5502, 128
          %s5504 = scalar_lea.hbm %s15, %s5503
          %s5505 = sshll.u32 %s5492, 4
          %s5506 = int_to_ptr.vmem [resolvable:$true] %s5505
          %5511 = dma.vmem_to_hbm [thread:$0]  %s5506, 2048, %s5504, %s5489, 128, 128, 8
        $region120: #{tpu_custom_call.1} parent=75 // pred_fallthru
          _
      $region76: #{tpu_custom_call.1} parent=5 // pred_fallthru
        _
      %p5512 = scmp.le.s32.totalorder 2, %s28
      // Predicated region
      $region121: #{tpu_custom_call.1} parent=5 // pred_check
        %p5513 = pneg %p5512
      $region122: #{tpu_custom_call.1} parent=5 // pred_check_branch
        %5515 = sbr.rel (%p5513) target = $region124
      $region123: #{tpu_custom_call.1} parent=5 // pred_region
        %s5516 = ssub.s32 %s28, 2
        // Predicated region
        $region125: #{tpu_custom_call.1} parent=123 // pred_check
          %p5517 = pneg %p365
        $region126: #{tpu_custom_call.1} parent=123 // pred_check_branch
          %5519 = sbr.rel (%p5517) target = $region128
        $region127: #{tpu_custom_call.1} parent=123 // pred_region
          %s5520 = sand.u32 %s350, 1
          %s5521 = scalar_lea.sflag [#allocation6], %s5520
          %s5522 = sand.u32 %s350, 1
          %s5523 = smul.addr %s5522, 128
          %s5524 = scalar_lea.vmem [#allocation15], %s5523
          %5525 = dma.done %s5521, 2048
        $region128: #{tpu_custom_call.1} parent=123 // pred_fallthru
          _
      $region124: #{tpu_custom_call.1} parent=5 // pred_fallthru
        _
    $region6: #{tpu_custom_call.1} parent=1 // loop_footer
      %s32 = sadd.s32 1, %s28
    $region7: #{tpu_custom_call.1} parent=1 // loop_footer_branch
      %27 = sbr.rel target = $region3
    $region8: #{tpu_custom_call.1} parent=1 // loop_exit
      _
    %5526 = vsyncpa [#allocation5], 1
    %s5527 = scalar_lea.sflag [#allocation5], 1
    %5528 = vsyncpa %s5527, 1
    %5529 = vsyncpa [#allocation8], 1
    %5530 = vsyncpa [#allocation11], 1
    %5531 = vsyncpa [#allocation14], 1
    %5532 = vsyncpa [#allocation6], 1
    %s5533 = scalar_lea.sflag [#allocation6], 1
    %5534 = vsyncpa %s5533, 1
  %5535 = vsyncmov [#allocation3]
  %s5536 = vpop.sfrf %5535
  %p5537 = scmp.eq.s32.totalorder %s5536, 0
  %p5538 = pneg %p5537
  %5540 = shalt.err (%p5538)
  %s5541 = scalar_lea.sflag [#allocation3], 1
  %5542 = vsyncmov %s5541
  %s5543 = vpop.sfrf %5542
  %p5544 = scmp.eq.s32.totalorder %s5543, 0
  %p5545 = pneg %p5544
  %5547 = shalt.err (%p5545)

</llo_original>
